<compile_context>
chip_gen: v7x
topology: tpu7x:2x2x1
jax: 0.10.0
libtpu: 0.0.40
codegen_flags: <defaults>
</compile_context>

<pallas_src>
import jax
import jax.numpy as jnp
from jax.experimental import pallas as pl
from jax.experimental.pallas import tpu as pltpu

_VMEM_LIMIT_BYTES = 32 * 1024 * 1024


# ----------------------------------------------------------------------------
# Pallas kernels
# ----------------------------------------------------------------------------
def _conv1_pre_kernel(p_ref, wc1_ref, bc1_ref, wpre_ref, bpre_ref,
                      id_ref, pre_ref):
    """conv1 (3x3, BN+ReLU folded) fused with the 4 PLKC 'pre' 1x1 convs.

    p_ref   : (1, 9*Cin, T)  bf16   im2col patches of the concat input
    wc1_ref : (C, 9*Cin)     bf16   conv1 weight (BN folded)
    bc1_ref : (C, 1)         f32
    wpre_ref: (4*mid, C)     bf16   4 branches' 1x1 weights stacked on Cout
    bpre_ref: (4*mid, 1)     f32
    id_ref  : (1, C, T)      f32    identity = relu(bn(conv1(x)))
    pre_ref : (1, 4*mid, T)  bf16   fused pre-conv activations
    """
    x = jnp.dot(wc1_ref[...], p_ref[0], preferred_element_type=jnp.float32)
    x = jnp.maximum(x + bc1_ref[...], 0.0)                     # (C, T) f32
    id_ref[0] = x.astype(id_ref.dtype)
    pre = jnp.dot(wpre_ref[...], x.astype(jnp.bfloat16),
                  preferred_element_type=jnp.float32) + bpre_ref[...]
    pre_ref[0] = pre.astype(pre_ref.dtype)


def _plkc_tail_kernel(p7_ref, p9_ref, p11_ref, pr_ref,
                      w7_ref, w9_ref, w11_ref, wr_ref, bmid_ref,
                      wpost_ref, bpost_ref, id_ref, o_ref):
    """Four KxK mid convs (+BN+ReLU), four post 1x1 convs (+BN), combine.

    p*_ref   : (1, K*K*mid, T) bf16   per-branch im2col patches of the pre act
    w*_ref   : (mid, K*K*mid)  bf16
    bmid_ref : (4, mid, 1)     f32
    wpost_ref: (4, C, mid)     bf16
    bpost_ref: (4, C, 1)       f32
    id_ref   : (1, C, T)       f32
    o_ref    : (1, C, T)       f32
    out = relu(b7+r)+relu(b9+r)+relu(b11+r)+relu(r)+identity
    """
    def mid_conv(p_ref, w_ref, idx):
        h = jnp.dot(w_ref[...], p_ref[0], preferred_element_type=jnp.float32)
        return jnp.maximum(h + bmid_ref[idx], 0.0)             # (mid, T) f32

    m7 = mid_conv(p7_ref, w7_ref, 0)
    m9 = mid_conv(p9_ref, w9_ref, 1)
    m11 = mid_conv(p11_ref, w11_ref, 2)
    mr = mid_conv(pr_ref, wr_ref, 3)

    def post_conv(m, idx):
        return (jnp.dot(wpost_ref[idx], m.astype(jnp.bfloat16),
                        preferred_element_type=jnp.float32)
                + bpost_ref[idx])                              # (C, T) f32

    post_r = post_conv(mr, 3)
    out = (jnp.maximum(post_conv(m7, 0) + post_r, 0.0)
           + jnp.maximum(post_conv(m9, 1) + post_r, 0.0)
           + jnp.maximum(post_conv(m11, 2) + post_r, 0.0)
           + jnp.maximum(post_r, 0.0)
           + id_ref[0])
    o_ref[0] = out.astype(o_ref.dtype)


# ----------------------------------------------------------------------------
# pallas_call wrappers
# ----------------------------------------------------------------------------
def _pick_hw_tile(hw, n_batch, target_steps=8, max_tile=1024):
    """Lane-dense HW tile (multiple of 128) that yields several grid steps."""
    if hw % 128 != 0:
        return hw
    tile = hw
    while (tile > 128 and (tile // 2) % 128 == 0
           and ((hw // tile) * n_batch < target_steps or tile > max_tile)):
        tile //= 2
    return tile


def _compiler_params():
    return pltpu.CompilerParams(
        dimension_semantics=("parallel", "parallel"),
        vmem_limit_bytes=_VMEM_LIMIT_BYTES)


def conv1_and_pre(patches, wc1, bc1, wpre, bpre, *, hw_tile):
    n, kt, hw = patches.shape
    c = wc1.shape[0]
    pre_c = wpre.shape[0]
    grid = (n, hw // hw_tile)

    def tiled(ch):
        return pl.BlockSpec((1, ch, hw_tile), lambda i, t: (i, 0, t))

    def full(shape):
        nd = len(shape)
        return pl.BlockSpec(shape, lambda i, t: (0,) * nd)

    return pl.pallas_call(
        _conv1_pre_kernel,
        out_shape=(jax.ShapeDtypeStruct((n, c, hw), jnp.float32),
                   jax.ShapeDtypeStruct((n, pre_c, hw), jnp.bfloat16)),
        grid=grid,
        in_specs=[tiled(kt), full(wc1.shape), full(bc1.shape),
                  full(wpre.shape), full(bpre.shape)],
        out_specs=(tiled(c), tiled(pre_c)),
        compiler_params=_compiler_params(),
    )(patches, wc1, bc1, wpre, bpre)


def plkc_tail(p7, p9, p11, pr, mid_w, mid_b, post_w, post_b, identity, *,
              hw_tile):
    n, c, hw = identity.shape
    grid = (n, hw // hw_tile)

    def tiled(ch):
        return pl.BlockSpec((1, ch, hw_tile), lambda i, t: (i, 0, t))

    def full(shape):
        nd = len(shape)
        return pl.BlockSpec(shape, lambda i, t: (0,) * nd)

    return pl.pallas_call(
        _plkc_tail_kernel,
        out_shape=jax.ShapeDtypeStruct((n, c, hw), jnp.float32),
        grid=grid,
        in_specs=[tiled(p7.shape[1]), tiled(p9.shape[1]),
                  tiled(p11.shape[1]), tiled(pr.shape[1]),
                  full(mid_w[0].shape), full(mid_w[1].shape),
                  full(mid_w[2].shape), full(mid_w[3].shape),
                  full(mid_b.shape), full(post_w.shape), full(post_b.shape),
                  tiled(c)],
        out_specs=tiled(c),
        compiler_params=_compiler_params(),
    )(p7, p9, p11, pr, mid_w[0], mid_w[1], mid_w[2], mid_w[3],
      mid_b, post_w, post_b, identity)


# ----------------------------------------------------------------------------
# Plain-JAX glue (tiny data movement between the two kernels)
# ----------------------------------------------------------------------------
def im2col_nchw(x, ksize):
    """(N, C, H, W) -> single (N, K*K*C, H*W) patch tensor ('same' padding).
    Row order is ((ky, kx), c) row-major, matching make_conv_bn."""
    n, c, h, w = x.shape
    if ksize == 1:
        return x.reshape(n, c, h * w)
    pad = (ksize - 1) // 2
    xp = jnp.pad(x, ((0, 0), (0, 0), (pad, pad), (pad, pad)))
    slabs = [xp[:, :, ky:ky + h, kx:kx + w].reshape(n, c, h * w)
             for ky in range(ksize) for kx in range(ksize)]
    return jnp.concatenate(slabs, axis=1)


def upsample_bilinear_x2_align_corners(x):
    """nn.UpsamplingBilinear2d(scale_factor=2) semantics, NCHW layout."""
    n, c, h, w = x.shape
    ho, wo = 2 * h, 2 * w
    ys = jnp.arange(ho, dtype=jnp.float32) * (h - 1) / (ho - 1)
    xs = jnp.arange(wo, dtype=jnp.float32) * (w - 1) / (wo - 1)
    y0 = jnp.floor(ys).astype(jnp.int32)
    y1 = jnp.minimum(y0 + 1, h - 1)
    x0 = jnp.floor(xs).astype(jnp.int32)
    x1 = jnp.minimum(x0 + 1, w - 1)
    wy = (ys - y0.astype(jnp.float32)).reshape(1, 1, ho, 1)
    wx = (xs - x0.astype(jnp.float32)).reshape(1, 1, 1, wo)
    rows = x[:, :, y0, :] * (1.0 - wy) + x[:, :, y1, :] * wy
    return rows[:, :, :, x0] * (1.0 - wx) + rows[:, :, :, x1] * wx


# ----------------------------------------------------------------------------
# Deterministic parameters (Conv + BatchNorm folded, eval mode)
# ----------------------------------------------------------------------------
def make_conv_bn(key, cin, cout, ksize):
    """Random Conv+BN folded into W:(cout, K*K*cin) bf16 and b:(cout, 1) f32.
    Weight columns are ordered ((ky, kx), cin) row-major = im2col_nchw order."""
    k1, k2, k3, k4, k5, k6 = jax.random.split(key, 6)
    fan_in = cin * ksize * ksize
    w = jax.random.normal(k1, (cout, ksize * ksize * cin), jnp.float32)
    w = w / jnp.sqrt(jnp.float32(fan_in))
    conv_b = 0.1 * jax.random.normal(k2, (cout,), jnp.float32)
    gamma = 1.0 + 0.1 * jax.random.normal(k3, (cout,), jnp.float32)
    beta = 0.1 * jax.random.normal(k4, (cout,), jnp.float32)
    mean = 0.1 * jax.random.normal(k5, (cout,), jnp.float32)
    var = 1.0 + 0.1 * jax.random.uniform(k6, (cout,), jnp.float32)
    scale = gamma / jnp.sqrt(var + 1e-5)
    w_folded = (w * scale[:, None]).astype(jnp.bfloat16)
    b_folded = ((conv_b - mean) * scale + beta).reshape(cout, 1)
    return w_folded, b_folded


def make_plkc_params(key, c, expands=2):
    # NOTE: the PyTorch module also defines self.conv13 but never uses it in
    # forward(), so it is intentionally omitted here.
    mid = c // expands
    pre_w, pre_b, mid_w, mid_b, post_w, post_b = [], [], [], [], [], []
    for ksize in (7, 9, 11, 3):          # conv7, conv9, conv11, convres3
        key, ka, kb, kc = jax.random.split(key, 4)
        w, b = make_conv_bn(ka, c, mid, 1)
        pre_w.append(w); pre_b.append(b)
        w, b = make_conv_bn(kb, mid, mid, ksize)
        mid_w.append(w); mid_b.append(b)
        w, b = make_conv_bn(kc, mid, c, 1)
        post_w.append(w); post_b.append(b)
    return dict(
        pre_w=jnp.concatenate(pre_w, axis=0),   # (4*mid, c)         bf16
        pre_b=jnp.concatenate(pre_b, axis=0),   # (4*mid, 1)         f32
        mid_w=tuple(mid_w),                     # 4 x (mid, K*K*mid) bf16
        mid_b=jnp.stack(mid_b, axis=0),         # (4, mid, 1)        f32
        post_w=jnp.stack(post_w, axis=0),       # (4, c, mid)        bf16
        post_b=jnp.stack(post_b, axis=0),       # (4, c, 1)          f32
    )


# ----------------------------------------------------------------------------
# unetUp2 forward (NCHW in, NCHW out — matching PyTorch)
# ----------------------------------------------------------------------------
def unet_up2_forward(inputs1, inputs2, params):
    n, _, h, w = inputs1.shape
    hw = h * w
    hw_tile = _pick_hw_tile(hw, n)

    up = upsample_bilinear_x2_align_corners(inputs2)
    x = jnp.concatenate([inputs1, up], axis=1)              # (N, C1+C2, H, W)
    # TODO(synk): the align_corners bilinear 2x upsample + channel concat stay
    # as plain-JAX glue; they could be folded into the conv1 patch DMA instead.

    wc1, bc1 = params["conv1"]
    plkc = params["plkc"]
    c_out = wc1.shape[0]
    mid = plkc["pre_w"].shape[0] // 4
    ks = tuple(int(round((wm.shape[1] / mid) ** 0.5)) for wm in plkc["mid_w"])

    # conv1 3x3 patches: taps folded into the contraction dim, bf16 for MXU.
    p1 = im2col_nchw(x.astype(jnp.bfloat16), 3)             # (N, 9*Cin, HW)
    identity, pre_all = conv1_and_pre(p1, wc1, bc1, plkc["pre_w"],
                                      plkc["pre_b"], hw_tile=hw_tile)

    # per-branch KxK patches of the fused pre activations (bf16, single tensor)
    pre_img = pre_all.reshape(n, 4 * mid, h, w)
    patches = [im2col_nchw(pre_img[:, i * mid:(i + 1) * mid], k)
               for i, k in enumerate(ks)]

    out = plkc_tail(patches[0], patches[1], patches[2], patches[3],
                    plkc["mid_w"], plkc["mid_b"],
                    plkc["post_w"], plkc["post_b"],
                    identity, hw_tile=hw_tile)
    return out.reshape(n, c_out, h, w)


# ----------------------------------------------------------------------------
if __name__ == "__main__":
    key = jax.random.PRNGKey(0)
    k_in1, k_in2, k_conv1, k_plkc = jax.random.split(key, 4)

    # Shapes consistent with the module (PyTorch NCHW convention):
    #   inputs1: (2, 4, 16, 16), inputs2: (2, 4, 8, 8)
    #   up(inputs2): (2, 4, 16, 16); concat -> in_size = 8, out_size = 8.
    N, C1, H, W = 2, 4, 16, 16
    C2 = 4
    in_size = C1 + C2
    out_size = 8

    inputs1 = jax.random.normal(k_in1, (N, C1, H, W), jnp.float32)
    inputs2 = jax.random.normal(k_in2, (N, C2, H // 2, W // 2), jnp.float32)

    params = {
        "conv1": make_conv_bn(k_conv1, in_size, out_size, 3),
        "plkc": make_plkc_params(k_plkc, out_size, expands=2),
    }

    fwd = jax.jit(unet_up2_forward)
    out = jax.block_until_ready(fwd(inputs1, inputs2, params))

    assert out.shape == (N, out_size, H, W)
    assert bool(jnp.all(jnp.isfinite(out)))
    print("KERNEL_OK")
</pallas_src>

<mosaic_0001>
module attributes {stable_mosaic.version = 11 : i64} {
  func.func @_conv1_pre_kernel(%arg0: i32, %arg1: i32, %arg2: memref<1x72x128xbf16, #tpu.memory_space<vmem>>, %arg3: memref<8x72xbf16, #tpu.memory_space<vmem>>, %arg4: memref<8x1xf32, #tpu.memory_space<vmem>>, %arg5: memref<16x8xbf16, #tpu.memory_space<vmem>>, %arg6: memref<16x1xf32, #tpu.memory_space<vmem>>, %arg7: memref<1x8x128xf32, #tpu.memory_space<vmem>>, %arg8: memref<1x16x128xbf16, #tpu.memory_space<vmem>>) attributes {dimension_semantics = [#tpu.dimension_semantics<parallel>, #tpu.dimension_semantics<parallel>], iteration_bounds = array<i64: 2, 2>, scalar_prefetch = 0 : i64, scratch_operands = 0 : i64, tpu.core_type = #tpu.core_type<tc>, window_params = [{transform_indices = @transform_0, window_bounds = array<i64: 1, 72, 128>}, {pipeline_mode = #tpu.pipeline_mode<synchronous>, transform_indices = @transform_1, window_bounds = array<i64: 8, 72>}, {pipeline_mode = #tpu.pipeline_mode<synchronous>, transform_indices = @transform_2, window_bounds = array<i64: 8, 1>}, {pipeline_mode = #tpu.pipeline_mode<synchronous>, transform_indices = @transform_3, window_bounds = array<i64: 16, 8>}, {pipeline_mode = #tpu.pipeline_mode<synchronous>, transform_indices = @transform_4, window_bounds = array<i64: 16, 1>}, {transform_indices = @transform_5, window_bounds = array<i64: 1, 8, 128>}, {transform_indices = @transform_6, window_bounds = array<i64: 1, 16, 128>}]} {
    %c0 = arith.constant 0 : index
    %c0_0 = arith.constant 0 : index
    %0 = vector.load %arg3[%c0, %c0_0] : memref<8x72xbf16, #tpu.memory_space<vmem>>, vector<8x72xbf16>
    %c0_1 = arith.constant 0 : index
    %c0_2 = arith.constant 0 : index
    %c0_3 = arith.constant 0 : index
    %1 = vector.load %arg2[%c0_1, %c0_2, %c0_3] : memref<1x72x128xbf16, #tpu.memory_space<vmem>>, vector<1x72x128xbf16>
    %2 = vector.shape_cast %1 : vector<1x72x128xbf16> to vector<72x128xbf16>
    %cst = arith.constant dense<0.000000e+00> : vector<8x128xf32>
    %3 = tpu.matmul %0, %2, %cst {dimension_numbers = #tpu.dot_dimension_numbers<[1], [0], [0], [1], [0, 0, 1, 1], [], []>} : vector<8x72xbf16>, vector<72x128xbf16>, vector<8x128xf32> -> vector<8x128xf32>
    %c0_4 = arith.constant 0 : index
    %c0_5 = arith.constant 0 : index
    %4 = vector.load %arg4[%c0_4, %c0_5] : memref<8x1xf32, #tpu.memory_space<vmem>>, vector<8x1xf32>
    %5 = vector.broadcast %4 : vector<8x1xf32> to vector<8x128xf32>
    %6 = arith.addf %3, %5 : vector<8x128xf32>
    %cst_6 = arith.constant 0.000000e+00 : f32
    %7 = vector.broadcast %cst_6 : f32 to vector<8x128xf32>
    %8 = arith.maximumf %6, %7 : vector<8x128xf32>
    %c0_7 = arith.constant 0 : index
    %c0_8 = arith.constant 0 : index
    %c0_9 = arith.constant 0 : index
    %9 = vector.load %arg7[%c0_7, %c0_8, %c0_9] : memref<1x8x128xf32, #tpu.memory_space<vmem>>, vector<1x8x128xf32>
    %10 = vector.shape_cast %9 : vector<1x8x128xf32> to vector<8x128xf32>
    %11 = vector.shape_cast %8 : vector<8x128xf32> to vector<1x8x128xf32>
    tpu.vector_store %arg7[%c0_7, %c0_8, %c0_9], %11 {strides = array<i32>} : memref<1x8x128xf32, #tpu.memory_space<vmem>>, vector<1x8x128xf32>,
    %c0_10 = arith.constant 0 : index
    %c0_11 = arith.constant 0 : index
    %12 = vector.load %arg5[%c0_10, %c0_11] : memref<16x8xbf16, #tpu.memory_space<vmem>>, vector<16x8xbf16>
    %13 = arith.truncf %8 : vector<8x128xf32> to vector<8x128xbf16>
    %cst_12 = arith.constant dense<0.000000e+00> : vector<16x128xf32>
    %14 = tpu.matmul %12, %13, %cst_12 {dimension_numbers = #tpu.dot_dimension_numbers<[1], [0], [0], [1], [0, 0, 1, 1], [], []>} : vector<16x8xbf16>, vector<8x128xbf16>, vector<16x128xf32> -> vector<16x128xf32>
    %c0_13 = arith.constant 0 : index
    %c0_14 = arith.constant 0 : index
    %15 = vector.load %arg6[%c0_13, %c0_14] : memref<16x1xf32, #tpu.memory_space<vmem>>, vector<16x1xf32>
    %16 = vector.broadcast %15 : vector<16x1xf32> to vector<16x128xf32>
    %17 = arith.addf %14, %16 : vector<16x128xf32>
    %18 = arith.truncf %17 : vector<16x128xf32> to vector<16x128xbf16>
    %c0_15 = arith.constant 0 : index
    %c0_16 = arith.constant 0 : index
    %c0_17 = arith.constant 0 : index
    %19 = vector.load %arg8[%c0_15, %c0_16, %c0_17] : memref<1x16x128xbf16, #tpu.memory_space<vmem>>, vector<1x16x128xbf16>
    %20 = vector.shape_cast %19 : vector<1x16x128xbf16> to vector<16x128xbf16>
    %21 = vector.shape_cast %18 : vector<16x128xbf16> to vector<1x16x128xbf16>
    tpu.vector_store %arg8[%c0_15, %c0_16, %c0_17], %21 {strides = array<i32>} : memref<1x16x128xbf16, #tpu.memory_space<vmem>>, vector<1x16x128xbf16>,
    return
  }
  func.func @transform_0(%arg0: i32, %arg1: i32) -> (i32, i32, i32) {
    %c0_i32 = arith.constant 0 : i32
    %c0_i32_0 = arith.constant 0 : i32
    return %arg0, %c0_i32, %arg1 : i32, i32, i32
  }
  func.func @transform_1(%arg0: i32, %arg1: i32) -> (i32, i32) {
    %c0_i32 = arith.constant 0 : i32
    %c0_i32_0 = arith.constant 0 : i32
    %c0_i32_1 = arith.constant 0 : i32
    return %c0_i32, %c0_i32_0 : i32, i32
  }
  func.func @transform_2(%arg0: i32, %arg1: i32) -> (i32, i32) {
    %c0_i32 = arith.constant 0 : i32
    %c0_i32_0 = arith.constant 0 : i32
    %c0_i32_1 = arith.constant 0 : i32
    return %c0_i32, %c0_i32_0 : i32, i32
  }
  func.func @transform_3(%arg0: i32, %arg1: i32) -> (i32, i32) {
    %c0_i32 = arith.constant 0 : i32
    %c0_i32_0 = arith.constant 0 : i32
    %c0_i32_1 = arith.constant 0 : i32
    return %c0_i32, %c0_i32_0 : i32, i32
  }
  func.func @transform_4(%arg0: i32, %arg1: i32) -> (i32, i32) {
    %c0_i32 = arith.constant 0 : i32
    %c0_i32_0 = arith.constant 0 : i32
    %c0_i32_1 = arith.constant 0 : i32
    return %c0_i32, %c0_i32_0 : i32, i32
  }
  func.func @transform_5(%arg0: i32, %arg1: i32) -> (i32, i32, i32) {
    %c0_i32 = arith.constant 0 : i32
    %c0_i32_0 = arith.constant 0 : i32
    return %arg0, %c0_i32, %arg1 : i32, i32, i32
  }
  func.func @transform_6(%arg0: i32, %arg1: i32) -> (i32, i32, i32) {
    %c0_i32 = arith.constant 0 : i32
    %c0_i32_0 = arith.constant 0 : i32
    return %arg0, %c0_i32, %arg1 : i32, i32, i32
  }
}

module attributes {stable_mosaic.version = 11 : i64} {
  func.func @_plkc_tail_kernel(%arg0: i32, %arg1: i32, %arg2: memref<1x196x128xbf16, #tpu.memory_space<vmem>>, %arg3: memref<1x324x128xbf16, #tpu.memory_space<vmem>>, %arg4: memref<1x484x128xbf16, #tpu.memory_space<vmem>>, %arg5: memref<1x36x128xbf16, #tpu.memory_space<vmem>>, %arg6: memref<4x196xbf16, #tpu.memory_space<vmem>>, %arg7: memref<4x324xbf16, #tpu.memory_space<vmem>>, %arg8: memref<4x484xbf16, #tpu.memory_space<vmem>>, %arg9: memref<4x36xbf16, #tpu.memory_space<vmem>>, %arg10: memref<4x4x1xf32, #tpu.memory_space<vmem>>, %arg11: memref<4x8x4xbf16, #tpu.memory_space<vmem>>, %arg12: memref<4x8x1xf32, #tpu.memory_space<vmem>>, %arg13: memref<1x8x128xf32, #tpu.memory_space<vmem>>, %arg14: memref<1x8x128xf32, #tpu.memory_space<vmem>>) attributes {dimension_semantics = [#tpu.dimension_semantics<parallel>, #tpu.dimension_semantics<parallel>], iteration_bounds = array<i64: 2, 2>, scalar_prefetch = 0 : i64, scratch_operands = 0 : i64, tpu.core_type = #tpu.core_type<tc>, window_params = [{transform_indices = @transform_0, window_bounds = array<i64: 1, 196, 128>}, {transform_indices = @transform_1, window_bounds = array<i64: 1, 324, 128>}, {transform_indices = @transform_2, window_bounds = array<i64: 1, 484, 128>}, {transform_indices = @transform_3, window_bounds = array<i64: 1, 36, 128>}, {pipeline_mode = #tpu.pipeline_mode<synchronous>, transform_indices = @transform_4, window_bounds = array<i64: 4, 196>}, {pipeline_mode = #tpu.pipeline_mode<synchronous>, transform_indices = @transform_5, window_bounds = array<i64: 4, 324>}, {pipeline_mode = #tpu.pipeline_mode<synchronous>, transform_indices = @transform_6, window_bounds = array<i64: 4, 484>}, {pipeline_mode = #tpu.pipeline_mode<synchronous>, transform_indices = @transform_7, window_bounds = array<i64: 4, 36>}, {pipeline_mode = #tpu.pipeline_mode<synchronous>, transform_indices = @transform_8, window_bounds = array<i64: 4, 4, 1>}, {pipeline_mode = #tpu.pipeline_mode<synchronous>, transform_indices = @transform_9, window_bounds = array<i64: 4, 8, 4>}, {pipeline_mode = #tpu.pipeline_mode<synchronous>, transform_indices = @transform_10, window_bounds = array<i64: 4, 8, 1>}, {transform_indices = @transform_11, window_bounds = array<i64: 1, 8, 128>}, {transform_indices = @transform_12, window_bounds = array<i64: 1, 8, 128>}]} {
    %c0 = arith.constant 0 : index
    %c0_0 = arith.constant 0 : index
    %0 = vector.load %arg6[%c0, %c0_0] : memref<4x196xbf16, #tpu.memory_space<vmem>>, vector<4x196xbf16>
    %c0_1 = arith.constant 0 : index
    %c0_2 = arith.constant 0 : index
    %c0_3 = arith.constant 0 : index
    %1 = vector.load %arg2[%c0_1, %c0_2, %c0_3] : memref<1x196x128xbf16, #tpu.memory_space<vmem>>, vector<1x196x128xbf16>
    %2 = vector.shape_cast %1 : vector<1x196x128xbf16> to vector<196x128xbf16>
    %cst = arith.constant dense<0.000000e+00> : vector<4x128xf32>
    %3 = tpu.matmul %0, %2, %cst {dimension_numbers = #tpu.dot_dimension_numbers<[1], [0], [0], [1], [0, 0, 1, 1], [], []>} : vector<4x196xbf16>, vector<196x128xbf16>, vector<4x128xf32> -> vector<4x128xf32>
    %c0_4 = arith.constant 0 : index
    %c0_5 = arith.constant 0 : index
    %c0_6 = arith.constant 0 : index
    %4 = vector.load %arg10[%c0_4, %c0_5, %c0_6] : memref<4x4x1xf32, #tpu.memory_space<vmem>>, vector<1x4x1xf32>
    %5 = vector.shape_cast %4 : vector<1x4x1xf32> to vector<4x1xf32>
    %6 = vector.broadcast %5 : vector<4x1xf32> to vector<4x128xf32>
    %7 = arith.addf %3, %6 : vector<4x128xf32>
    %cst_7 = arith.constant 0.000000e+00 : f32
    %8 = vector.broadcast %cst_7 : f32 to vector<4x128xf32>
    %9 = arith.maximumf %7, %8 : vector<4x128xf32>
    %c0_8 = arith.constant 0 : index
    %c0_9 = arith.constant 0 : index
    %10 = vector.load %arg7[%c0_8, %c0_9] : memref<4x324xbf16, #tpu.memory_space<vmem>>, vector<4x324xbf16>
    %c0_10 = arith.constant 0 : index
    %c0_11 = arith.constant 0 : index
    %c0_12 = arith.constant 0 : index
    %11 = vector.load %arg3[%c0_10, %c0_11, %c0_12] : memref<1x324x128xbf16, #tpu.memory_space<vmem>>, vector<1x324x128xbf16>
    %12 = vector.shape_cast %11 : vector<1x324x128xbf16> to vector<324x128xbf16>
    %cst_13 = arith.constant dense<0.000000e+00> : vector<4x128xf32>
    %13 = tpu.matmul %10, %12, %cst_13 {dimension_numbers = #tpu.dot_dimension_numbers<[1], [0], [0], [1], [0, 0, 1, 1], [], []>} : vector<4x324xbf16>, vector<324x128xbf16>, vector<4x128xf32> -> vector<4x128xf32>
    %c1 = arith.constant 1 : index
    %c0_14 = arith.constant 0 : index
    %c0_15 = arith.constant 0 : index
    %14 = vector.load %arg10[%c1, %c0_14, %c0_15] : memref<4x4x1xf32, #tpu.memory_space<vmem>>, vector<1x4x1xf32>
    %15 = vector.shape_cast %14 : vector<1x4x1xf32> to vector<4x1xf32>
    %16 = vector.broadcast %15 : vector<4x1xf32> to vector<4x128xf32>
    %17 = arith.addf %13, %16 : vector<4x128xf32>
    %cst_16 = arith.constant 0.000000e+00 : f32
    %18 = vector.broadcast %cst_16 : f32 to vector<4x128xf32>
    %19 = arith.maximumf %17, %18 : vector<4x128xf32>
    %c0_17 = arith.constant 0 : index
    %c0_18 = arith.constant 0 : index
    %20 = vector.load %arg8[%c0_17, %c0_18] : memref<4x484xbf16, #tpu.memory_space<vmem>>, vector<4x484xbf16>
    %c0_19 = arith.constant 0 : index
    %c0_20 = arith.constant 0 : index
    %c0_21 = arith.constant 0 : index
    %21 = vector.load %arg4[%c0_19, %c0_20, %c0_21] : memref<1x484x128xbf16, #tpu.memory_space<vmem>>, vector<1x484x128xbf16>
    %22 = vector.shape_cast %21 : vector<1x484x128xbf16> to vector<484x128xbf16>
    %cst_22 = arith.constant dense<0.000000e+00> : vector<4x128xf32>
    %23 = tpu.matmul %20, %22, %cst_22 {dimension_numbers = #tpu.dot_dimension_numbers<[1], [0], [0], [1], [0, 0, 1, 1], [], []>} : vector<4x484xbf16>, vector<484x128xbf16>, vector<4x128xf32> -> vector<4x128xf32>
    %c2 = arith.constant 2 : index
    %c0_23 = arith.constant 0 : index
    %c0_24 = arith.constant 0 : index
    %24 = vector.load %arg10[%c2, %c0_23, %c0_24] : memref<4x4x1xf32, #tpu.memory_space<vmem>>, vector<1x4x1xf32>
    %25 = vector.shape_cast %24 : vector<1x4x1xf32> to vector<4x1xf32>
    %26 = vector.broadcast %25 : vector<4x1xf32> to vector<4x128xf32>
    %27 = arith.addf %23, %26 : vector<4x128xf32>
    %cst_25 = arith.constant 0.000000e+00 : f32
    %28 = vector.broadcast %cst_25 : f32 to vector<4x128xf32>
    %29 = arith.maximumf %27, %28 : vector<4x128xf32>
    %c0_26 = arith.constant 0 : index
    %c0_27 = arith.constant 0 : index
    %30 = vector.load %arg9[%c0_26, %c0_27] : memref<4x36xbf16, #tpu.memory_space<vmem>>, vector<4x36xbf16>
    %c0_28 = arith.constant 0 : index
    %c0_29 = arith.constant 0 : index
    %c0_30 = arith.constant 0 : index
    %31 = vector.load %arg5[%c0_28, %c0_29, %c0_30] : memref<1x36x128xbf16, #tpu.memory_space<vmem>>, vector<1x36x128xbf16>
    %32 = vector.shape_cast %31 : vector<1x36x128xbf16> to vector<36x128xbf16>
    %cst_31 = arith.constant dense<0.000000e+00> : vector<4x128xf32>
    %33 = tpu.matmul %30, %32, %cst_31 {dimension_numbers = #tpu.dot_dimension_numbers<[1], [0], [0], [1], [0, 0, 1, 1], [], []>} : vector<4x36xbf16>, vector<36x128xbf16>, vector<4x128xf32> -> vector<4x128xf32>
    %c3 = arith.constant 3 : index
    %c0_32 = arith.constant 0 : index
    %c0_33 = arith.constant 0 : index
    %34 = vector.load %arg10[%c3, %c0_32, %c0_33] : memref<4x4x1xf32, #tpu.memory_space<vmem>>, vector<1x4x1xf32>
    %35 = vector.shape_cast %34 : vector<1x4x1xf32> to vector<4x1xf32>
    %36 = vector.broadcast %35 : vector<4x1xf32> to vector<4x128xf32>
    %37 = arith.addf %33, %36 : vector<4x128xf32>
    %cst_34 = arith.constant 0.000000e+00 : f32
    %38 = vector.broadcast %cst_34 : f32 to vector<4x128xf32>
    %39 = arith.maximumf %37, %38 : vector<4x128xf32>
    %c3_35 = arith.constant 3 : index
    %c0_36 = arith.constant 0 : index
    %c0_37 = arith.constant 0 : index
    %40 = vector.load %arg11[%c3_35, %c0_36, %c0_37] : memref<4x8x4xbf16, #tpu.memory_space<vmem>>, vector<1x8x4xbf16>
    %41 = vector.shape_cast %40 : vector<1x8x4xbf16> to vector<8x4xbf16>
    %42 = arith.truncf %39 : vector<4x128xf32> to vector<4x128xbf16>
    %cst_38 = arith.constant dense<0.000000e+00> : vector<8x128xf32>
    %43 = tpu.matmul %41, %42, %cst_38 {dimension_numbers = #tpu.dot_dimension_numbers<[1], [0], [0], [1], [0, 0, 1, 1], [], []>} : vector<8x4xbf16>, vector<4x128xbf16>, vector<8x128xf32> -> vector<8x128xf32>
    %c3_39 = arith.constant 3 : index
    %c0_40 = arith.constant 0 : index
    %c0_41 = arith.constant 0 : index
    %44 = vector.load %arg12[%c3_39, %c0_40, %c0_41] : memref<4x8x1xf32, #tpu.memory_space<vmem>>, vector<1x8x1xf32>
    %45 = vector.shape_cast %44 : vector<1x8x1xf32> to vector<8x1xf32>
    %46 = vector.broadcast %45 : vector<8x1xf32> to vector<8x128xf32>
    %47 = arith.addf %43, %46 : vector<8x128xf32>
    %c0_42 = arith.constant 0 : index
    %c0_43 = arith.constant 0 : index
    %c0_44 = arith.constant 0 : index
    %48 = vector.load %arg11[%c0_42, %c0_43, %c0_44] : memref<4x8x4xbf16, #tpu.memory_space<vmem>>, vector<1x8x4xbf16>
    %49 = vector.shape_cast %48 : vector<1x8x4xbf16> to vector<8x4xbf16>
    %50 = arith.truncf %9 : vector<4x128xf32> to vector<4x128xbf16>
    %cst_45 = arith.constant dense<0.000000e+00> : vector<8x128xf32>
    %51 = tpu.matmul %49, %50, %cst_45 {dimension_numbers = #tpu.dot_dimension_numbers<[1], [0], [0], [1], [0, 0, 1, 1], [], []>} : vector<8x4xbf16>, vector<4x128xbf16>, vector<8x128xf32> -> vector<8x128xf32>
    %c0_46 = arith.constant 0 : index
    %c0_47 = arith.constant 0 : index
    %c0_48 = arith.constant 0 : index
    %52 = vector.load %arg12[%c0_46, %c0_47, %c0_48] : memref<4x8x1xf32, #tpu.memory_space<vmem>>, vector<1x8x1xf32>
    %53 = vector.shape_cast %52 : vector<1x8x1xf32> to vector<8x1xf32>
    %54 = vector.broadcast %53 : vector<8x1xf32> to vector<8x128xf32>
    %55 = arith.addf %51, %54 : vector<8x128xf32>
    %56 = arith.addf %55, %47 : vector<8x128xf32>
    %cst_49 = arith.constant 0.000000e+00 : f32
    %57 = vector.broadcast %cst_49 : f32 to vector<8x128xf32>
    %58 = arith.maximumf %56, %57 : vector<8x128xf32>
    %c1_50 = arith.constant 1 : index
    %c0_51 = arith.constant 0 : index
    %c0_52 = arith.constant 0 : index
    %59 = vector.load %arg11[%c1_50, %c0_51, %c0_52] : memref<4x8x4xbf16, #tpu.memory_space<vmem>>, vector<1x8x4xbf16>
    %60 = vector.shape_cast %59 : vector<1x8x4xbf16> to vector<8x4xbf16>
    %61 = arith.truncf %19 : vector<4x128xf32> to vector<4x128xbf16>
    %cst_53 = arith.constant dense<0.000000e+00> : vector<8x128xf32>
    %62 = tpu.matmul %60, %61, %cst_53 {dimension_numbers = #tpu.dot_dimension_numbers<[1], [0], [0], [1], [0, 0, 1, 1], [], []>} : vector<8x4xbf16>, vector<4x128xbf16>, vector<8x128xf32> -> vector<8x128xf32>
    %c1_54 = arith.constant 1 : index
    %c0_55 = arith.constant 0 : index
    %c0_56 = arith.constant 0 : index
    %63 = vector.load %arg12[%c1_54, %c0_55, %c0_56] : memref<4x8x1xf32, #tpu.memory_space<vmem>>, vector<1x8x1xf32>
    %64 = vector.shape_cast %63 : vector<1x8x1xf32> to vector<8x1xf32>
    %65 = vector.broadcast %64 : vector<8x1xf32> to vector<8x128xf32>
    %66 = arith.addf %62, %65 : vector<8x128xf32>
    %67 = arith.addf %66, %47 : vector<8x128xf32>
    %cst_57 = arith.constant 0.000000e+00 : f32
    %68 = vector.broadcast %cst_57 : f32 to vector<8x128xf32>
    %69 = arith.maximumf %67, %68 : vector<8x128xf32>
    %70 = arith.addf %58, %69 : vector<8x128xf32>
    %c2_58 = arith.constant 2 : index
    %c0_59 = arith.constant 0 : index
    %c0_60 = arith.constant 0 : index
    %71 = vector.load %arg11[%c2_58, %c0_59, %c0_60] : memref<4x8x4xbf16, #tpu.memory_space<vmem>>, vector<1x8x4xbf16>
    %72 = vector.shape_cast %71 : vector<1x8x4xbf16> to vector<8x4xbf16>
    %73 = arith.truncf %29 : vector<4x128xf32> to vector<4x128xbf16>
    %cst_61 = arith.constant dense<0.000000e+00> : vector<8x128xf32>
    %74 = tpu.matmul %72, %73, %cst_61 {dimension_numbers = #tpu.dot_dimension_numbers<[1], [0], [0], [1], [0, 0, 1, 1], [], []>} : vector<8x4xbf16>, vector<4x128xbf16>, vector<8x128xf32> -> vector<8x128xf32>
    %c2_62 = arith.constant 2 : index
    %c0_63 = arith.constant 0 : index
    %c0_64 = arith.constant 0 : index
    %75 = vector.load %arg12[%c2_62, %c0_63, %c0_64] : memref<4x8x1xf32, #tpu.memory_space<vmem>>, vector<1x8x1xf32>
    %76 = vector.shape_cast %75 : vector<1x8x1xf32> to vector<8x1xf32>
    %77 = vector.broadcast %76 : vector<8x1xf32> to vector<8x128xf32>
    %78 = arith.addf %74, %77 : vector<8x128xf32>
    %79 = arith.addf %78, %47 : vector<8x128xf32>
    %cst_65 = arith.constant 0.000000e+00 : f32
    %80 = vector.broadcast %cst_65 : f32 to vector<8x128xf32>
    %81 = arith.maximumf %79, %80 : vector<8x128xf32>
    %82 = arith.addf %70, %81 : vector<8x128xf32>
    %cst_66 = arith.constant 0.000000e+00 : f32
    %83 = vector.broadcast %cst_66 : f32 to vector<8x128xf32>
    %84 = arith.maximumf %47, %83 : vector<8x128xf32>
    %85 = arith.addf %82, %84 : vector<8x128xf32>
    %c0_67 = arith.constant 0 : index
    %c0_68 = arith.constant 0 : index
    %c0_69 = arith.constant 0 : index
    %86 = vector.load %arg13[%c0_67, %c0_68, %c0_69] : memref<1x8x128xf32, #tpu.memory_space<vmem>>, vector<1x8x128xf32>
    %87 = vector.shape_cast %86 : vector<1x8x128xf32> to vector<8x128xf32>
    %88 = arith.addf %85, %87 : vector<8x128xf32>
    %c0_70 = arith.constant 0 : index
    %c0_71 = arith.constant 0 : index
    %c0_72 = arith.constant 0 : index
    %89 = vector.load %arg14[%c0_70, %c0_71, %c0_72] : memref<1x8x128xf32, #tpu.memory_space<vmem>>, vector<1x8x128xf32>
    %90 = vector.shape_cast %89 : vector<1x8x128xf32> to vector<8x128xf32>
    %91 = vector.shape_cast %88 : vector<8x128xf32> to vector<1x8x128xf32>
    tpu.vector_store %arg14[%c0_70, %c0_71, %c0_72], %91 {strides = array<i32>} : memref<1x8x128xf32, #tpu.memory_space<vmem>>, vector<1x8x128xf32>,
    return
  }
  func.func @transform_0(%arg0: i32, %arg1: i32) -> (i32, i32, i32) {
    %c0_i32 = arith.constant 0 : i32
    %c0_i32_0 = arith.constant 0 : i32
    return %arg0, %c0_i32, %arg1 : i32, i32, i32
  }
  func.func @transform_1(%arg0: i32, %arg1: i32) -> (i32, i32, i32) {
    %c0_i32 = arith.constant 0 : i32
    %c0_i32_0 = arith.constant 0 : i32
    return %arg0, %c0_i32, %arg1 : i32, i32, i32
  }
  func.func @transform_2(%arg0: i32, %arg1: i32) -> (i32, i32, i32) {
    %c0_i32 = arith.constant 0 : i32
    %c0_i32_0 = arith.constant 0 : i32
    return %arg0, %c0_i32, %arg1 : i32, i32, i32
  }
  func.func @transform_3(%arg0: i32, %arg1: i32) -> (i32, i32, i32) {
    %c0_i32 = arith.constant 0 : i32
    %c0_i32_0 = arith.constant 0 : i32
    return %arg0, %c0_i32, %arg1 : i32, i32, i32
  }
  func.func @transform_4(%arg0: i32, %arg1: i32) -> (i32, i32) {
    %c0_i32 = arith.constant 0 : i32
    %c0_i32_0 = arith.constant 0 : i32
    %c0_i32_1 = arith.constant 0 : i32
    return %c0_i32, %c0_i32_0 : i32, i32
  }
  func.func @transform_5(%arg0: i32, %arg1: i32) -> (i32, i32) {
    %c0_i32 = arith.constant 0 : i32
    %c0_i32_0 = arith.constant 0 : i32
    %c0_i32_1 = arith.constant 0 : i32
    return %c0_i32, %c0_i32_0 : i32, i32
  }
  func.func @transform_6(%arg0: i32, %arg1: i32) -> (i32, i32) {
    %c0_i32 = arith.constant 0 : i32
    %c0_i32_0 = arith.constant 0 : i32
    %c0_i32_1 = arith.constant 0 : i32
    return %c0_i32, %c0_i32_0 : i32, i32
  }
  func.func @transform_7(%arg0: i32, %arg1: i32) -> (i32, i32) {
    %c0_i32 = arith.constant 0 : i32
    %c0_i32_0 = arith.constant 0 : i32
    %c0_i32_1 = arith.constant 0 : i32
    return %c0_i32, %c0_i32_0 : i32, i32
  }
  func.func @transform_8(%arg0: i32, %arg1: i32) -> (i32, i32, i32) {
    %c0_i32 = arith.constant 0 : i32
    %c0_i32_0 = arith.constant 0 : i32
    %c0_i32_1 = arith.constant 0 : i32
    %c0_i32_2 = arith.constant 0 : i32
    return %c0_i32, %c0_i32_0, %c0_i32_1 : i32, i32, i32
  }
  func.func @transform_9(%arg0: i32, %arg1: i32) -> (i32, i32, i32) {
    %c0_i32 = arith.constant 0 : i32
    %c0_i32_0 = arith.constant 0 : i32
    %c0_i32_1 = arith.constant 0 : i32
    %c0_i32_2 = arith.constant 0 : i32
    return %c0_i32, %c0_i32_0, %c0_i32_1 : i32, i32, i32
  }
  func.func @transform_10(%arg0: i32, %arg1: i32) -> (i32, i32, i32) {
    %c0_i32 = arith.constant 0 : i32
    %c0_i32_0 = arith.constant 0 : i32
    %c0_i32_1 = arith.constant 0 : i32
    %c0_i32_2 = arith.constant 0 : i32
    return %c0_i32, %c0_i32_0, %c0_i32_1 : i32, i32, i32
  }
  func.func @transform_11(%arg0: i32, %arg1: i32) -> (i32, i32, i32) {
    %c0_i32 = arith.constant 0 : i32
    %c0_i32_0 = arith.constant 0 : i32
    return %arg0, %c0_i32, %arg1 : i32, i32, i32
  }
  func.func @transform_12(%arg0: i32, %arg1: i32) -> (i32, i32, i32) {
    %c0_i32 = arith.constant 0 : i32
    %c0_i32_0 = arith.constant 0 : i32
    return %arg0, %c0_i32, %arg1 : i32, i32, i32
  }
}

</mosaic_0001>

<llo_original>
// kernel: unet_up2_forward.2
$region0: #{unet_up2_forward.2}
  #allocation0 [shape = 'u32[]', space=smem, size = 0x4, offset = 0x4, fixed_abs, tag = 'smem constant byte address 0x4 - core index']
  #allocation1 [shape = 'u32[144,128]{1,0:T(1,128)}', space=vmem, size = 0x12000, scoped, tag = 'internal scratch']
  %s0 = inlined_call_operand.vmem [shape: bf16[2,72,256], index: 0, kind: input, shape index: {}]
  %s1 = inlined_call_operand.vmem [shape: bf16[8,72], index: 1, kind: input, shape index: {}]
  %s2 = inlined_call_operand.vmem [shape: f32[8,1], index: 2, kind: input, shape index: {}]
  %s3 = inlined_call_operand.vmem [shape: bf16[16,8], index: 3, kind: input, shape index: {}]
  %s4 = inlined_call_operand.vmem [shape: f32[16,1], index: 4, kind: input, shape index: {}]
  %s5 = inlined_call_operand.vmem [shape: f32[2,8,256], index: 5, kind: output, shape index: {0}]
  %s6 = inlined_call_operand.vmem [shape: bf16[2,16,256], index: 6, kind: output, shape index: {1}]
  %7 = xla_tuple %s5, %s6
  %s8 = sld [smem:[#allocation0]]
  $region139: #{unet_up2_forward.2} parent=0
    _
  %s10 = ssub.s32 1, %s8
  %s11 = scalar_select 0, %s10, %s8
  $region1: #{unet_up2_forward.2} parent=0
    #allocation2 [shape = 'u8[36864]{0}', space=vmem, size = 0x9000, scoped, tag = 'input window, operand 0']
    #allocation3 [shape = 'u8[8192]{0}', space=vmem, size = 0x2000, scoped, tag = 'output window, operand 1']
    loop: start=0, step=1, limit=6
    $region2: #{unet_up2_forward.2} parent=1 // loop_pre_header
      _
    $region3: #{unet_up2_forward.2} parent=1 // loop_header
      %s13 = sphi 0, %s17
      %p14 = scmp.ge.s32.totalorder %s13, 6
      %s20 = sphi 0, %s32
      %s21 = sphi 0, %s28
      %s22 = sphi 0, %s20
      %s23 = sphi 0, %s21
      %s24 = sphi 0, %s22
      %s25 = sphi 0, %s23
      %s37 = sphi 0, %s39
      %s40 = sphi 0, %s37
      %s41 = sphi 0, %s40
      %s57 = sphi 0, %s41
      %s61 = sphi 0, %s61
      %s63 = sphi 0, %s61
      %s64 = sphi 0, %s63
      %s78 = sphi 0, %s64
      %s82 = sphi 0, %s82
      %s84 = sphi 0, %s82
      %s85 = sphi 0, %s84
      %s99 = sphi 0, %s85
      %s103 = sphi 0, %s103
      %s105 = sphi 0, %s103
      %s106 = sphi 0, %s105
      %s120 = sphi 0, %s106
      %s124 = sphi 0, %s124
      %s126 = sphi 0, %s124
      %s127 = sphi 0, %s126
      %s141 = sphi 0, %s127
      %s149 = sphi 0, %s151
      %s152 = sphi 0, %s149
      %s153 = sphi 0, %s152
      %s169 = sphi 0, %s153
      %s177 = sphi 0, %s179
      %s180 = sphi 0, %s177
      %s181 = sphi 0, %s180
      %s197 = sphi 0, %s181
    $region4: #{unet_up2_forward.2} parent=1 // loop_header_branch
      %16 = sbr.rel (%p14) target = $region8
    $region5: #{unet_up2_forward.2} parent=1 // loop_body
      %s18 = ssub.s32 %s13, 1
      %s19 = ssub.s32 %s13, 2
      %s26 = sadd.s32 1, %s21
      %p27 = scmp.ge.s32.totalorder %s26, 2
      %s28 = scalar_select %p27, 0, %s26
      %s29 = sadd.s32 1, %s20
      %s30 = scalar_select %p27, %s29, %s20
      %p31 = scmp.ge.s32.totalorder %s30, 2
      %s32 = scalar_select %p31, 0, %s30
      %s33 = ssub.s32 %s20, %s32
      %s34 = ssub.s32 %s21, %s28
      %s35 = sor.u32 %s33, %s34
      %p36 = scmp.eq.s32.totalorder %s35, 0
      %s38 = sadd.s32 %s37, 1
      %s39 = scalar_select %p36, %s37, %s38
      %p42 = pneg %p36
      %p43 = scmp.eq.s32.totalorder %s13, 3
      %p44 = por %p42, %p43
      %p45 = scmp.ne.s32.totalorder %s37, %s40
      %p46 = scmp.eq.s32.totalorder %s13, 0
      %p47 = por %p45, %p46
      %p48 = scmp.ne.s32.totalorder %s37, %s40
      %p49 = scmp.eq.s32.totalorder %s18, 3
      %p50 = por %p48, %p49
      %p51 = scmp.ne.s32.totalorder %s40, %s41
      %p52 = scmp.eq.s32.totalorder %s18, 0
      %p53 = por %p51, %p52
      %p54 = scmp.ne.s32.totalorder %s40, %s41
      %p55 = scmp.eq.s32.totalorder %s19, 3
      %p56 = por %p54, %p55
      %p58 = scmp.ne.s32.totalorder %s41, %s57
      %p59 = scmp.eq.s32.totalorder %s19, 0
      %p60 = por %p58, %p59
      %s62 = sadd.s32 %s61, 1
      %p65 = scmp.eq.s32.totalorder %s13, 3
      %p66 = scmp.ne.s32.totalorder %s61, %s63
      %p67 = scmp.eq.s32.totalorder %s13, 0
      %p68 = por %p66, %p67
      %p69 = scmp.ne.s32.totalorder %s61, %s63
      %p70 = scmp.eq.s32.totalorder %s18, 3
      %p71 = por %p69, %p70
      %p72 = scmp.ne.s32.totalorder %s63, %s64
      %p73 = scmp.eq.s32.totalorder %s18, 0
      %p74 = por %p72, %p73
      %p75 = scmp.ne.s32.totalorder %s63, %s64
      %p76 = scmp.eq.s32.totalorder %s19, 3
      %p77 = por %p75, %p76
      %p79 = scmp.ne.s32.totalorder %s64, %s78
      %p80 = scmp.eq.s32.totalorder %s19, 0
      %p81 = por %p79, %p80
      %s83 = sadd.s32 %s82, 1
      %p86 = scmp.eq.s32.totalorder %s13, 3
      %p87 = scmp.ne.s32.totalorder %s82, %s84
      %p88 = scmp.eq.s32.totalorder %s13, 0
      %p89 = por %p87, %p88
      %p90 = scmp.ne.s32.totalorder %s82, %s84
      %p91 = scmp.eq.s32.totalorder %s18, 3
      %p92 = por %p90, %p91
      %p93 = scmp.ne.s32.totalorder %s84, %s85
      %p94 = scmp.eq.s32.totalorder %s18, 0
      %p95 = por %p93, %p94
      %p96 = scmp.ne.s32.totalorder %s84, %s85
      %p97 = scmp.eq.s32.totalorder %s19, 3
      %p98 = por %p96, %p97
      %p100 = scmp.ne.s32.totalorder %s85, %s99
      %p101 = scmp.eq.s32.totalorder %s19, 0
      %p102 = por %p100, %p101
      %s104 = sadd.s32 %s103, 1
      %p107 = scmp.eq.s32.totalorder %s13, 3
      %p108 = scmp.ne.s32.totalorder %s103, %s105
      %p109 = scmp.eq.s32.totalorder %s13, 0
      %p110 = por %p108, %p109
      %p111 = scmp.ne.s32.totalorder %s103, %s105
      %p112 = scmp.eq.s32.totalorder %s18, 3
      %p113 = por %p111, %p112
      %p114 = scmp.ne.s32.totalorder %s105, %s106
      %p115 = scmp.eq.s32.totalorder %s18, 0
      %p116 = por %p114, %p115
      %p117 = scmp.ne.s32.totalorder %s105, %s106
      %p118 = scmp.eq.s32.totalorder %s19, 3
      %p119 = por %p117, %p118
      %p121 = scmp.ne.s32.totalorder %s106, %s120
      %p122 = scmp.eq.s32.totalorder %s19, 0
      %p123 = por %p121, %p122
      %s125 = sadd.s32 %s124, 1
      %p128 = scmp.eq.s32.totalorder %s13, 3
      %p129 = scmp.ne.s32.totalorder %s124, %s126
      %p130 = scmp.eq.s32.totalorder %s13, 0
      %p131 = por %p129, %p130
      %p132 = scmp.ne.s32.totalorder %s124, %s126
      %p133 = scmp.eq.s32.totalorder %s18, 3
      %p134 = por %p132, %p133
      %p135 = scmp.ne.s32.totalorder %s126, %s127
      %p136 = scmp.eq.s32.totalorder %s18, 0
      %p137 = por %p135, %p136
      %p138 = scmp.ne.s32.totalorder %s126, %s127
      %p139 = scmp.eq.s32.totalorder %s19, 3
      %p140 = por %p138, %p139
      %p142 = scmp.ne.s32.totalorder %s127, %s141
      %p143 = scmp.eq.s32.totalorder %s19, 0
      %p144 = por %p142, %p143
      %s145 = ssub.s32 %s20, %s32
      %s146 = ssub.s32 %s21, %s28
      %s147 = sor.u32 %s145, %s146
      %p148 = scmp.eq.s32.totalorder %s147, 0
      %s150 = sadd.s32 %s149, 1
      %s151 = scalar_select %p148, %s149, %s150
      %p154 = pneg %p148
      %p155 = scmp.eq.s32.totalorder %s13, 3
      %p156 = por %p154, %p155
      %p157 = scmp.ne.s32.totalorder %s149, %s152
      %p158 = scmp.eq.s32.totalorder %s13, 0
      %p159 = por %p157, %p158
      %p160 = scmp.ne.s32.totalorder %s149, %s152
      %p161 = scmp.eq.s32.totalorder %s18, 3
      %p162 = por %p160, %p161
      %p163 = scmp.ne.s32.totalorder %s152, %s153
      %p164 = scmp.eq.s32.totalorder %s18, 0
      %p165 = por %p163, %p164
      %p166 = scmp.ne.s32.totalorder %s152, %s153
      %p167 = scmp.eq.s32.totalorder %s19, 3
      %p168 = por %p166, %p167
      %p170 = scmp.ne.s32.totalorder %s153, %s169
      %p171 = scmp.eq.s32.totalorder %s19, 0
      %p172 = por %p170, %p171
      %s173 = ssub.s32 %s20, %s32
      %s174 = ssub.s32 %s21, %s28
      %s175 = sor.u32 %s173, %s174
      %p176 = scmp.eq.s32.totalorder %s175, 0
      %s178 = sadd.s32 %s177, 1
      %s179 = scalar_select %p176, %s177, %s178
      %p182 = pneg %p176
      %p183 = scmp.eq.s32.totalorder %s13, 3
      %p184 = por %p182, %p183
      %p185 = scmp.ne.s32.totalorder %s177, %s180
      %p186 = scmp.eq.s32.totalorder %s13, 0
      %p187 = por %p185, %p186
      %p188 = scmp.ne.s32.totalorder %s177, %s180
      %p189 = scmp.eq.s32.totalorder %s18, 3
      %p190 = por %p188, %p189
      %p191 = scmp.ne.s32.totalorder %s180, %s181
      %p192 = scmp.eq.s32.totalorder %s18, 0
      %p193 = por %p191, %p192
      %p194 = scmp.ne.s32.totalorder %s180, %s181
      %p195 = scmp.eq.s32.totalorder %s19, 3
      %p196 = por %p194, %p195
      %p198 = scmp.ne.s32.totalorder %s181, %s197
      %p199 = scmp.eq.s32.totalorder %s19, 0
      %p200 = por %p198, %p199
      %p201 = scmp.le.s32.totalorder 1, %s13
      %p202 = scmp.lt.s32.totalorder %s13, 5
      %p203 = pnand %p201, %p202
      %p204 = pneg %p203
      // Predicated region
      $region9: #{unet_up2_forward.2} parent=5 // pred_check
        _
      $region10: #{unet_up2_forward.2} parent=5 // pred_check_branch
        %206 = sbr.rel (%p203) target = $region12
      $region11: #{unet_up2_forward.2} parent=5 // pred_region
        %s207 = ssub.s32 %s13, 1
        // Predicated region
        $region13: #{unet_up2_forward.2} parent=11 // pred_check
          %p208 = pneg %p74
        $region14: #{unet_up2_forward.2} parent=11 // pred_check_branch
          %210 = sbr.rel (%p208) target = $region16
        $region15: #{unet_up2_forward.2} parent=11 // pred_region
          _
        $region16: #{unet_up2_forward.2} parent=11 // pred_fallthru
          _
        // Predicated region
        $region17: #{unet_up2_forward.2} parent=11 // pred_check
          %p211 = pneg %p95
        $region18: #{unet_up2_forward.2} parent=11 // pred_check_branch
          %213 = sbr.rel (%p211) target = $region20
        $region19: #{unet_up2_forward.2} parent=11 // pred_region
          _
        $region20: #{unet_up2_forward.2} parent=11 // pred_fallthru
          _
        // Predicated region
        $region21: #{unet_up2_forward.2} parent=11 // pred_check
          %p214 = pneg %p116
        $region22: #{unet_up2_forward.2} parent=11 // pred_check_branch
          %216 = sbr.rel (%p214) target = $region24
        $region23: #{unet_up2_forward.2} parent=11 // pred_region
          _
        $region24: #{unet_up2_forward.2} parent=11 // pred_fallthru
          _
        // Predicated region
        $region25: #{unet_up2_forward.2} parent=11 // pred_check
          %p217 = pneg %p137
        $region26: #{unet_up2_forward.2} parent=11 // pred_check_branch
          %219 = sbr.rel (%p217) target = $region28
        $region27: #{unet_up2_forward.2} parent=11 // pred_region
          _
        $region28: #{unet_up2_forward.2} parent=11 // pred_fallthru
          _
      $region12: #{unet_up2_forward.2} parent=5 // pred_fallthru
        _
      %p220 = scmp.lt.s32.totalorder %s13, 4
      // Predicated region
      $region29: #{unet_up2_forward.2} parent=5 // pred_check
        %p221 = pneg %p220
      $region30: #{unet_up2_forward.2} parent=5 // pred_check_branch
        %223 = sbr.rel (%p221) target = $region32
      $region31: #{unet_up2_forward.2} parent=5 // pred_region
        // Predicated region
        $region33: #{unet_up2_forward.2} parent=31 // pred_check
          %p224 = pneg %p47
        $region34: #{unet_up2_forward.2} parent=31 // pred_check_branch
          %226 = sbr.rel (%p224) target = $region36
        $region35: #{unet_up2_forward.2} parent=31 // pred_region
          %s227 = sand.u32 %s37, 1
          %s228 = sand.u32 %s37, 1
          %s229 = smul.addr %s228, 36
          %s230 = scalar_lea.vmem [#allocation2], %s229
          %s231 = smul.addr %s20, 18
          %s232 = sadd.s32 %s21, %s231
          %s233 = smul.addr %s232, 4
          %s234 = scalar_lea.vmem %s0, %s233
          // Predicated region
          $region37: #{unet_up2_forward.2} parent=35 // pred_check
            _
          $region38: #{unet_up2_forward.2} parent=35 // pred_check_branch
            %236 = sbr.rel (0) target = $region40
          $region39: #{unet_up2_forward.2} parent=35 // pred_region
            // Predicated region
            $region41: #{unet_up2_forward.2} parent=39 // pred_check
              _
            $region42: #{unet_up2_forward.2} parent=39 // pred_check_branch
              %238 = sbr.rel target = $region44
            $region43: #{unet_up2_forward.2} parent=39 // pred_region
              // Predicated region
              $region56: #{unet_up2_forward.2} parent=43 // pred_check
                _
              $region57: #{unet_up2_forward.2} parent=43 // pred_check_branch
                %269 = sbr.rel (0) target = $region59
              $region58: #{unet_up2_forward.2} parent=43 // pred_region
                loop: start=0, step=1, limit=1
                $region60: #{unet_up2_forward.2} parent=58 // loop_pre_header
                  _
                $region61: #{unet_up2_forward.2} parent=58 // loop_header
                  %s271 = sphi 0, %s275
                  %p272 = scmp.ge.s32.totalorder %s271, 1
                  %s276 = sphi %s234, %s234
                  %s277 = sphi %s230, %s230
                $region62: #{unet_up2_forward.2} parent=58 // loop_header_branch
                  %274 = sbr.rel (%p272) target = $region66
                $region63: #{unet_up2_forward.2} parent=58 // loop_body
                  _
                $region64: #{unet_up2_forward.2} parent=58 // loop_footer
                  %s275 = sadd.s32 1, %s271
                $region65: #{unet_up2_forward.2} parent=58 // loop_footer_branch
                  %270 = sbr.rel target = $region61
                $region66: #{unet_up2_forward.2} parent=58 // loop_exit
                  _
                loop: start=0, step=1, limit=1
                $region67: #{unet_up2_forward.2} parent=58 // loop_pre_header
                  _
                $region68: #{unet_up2_forward.2} parent=58 // loop_header
                  %s280 = sphi 0, %s284
                  %p281 = scmp.ge.s32.totalorder %s280, 1
                  %s285 = sphi %s234, %s234
                  %s286 = sphi %s230, %s230
                $region69: #{unet_up2_forward.2} parent=58 // loop_header_branch
                  %283 = sbr.rel (%p281) target = $region73
                $region70: #{unet_up2_forward.2} parent=58 // loop_body
                  %v287 = vld [vmem:[%s285] sm:$0xf]
                  %288 = vst [vmem:[%s286] sm:$0xf] %v287
                  %v289 = vld [vmem:[%s285 + $0x8] sm:$0xf]
                  %290 = vst [vmem:[%s286 + $0x4] sm:$0xf] %v289
                  %v291 = vld [vmem:[%s285 + $0x10] sm:$0xf]
                  %292 = vst [vmem:[%s286 + $0x8] sm:$0xf] %v291
                  %v293 = vld [vmem:[%s285 + $0x18] sm:$0xf]
                  %294 = vst [vmem:[%s286 + $0xc] sm:$0xf] %v293
                  %v295 = vld [vmem:[%s285 + $0x20] sm:$0xf]
                  %296 = vst [vmem:[%s286 + $0x10] sm:$0xf] %v295
                  %v297 = vld [vmem:[%s285 + $0x28] sm:$0xf]
                  %298 = vst [vmem:[%s286 + $0x14] sm:$0xf] %v297
                  %v299 = vld [vmem:[%s285 + $0x30] sm:$0xf]
                  %300 = vst [vmem:[%s286 + $0x18] sm:$0xf] %v299
                  %v301 = vld [vmem:[%s285 + $0x38] sm:$0xf]
                  %302 = vst [vmem:[%s286 + $0x1c] sm:$0xf] %v301
                  %v303 = vld [vmem:[%s285 + $0x40] sm:$0xf]
                  %304 = vst [vmem:[%s286 + $0x20] sm:$0xf] %v303
                $region71: #{unet_up2_forward.2} parent=58 // loop_footer
                  %s284 = sadd.s32 1, %s280
                $region72: #{unet_up2_forward.2} parent=58 // loop_footer_branch
                  %279 = sbr.rel target = $region68
                $region73: #{unet_up2_forward.2} parent=58 // loop_exit
                  _
              $region59: #{unet_up2_forward.2} parent=43 // pred_fallthru
                _
            $region44: #{unet_up2_forward.2} parent=39 // pred_fallthru
              _
            // Predicated region
            $region45: #{unet_up2_forward.2} parent=39 // pred_check
              _
            $region46: #{unet_up2_forward.2} parent=39 // pred_check_branch
              %240 = sbr.rel (0) target = $region48
            $region47: #{unet_up2_forward.2} parent=39 // pred_region
              loop: start=0, step=1, limit=1
              $region49: #{unet_up2_forward.2} parent=47 // loop_pre_header
                _
              $region50: #{unet_up2_forward.2} parent=47 // loop_header
                %s243 = sphi 0, %s247
                %p244 = scmp.ge.s32.totalorder %s243, 1
                %s248 = sphi %s234, %s234
                %s249 = sphi %s230, %s230
              $region51: #{unet_up2_forward.2} parent=47 // loop_header_branch
                %246 = sbr.rel (%p244) target = $region55
              $region52: #{unet_up2_forward.2} parent=47 // loop_body
                %v250 = vld [vmem:[%s248] sm:$0xf]
                %251 = vst [vmem:[%s249] sm:$0xf] %v250
                %v252 = vld [vmem:[%s248 + $0x8] sm:$0xf]
                %253 = vst [vmem:[%s249 + $0x4] sm:$0xf] %v252
                %v254 = vld [vmem:[%s248 + $0x10] sm:$0xf]
                %255 = vst [vmem:[%s249 + $0x8] sm:$0xf] %v254
                %v256 = vld [vmem:[%s248 + $0x18] sm:$0xf]
                %257 = vst [vmem:[%s249 + $0xc] sm:$0xf] %v256
                %v258 = vld [vmem:[%s248 + $0x20] sm:$0xf]
                %259 = vst [vmem:[%s249 + $0x10] sm:$0xf] %v258
                %v260 = vld [vmem:[%s248 + $0x28] sm:$0xf]
                %261 = vst [vmem:[%s249 + $0x14] sm:$0xf] %v260
                %v262 = vld [vmem:[%s248 + $0x30] sm:$0xf]
                %263 = vst [vmem:[%s249 + $0x18] sm:$0xf] %v262
                %v264 = vld [vmem:[%s248 + $0x38] sm:$0xf]
                %265 = vst [vmem:[%s249 + $0x1c] sm:$0xf] %v264
                %v266 = vld [vmem:[%s248 + $0x40] sm:$0xf]
                %267 = vst [vmem:[%s249 + $0x20] sm:$0xf] %v266
              $region53: #{unet_up2_forward.2} parent=47 // loop_footer
                %s247 = sadd.s32 1, %s243
              $region54: #{unet_up2_forward.2} parent=47 // loop_footer_branch
                %242 = sbr.rel target = $region50
              $region55: #{unet_up2_forward.2} parent=47 // loop_exit
                _
            $region48: #{unet_up2_forward.2} parent=39 // pred_fallthru
              _
          $region40: #{unet_up2_forward.2} parent=35 // pred_fallthru
            _
          %305 = vnop
        $region36: #{unet_up2_forward.2} parent=31 // pred_fallthru
          _
      $region32: #{unet_up2_forward.2} parent=5 // pred_fallthru
        _
      %p306 = scmp.le.s32.totalorder 1, %s13
      %p307 = scmp.lt.s32.totalorder %s13, 5
      %p308 = pnand %p306, %p307
      %p309 = pneg %p308
      // Predicated region
      $region74: #{unet_up2_forward.2} parent=5 // pred_check
        _
      $region75: #{unet_up2_forward.2} parent=5 // pred_check_branch
        %311 = sbr.rel (%p308) target = $region77
      $region76: #{unet_up2_forward.2} parent=5 // pred_region
        %s312 = ssub.s32 %s13, 1
        %s313 = sand.u32 %s40, 1
        %s314 = sand.u32 %s40, 1
        %s315 = smul.addr %s314, 36
        %s316 = scalar_lea.vmem [#allocation2], %s315
        // Predicated region
        $region78: #{unet_up2_forward.2} parent=76 // pred_check
          %p317 = pneg %p53
        $region79: #{unet_up2_forward.2} parent=76 // pred_check_branch
          %319 = sbr.rel (%p317) target = $region81
        $region80: #{unet_up2_forward.2} parent=76 // pred_region
          _
        $region81: #{unet_up2_forward.2} parent=76 // pred_fallthru
          _
        %s320 = sand.u32 %s40, 1
        %s321 = sand.u32 %s40, 1
        %s322 = smul.addr %s321, 36
        %s323 = scalar_lea.vmem [#allocation2], %s322
        %p324 = pneg %p53
        %p325 = pneg %p50
        %p326 = pneg %p74
        %p327 = pneg %p71
        %p328 = pneg %p95
        %p329 = pneg %p92
        %p330 = pneg %p116
        %p331 = pneg %p113
        %p332 = pneg %p137
        %p333 = pneg %p134
        %p334 = pneg %p165
        %p335 = pneg %p162
        %p336 = scmp.lt.s32.totalorder %s22, 1
        %s337 = scalar_select %p336, %s22, 1
        %p338 = scmp.lt.s32.totalorder %s23, 1
        %s339 = scalar_select %p338, %s23, 1
        %s340 = smul.addr %s337, 2
        %s341 = sadd.s32 %s339, %s340
        %s342 = smul.addr %s341, 8
        %s343 = scalar_lea.vmem %s5, %s342
        %p344 = pneg %p193
        %p345 = pneg %p190
        %s346 = sand.u32 %s180, 1
        %s347 = sand.u32 %s180, 1
        %s348 = smul.addr %s347, 8
        %s349 = scalar_lea.vmem [#allocation3], %s348
        %p350 = scmp.lt.s32.totalorder %s22, 1
        %s351 = scalar_select %p350, %s22, 1
        %p352 = scmp.lt.s32.totalorder %s23, 1
        %s353 = scalar_select %p352, %s23, 1
        %s354 = smul.addr %s351, 2
        %s355 = sadd.s32 %s353, %s354
        %s356 = smul.addr %s355, 8
        %s357 = scalar_lea.vmem %s5, %s356
        %v359 = vld [vmem:[%s1] sm:$0xf]
        %v360 = vld [vmem:[%s316] sm:$0xf]
        %v361 = vld [vmem:[%s316 + $0x4] sm:$0xf]
        %v362 = vld [vmem:[%s316 + $0x8] sm:$0xf]
        %v363 = vld [vmem:[%s316 + $0xc] sm:$0xf]
        %v364 = vld [vmem:[%s316 + $0x10] sm:$0xf]
        %v365 = vld [vmem:[%s316 + $0x14] sm:$0xf]
        %v366 = vld [vmem:[%s316 + $0x18] sm:$0xf]
        %v367 = vld [vmem:[%s316 + $0x1c] sm:$0xf]
        %v368 = vld [vmem:[%s316 + $0x20] sm:$0xf]
        %v369 = vld [vmem:[%s2] sm:$0xff]
        %371 = vset.pattern.permute.xlu0 0
        %372 = vperm.xlu0 %371, %v369
        %v373 = vpop.permute.xlu0 %372
        %v384 = vunpack.c.l.b16 %v360
        %v385 = vunpack.c.l.b16 %v361
        %v386 = vunpack.c.l.b16 %v362
        %v387 = vunpack.c.l.b16 %v363
        %v388 = vunpack.c.l.b16 %v364
        %v389 = vunpack.c.l.b16 %v365
        %v390 = vunpack.c.l.b16 %v366
        %v391 = vunpack.c.l.b16 %v367
        %v392 = vunpack.c.l.b16 %v368
        %v393 = vpack.c.b16 %v385, %v384
        %v394 = vpack.c.b16 %v387, %v386
        %v395 = vpack.c.b16 %v389, %v388
        %v396 = vpack.c.b16 %v391, %v390
        %v397 = vpack.c.b16 %v392, %v392
        %vm402 = vcmask 588800
        %v404 = vsel %vm402, %v359, 0
        %vm406 = vcmask 1043456
        %v408 = vsel %vm406, %v397, 0
        %410 = vmatprep.subr.bf16.mxu0 0
        %411 = vmatpush1.bf16.msra.mxu0 %v393
        %412 = vmatprep.subr.bf16.mxu0 0
        %413 = vmatpush1.bf16.msra.mxu0 %v394
        %414 = vmatprep.subr.bf16.mxu0 0
        %415 = vmatpush1.bf16.msra.mxu0 %v395
        %416 = vmatprep.subr.bf16.mxu0 0
        %417 = vmatpush1.bf16.msra.mxu0 %v396
        %418 = vmatprep.subr.bf16.mxu0 0
        %419 = vmatpush1.bf16.msra.mxu0 %v408
        %420 = vmatprep.subr.bf16.mxu0 0
        %421 = vmatpush1.bf16.msra.mxu0 0
        %422 = vmatprep.subr.bf16.mxu0 0
        %423 = vmatpush1.bf16.msra.mxu0 0
        %424 = vmatprep.subr.bf16.mxu0 0
        %425 = vmatpush1.bf16.msra.mxu0 0
        %426 = vmatprep.subr.bf16.mxu0 0
        %427 = vmatpush1.bf16.msra.mxu0 0
        %428 = vmatprep.subr.bf16.mxu0 0
        %429 = vmatpush1.bf16.msra.mxu0 0
        %430 = vmatprep.subr.bf16.mxu0 0
        %431 = vmatpush1.bf16.msra.mxu0 0
        %432 = vmatprep.subr.bf16.mxu0 0
        %433 = vmatpush1.bf16.msra.mxu0 0
        %434 = vmatprep.subr.bf16.mxu0 0
        %435 = vmatpush1.bf16.msra.mxu0 0
        %436 = vmatprep.subr.bf16.mxu0 0
        %437 = vmatpush1.bf16.msra.mxu0 0
        %438 = vmatprep.subr.bf16.mxu0 0
        %439 = vmatpush1.bf16.msra.mxu0 0
        %440 = vmatprep.subr.bf16.mxu0 0
        %441 = vmatpush1.bf16.msra.mxu0 0
        %442 = vmatprep.mubr.bf16.mxu0 0
        %443 = vmatmul.mubr.bf16.gmra.mrb[0].mxu0 %v404
        %v444 = vpop.f32.mrb[0].mxu0
        %v445 = vadd.f32 %v373, %v444
        %v446 = vpop.f32.mrb[0].mxu0
        %v447 = vpop.f32.mrb[0].mxu0
        %v448 = vpop.f32.mrb[0].mxu0
        %449 = vdwg.mxu0
        %v450 = vmax.f32 %v445, 0.0
        %451 = vst [vmem:[%s357] sm:$0xff] %v450
        %v452 = vld [vmem:[%s3] sm:$0xf]
        %v453 = vld [vmem:[%s3 + $0x4] sm:$0xf]
        %v454 = vpack.c.bf16 %v450, %v450
        %v455 = vld [vmem:[%s4] sm:$0xff]
        %v456 = vld [vmem:[%s4 + $0x8] sm:$0xff]
        %458 = vset.pattern.permute.xlu0 0
        %459 = vperm.xlu0 %458, %v455
        %v460 = vpop.permute.xlu0 %459
        %463 = vset.pattern.permute.xlu0 0
        %464 = vperm.xlu0 %463, %v456
        %v465 = vpop.permute.xlu0 %464
        %v469 = vunpack.c.l.b16 %v452
        %v470 = vunpack.c.l.b16 %v453
        %v471 = vpack.c.b16 %v470, %v469
        %vm472 = vcmask 64512
        %v474 = vsel %vm472, %v471, 0
        %v477 = vsel %vm406, %v454, 0
        %479 = vmatprep.subr.bf16.mxu0 0
        %480 = vmatpush1.bf16.msra.mxu0 %v477
        %481 = vmatprep.subr.bf16.mxu0 0
        %482 = vmatpush1.bf16.msra.mxu0 0
        %483 = vmatprep.subr.bf16.mxu0 0
        %484 = vmatpush1.bf16.msra.mxu0 0
        %485 = vmatprep.subr.bf16.mxu0 0
        %486 = vmatpush1.bf16.msra.mxu0 0
        %487 = vmatprep.subr.bf16.mxu0 0
        %488 = vmatpush1.bf16.msra.mxu0 0
        %489 = vmatprep.subr.bf16.mxu0 0
        %490 = vmatpush1.bf16.msra.mxu0 0
        %491 = vmatprep.subr.bf16.mxu0 0
        %492 = vmatpush1.bf16.msra.mxu0 0
        %493 = vmatprep.subr.bf16.mxu0 0
        %494 = vmatpush1.bf16.msra.mxu0 0
        %495 = vmatprep.subr.bf16.mxu0 0
        %496 = vmatpush1.bf16.msra.mxu0 0
        %497 = vmatprep.subr.bf16.mxu0 0
        %498 = vmatpush1.bf16.msra.mxu0 0
        %499 = vmatprep.subr.bf16.mxu0 0
        %500 = vmatpush1.bf16.msra.mxu0 0
        %501 = vmatprep.subr.bf16.mxu0 0
        %502 = vmatpush1.bf16.msra.mxu0 0
        %503 = vmatprep.subr.bf16.mxu0 0
        %504 = vmatpush1.bf16.msra.mxu0 0
        %505 = vmatprep.subr.bf16.mxu0 0
        %506 = vmatpush1.bf16.msra.mxu0 0
        %507 = vmatprep.subr.bf16.mxu0 0
        %508 = vmatpush1.bf16.msra.mxu0 0
        %509 = vmatprep.subr.bf16.mxu0 0
        %510 = vmatpush1.bf16.msra.mxu0 0
        %511 = vmatprep.mubr.bf16.mxu0 0
        %512 = vmatmul.mubr.bf16.gmra.mrb[0].mxu0 %v474
        %v513 = vpop.f32.mrb[0].mxu0
        %v514 = vadd.f32 %v460, %v513
        %v515 = vpop.f32.mrb[0].mxu0
        %v516 = vpop.f32.mrb[0].mxu0
        %v517 = vadd.f32 %v465, %v516
        %v518 = vpop.f32.mrb[0].mxu0
        %519 = vdwg.mxu0
        %v520 = vpack.c.bf16 %v517, %v514
        %v522 = vunpack.c.l.b16 %v520
        %v523 = vunpack.c.h.b16 %v520
        %v524 = vpack.c.b16 %v522, %v522
        %v525 = vpack.c.b16 %v523, %v523
        %528 = vst [vmem:[%s349] sm:$0xf] %v524
        %529 = vst [vmem:[%s349 + $0x4] sm:$0xf] %v525
        %p530 = scmp.lt.s32.totalorder %s22, 1
        %s531 = scalar_select %p530, %s22, 1
        %p532 = scmp.lt.s32.totalorder %s23, 1
        %s533 = scalar_select %p532, %s23, 1
        %s534 = smul.addr %s531, 2
        %s535 = sadd.s32 %s533, %s534
        %s536 = smul.addr %s535, 8
        %s537 = scalar_lea.vmem %s5, %s536
        %s538 = sand.u32 %s180, 1
        %s539 = sand.u32 %s180, 1
        %s540 = smul.addr %s539, 8
        %s541 = scalar_lea.vmem [#allocation3], %s540
        // Predicated region
        $region82: #{unet_up2_forward.2} parent=76 // pred_check
          %p542 = pneg %p162
        $region83: #{unet_up2_forward.2} parent=76 // pred_check_branch
          %544 = sbr.rel (%p542) target = $region85
        $region84: #{unet_up2_forward.2} parent=76 // pred_region
          _
        $region85: #{unet_up2_forward.2} parent=76 // pred_fallthru
          _
        // Predicated region
        $region86: #{unet_up2_forward.2} parent=76 // pred_check
          %p545 = pneg %p190
        $region87: #{unet_up2_forward.2} parent=76 // pred_check_branch
          %547 = sbr.rel (%p545) target = $region89
        $region88: #{unet_up2_forward.2} parent=76 // pred_region
          %s548 = smul.addr %s22, 4
          %s549 = sadd.s32 %s23, %s548
          %s550 = smul.addr %s549, 4
          %s551 = scalar_lea.vmem %s6, %s550
          // Predicated region
          $region90: #{unet_up2_forward.2} parent=88 // pred_check
            _
          $region91: #{unet_up2_forward.2} parent=88 // pred_check_branch
            %553 = sbr.rel (0) target = $region93
          $region92: #{unet_up2_forward.2} parent=88 // pred_region
            // Predicated region
            $region94: #{unet_up2_forward.2} parent=92 // pred_check
              _
            $region95: #{unet_up2_forward.2} parent=92 // pred_check_branch
              %555 = sbr.rel target = $region97
            $region96: #{unet_up2_forward.2} parent=92 // pred_region
              // Predicated region
              $region109: #{unet_up2_forward.2} parent=96 // pred_check
                _
              $region110: #{unet_up2_forward.2} parent=96 // pred_check_branch
                %572 = sbr.rel (0) target = $region112
              $region111: #{unet_up2_forward.2} parent=96 // pred_region
                loop: start=0, step=1, limit=1
                $region113: #{unet_up2_forward.2} parent=111 // loop_pre_header
                  _
                $region114: #{unet_up2_forward.2} parent=111 // loop_header
                  %s574 = sphi 0, %s578
                  %p575 = scmp.ge.s32.totalorder %s574, 1
                  %s579 = sphi %s541, %s541
                  %s580 = sphi %s551, %s551
                $region115: #{unet_up2_forward.2} parent=111 // loop_header_branch
                  %577 = sbr.rel (%p575) target = $region119
                $region116: #{unet_up2_forward.2} parent=111 // loop_body
                  _
                $region117: #{unet_up2_forward.2} parent=111 // loop_footer
                  %s578 = sadd.s32 1, %s574
                $region118: #{unet_up2_forward.2} parent=111 // loop_footer_branch
                  %573 = sbr.rel target = $region114
                $region119: #{unet_up2_forward.2} parent=111 // loop_exit
                  _
                loop: start=0, step=1, limit=1
                $region120: #{unet_up2_forward.2} parent=111 // loop_pre_header
                  _
                $region121: #{unet_up2_forward.2} parent=111 // loop_header
                  %s583 = sphi 0, %s587
                  %p584 = scmp.ge.s32.totalorder %s583, 1
                  %s588 = sphi %s541, %s541
                  %s589 = sphi %s551, %s551
                $region122: #{unet_up2_forward.2} parent=111 // loop_header_branch
                  %586 = sbr.rel (%p584) target = $region126
                $region123: #{unet_up2_forward.2} parent=111 // loop_body
                  %v590 = vld [vmem:[%s588] sm:$0xf]
                  %591 = vst [vmem:[%s589] sm:$0xf] %v590
                  %v592 = vld [vmem:[%s588 + $0x4] sm:$0xf]
                  %593 = vst [vmem:[%s589 + $0x8] sm:$0xf] %v592
                $region124: #{unet_up2_forward.2} parent=111 // loop_footer
                  %s587 = sadd.s32 1, %s583
                $region125: #{unet_up2_forward.2} parent=111 // loop_footer_branch
                  %582 = sbr.rel target = $region121
                $region126: #{unet_up2_forward.2} parent=111 // loop_exit
                  _
              $region112: #{unet_up2_forward.2} parent=96 // pred_fallthru
                _
            $region97: #{unet_up2_forward.2} parent=92 // pred_fallthru
              _
            // Predicated region
            $region98: #{unet_up2_forward.2} parent=92 // pred_check
              _
            $region99: #{unet_up2_forward.2} parent=92 // pred_check_branch
              %557 = sbr.rel (0) target = $region101
            $region100: #{unet_up2_forward.2} parent=92 // pred_region
              loop: start=0, step=1, limit=1
              $region102: #{unet_up2_forward.2} parent=100 // loop_pre_header
                _
              $region103: #{unet_up2_forward.2} parent=100 // loop_header
                %s560 = sphi 0, %s564
                %p561 = scmp.ge.s32.totalorder %s560, 1
                %s565 = sphi %s541, %s541
                %s566 = sphi %s551, %s551
              $region104: #{unet_up2_forward.2} parent=100 // loop_header_branch
                %563 = sbr.rel (%p561) target = $region108
              $region105: #{unet_up2_forward.2} parent=100 // loop_body
                %v567 = vld [vmem:[%s565] sm:$0xf]
                %568 = vst [vmem:[%s566] sm:$0xf] %v567
                %v569 = vld [vmem:[%s565 + $0x4] sm:$0xf]
                %570 = vst [vmem:[%s566 + $0x8] sm:$0xf] %v569
              $region106: #{unet_up2_forward.2} parent=100 // loop_footer
                %s564 = sadd.s32 1, %s560
              $region107: #{unet_up2_forward.2} parent=100 // loop_footer_branch
                %559 = sbr.rel target = $region103
              $region108: #{unet_up2_forward.2} parent=100 // loop_exit
                _
            $region101: #{unet_up2_forward.2} parent=92 // pred_fallthru
              _
          $region93: #{unet_up2_forward.2} parent=88 // pred_fallthru
            _
          %594 = vnop
        $region89: #{unet_up2_forward.2} parent=76 // pred_fallthru
          _
      $region77: #{unet_up2_forward.2} parent=5 // pred_fallthru
        _
      %p595 = scmp.le.s32.totalorder 2, %s13
      // Predicated region
      $region127: #{unet_up2_forward.2} parent=5 // pred_check
        %p596 = pneg %p595
      $region128: #{unet_up2_forward.2} parent=5 // pred_check_branch
        %598 = sbr.rel (%p596) target = $region130
      $region129: #{unet_up2_forward.2} parent=5 // pred_region
        %s599 = ssub.s32 %s13, 2
        // Predicated region
        $region131: #{unet_up2_forward.2} parent=129 // pred_check
          %p600 = pneg %p168
        $region132: #{unet_up2_forward.2} parent=129 // pred_check_branch
          %602 = sbr.rel (%p600) target = $region134
        $region133: #{unet_up2_forward.2} parent=129 // pred_region
          %p603 = scmp.lt.s32.totalorder %s24, 1
          %s604 = scalar_select %p603, %s24, 1
          %p605 = scmp.lt.s32.totalorder %s25, 1
          %s606 = scalar_select %p605, %s25, 1
          %s607 = smul.addr %s604, 2
          %s608 = sadd.s32 %s606, %s607
          %s609 = smul.addr %s608, 8
          %s610 = scalar_lea.vmem %s5, %s609
        $region134: #{unet_up2_forward.2} parent=129 // pred_fallthru
          _
        // Predicated region
        $region135: #{unet_up2_forward.2} parent=129 // pred_check
          %p611 = pneg %p196
        $region136: #{unet_up2_forward.2} parent=129 // pred_check_branch
          %613 = sbr.rel (%p611) target = $region138
        $region137: #{unet_up2_forward.2} parent=129 // pred_region
          %s614 = sand.u32 %s181, 1
          %s615 = sand.u32 %s181, 1
          %s616 = smul.addr %s615, 8
          %s617 = scalar_lea.vmem [#allocation3], %s616
        $region138: #{unet_up2_forward.2} parent=129 // pred_fallthru
          _
      $region130: #{unet_up2_forward.2} parent=5 // pred_fallthru
        _
    $region6: #{unet_up2_forward.2} parent=1 // loop_footer
      %s17 = sadd.s32 1, %s13
    $region7: #{unet_up2_forward.2} parent=1 // loop_footer_branch
      %12 = sbr.rel target = $region3
    $region8: #{unet_up2_forward.2} parent=1 // loop_exit
      _

// kernel: unet_up2_forward.3
$region0: #{unet_up2_forward.3}
  #allocation0 [shape = 'u32[]', space=smem, size = 0x4, offset = 0x4, fixed_abs, tag = 'smem constant byte address 0x4 - core index']
  #allocation1 [shape = 'u32[144,128]{1,0:T(1,128)}', space=vmem, size = 0x12000, scoped, tag = 'internal scratch']
  %s0 = inlined_call_operand.vmem [shape: bf16[2,196,256], index: 0, kind: input, shape index: {}]
  %s1 = inlined_call_operand.vmem [shape: bf16[2,324,256], index: 1, kind: input, shape index: {}]
  %s2 = inlined_call_operand.vmem [shape: bf16[2,484,256], index: 2, kind: input, shape index: {}]
  %s3 = inlined_call_operand.vmem [shape: bf16[2,36,256], index: 3, kind: input, shape index: {}]
  %s4 = inlined_call_operand.vmem [shape: bf16[4,196], index: 4, kind: input, shape index: {}]
  %s5 = inlined_call_operand.vmem [shape: bf16[4,324], index: 5, kind: input, shape index: {}]
  %s6 = inlined_call_operand.vmem [shape: bf16[4,484], index: 6, kind: input, shape index: {}]
  %s7 = inlined_call_operand.vmem [shape: bf16[4,36], index: 7, kind: input, shape index: {}]
  %s8 = inlined_call_operand.vmem [shape: f32[4,4,1], index: 8, kind: input, shape index: {}]
  %s9 = inlined_call_operand.vmem [shape: bf16[4,8,4], index: 9, kind: input, shape index: {}]
  %s10 = inlined_call_operand.vmem [shape: f32[4,8,1], index: 10, kind: input, shape index: {}]
  %s11 = inlined_call_operand.vmem [shape: f32[2,8,256], index: 11, kind: input, shape index: {}]
  %s12 = inlined_call_operand.vmem [shape: f32[2,8,256], index: 12, kind: output, shape index: {}]
  %s13 = sld [smem:[#allocation0]]
  $region245: #{unet_up2_forward.3} parent=0
    _
  %s15 = ssub.s32 1, %s13
  %s16 = scalar_select 0, %s15, %s13
  $region1: #{unet_up2_forward.3} parent=0
    #allocation2 [shape = 'u8[102400]{0}', space=vmem, size = 0x19000, scoped, tag = 'input window, operand 0']
    #allocation3 [shape = 'u8[167936]{0}', space=vmem, size = 0x29000, scoped, tag = 'input window, operand 1']
    #allocation4 [shape = 'u8[249856]{0}', space=vmem, size = 0x3d000, scoped, tag = 'input window, operand 2']
    #allocation5 [shape = 'u8[20480]{0}', space=vmem, size = 0x5000, scoped, tag = 'input window, operand 3']
    loop: start=0, step=1, limit=6
    $region2: #{unet_up2_forward.3} parent=1 // loop_pre_header
      _
    $region3: #{unet_up2_forward.3} parent=1 // loop_header
      %s18 = sphi 0, %s22
      %p19 = scmp.ge.s32.totalorder %s18, 6
      %s25 = sphi 0, %s37
      %s26 = sphi 0, %s33
      %s27 = sphi 0, %s25
      %s28 = sphi 0, %s26
      %s29 = sphi 0, %s27
      %s30 = sphi 0, %s28
      %s42 = sphi 0, %s44
      %s45 = sphi 0, %s42
      %s46 = sphi 0, %s45
      %s62 = sphi 0, %s46
      %s70 = sphi 0, %s72
      %s73 = sphi 0, %s70
      %s74 = sphi 0, %s73
      %s90 = sphi 0, %s74
      %s98 = sphi 0, %s100
      %s101 = sphi 0, %s98
      %s102 = sphi 0, %s101
      %s118 = sphi 0, %s102
      %s126 = sphi 0, %s128
      %s129 = sphi 0, %s126
      %s130 = sphi 0, %s129
      %s146 = sphi 0, %s130
      %s150 = sphi 0, %s150
      %s152 = sphi 0, %s150
      %s153 = sphi 0, %s152
      %s167 = sphi 0, %s153
      %s171 = sphi 0, %s171
      %s173 = sphi 0, %s171
      %s174 = sphi 0, %s173
      %s188 = sphi 0, %s174
      %s192 = sphi 0, %s192
      %s194 = sphi 0, %s192
      %s195 = sphi 0, %s194
      %s209 = sphi 0, %s195
      %s213 = sphi 0, %s213
      %s215 = sphi 0, %s213
      %s216 = sphi 0, %s215
      %s230 = sphi 0, %s216
      %s234 = sphi 0, %s234
      %s236 = sphi 0, %s234
      %s237 = sphi 0, %s236
      %s251 = sphi 0, %s237
      %s255 = sphi 0, %s255
      %s257 = sphi 0, %s255
      %s258 = sphi 0, %s257
      %s272 = sphi 0, %s258
      %s276 = sphi 0, %s276
      %s278 = sphi 0, %s276
      %s279 = sphi 0, %s278
      %s293 = sphi 0, %s279
      %s301 = sphi 0, %s303
      %s304 = sphi 0, %s301
      %s305 = sphi 0, %s304
      %s321 = sphi 0, %s305
      %s329 = sphi 0, %s331
      %s332 = sphi 0, %s329
      %s333 = sphi 0, %s332
      %s349 = sphi 0, %s333
    $region4: #{unet_up2_forward.3} parent=1 // loop_header_branch
      %21 = sbr.rel (%p19) target = $region8
    $region5: #{unet_up2_forward.3} parent=1 // loop_body
      %s23 = ssub.s32 %s18, 1
      %s24 = ssub.s32 %s18, 2
      %s31 = sadd.s32 1, %s26
      %p32 = scmp.ge.s32.totalorder %s31, 2
      %s33 = scalar_select %p32, 0, %s31
      %s34 = sadd.s32 1, %s25
      %s35 = scalar_select %p32, %s34, %s25
      %p36 = scmp.ge.s32.totalorder %s35, 2
      %s37 = scalar_select %p36, 0, %s35
      %s38 = ssub.s32 %s25, %s37
      %s39 = ssub.s32 %s26, %s33
      %s40 = sor.u32 %s38, %s39
      %p41 = scmp.eq.s32.totalorder %s40, 0
      %s43 = sadd.s32 %s42, 1
      %s44 = scalar_select %p41, %s42, %s43
      %p47 = pneg %p41
      %p48 = scmp.eq.s32.totalorder %s18, 3
      %p49 = por %p47, %p48
      %p50 = scmp.ne.s32.totalorder %s42, %s45
      %p51 = scmp.eq.s32.totalorder %s18, 0
      %p52 = por %p50, %p51
      %p53 = scmp.ne.s32.totalorder %s42, %s45
      %p54 = scmp.eq.s32.totalorder %s23, 3
      %p55 = por %p53, %p54
      %p56 = scmp.ne.s32.totalorder %s45, %s46
      %p57 = scmp.eq.s32.totalorder %s23, 0
      %p58 = por %p56, %p57
      %p59 = scmp.ne.s32.totalorder %s45, %s46
      %p60 = scmp.eq.s32.totalorder %s24, 3
      %p61 = por %p59, %p60
      %p63 = scmp.ne.s32.totalorder %s46, %s62
      %p64 = scmp.eq.s32.totalorder %s24, 0
      %p65 = por %p63, %p64
      %s66 = ssub.s32 %s25, %s37
      %s67 = ssub.s32 %s26, %s33
      %s68 = sor.u32 %s66, %s67
      %p69 = scmp.eq.s32.totalorder %s68, 0
      %s71 = sadd.s32 %s70, 1
      %s72 = scalar_select %p69, %s70, %s71
      %p75 = pneg %p69
      %p76 = scmp.eq.s32.totalorder %s18, 3
      %p77 = por %p75, %p76
      %p78 = scmp.ne.s32.totalorder %s70, %s73
      %p79 = scmp.eq.s32.totalorder %s18, 0
      %p80 = por %p78, %p79
      %p81 = scmp.ne.s32.totalorder %s70, %s73
      %p82 = scmp.eq.s32.totalorder %s23, 3
      %p83 = por %p81, %p82
      %p84 = scmp.ne.s32.totalorder %s73, %s74
      %p85 = scmp.eq.s32.totalorder %s23, 0
      %p86 = por %p84, %p85
      %p87 = scmp.ne.s32.totalorder %s73, %s74
      %p88 = scmp.eq.s32.totalorder %s24, 3
      %p89 = por %p87, %p88
      %p91 = scmp.ne.s32.totalorder %s74, %s90
      %p92 = scmp.eq.s32.totalorder %s24, 0
      %p93 = por %p91, %p92
      %s94 = ssub.s32 %s25, %s37
      %s95 = ssub.s32 %s26, %s33
      %s96 = sor.u32 %s94, %s95
      %p97 = scmp.eq.s32.totalorder %s96, 0
      %s99 = sadd.s32 %s98, 1
      %s100 = scalar_select %p97, %s98, %s99
      %p103 = pneg %p97
      %p104 = scmp.eq.s32.totalorder %s18, 3
      %p105 = por %p103, %p104
      %p106 = scmp.ne.s32.totalorder %s98, %s101
      %p107 = scmp.eq.s32.totalorder %s18, 0
      %p108 = por %p106, %p107
      %p109 = scmp.ne.s32.totalorder %s98, %s101
      %p110 = scmp.eq.s32.totalorder %s23, 3
      %p111 = por %p109, %p110
      %p112 = scmp.ne.s32.totalorder %s101, %s102
      %p113 = scmp.eq.s32.totalorder %s23, 0
      %p114 = por %p112, %p113
      %p115 = scmp.ne.s32.totalorder %s101, %s102
      %p116 = scmp.eq.s32.totalorder %s24, 3
      %p117 = por %p115, %p116
      %p119 = scmp.ne.s32.totalorder %s102, %s118
      %p120 = scmp.eq.s32.totalorder %s24, 0
      %p121 = por %p119, %p120
      %s122 = ssub.s32 %s25, %s37
      %s123 = ssub.s32 %s26, %s33
      %s124 = sor.u32 %s122, %s123
      %p125 = scmp.eq.s32.totalorder %s124, 0
      %s127 = sadd.s32 %s126, 1
      %s128 = scalar_select %p125, %s126, %s127
      %p131 = pneg %p125
      %p132 = scmp.eq.s32.totalorder %s18, 3
      %p133 = por %p131, %p132
      %p134 = scmp.ne.s32.totalorder %s126, %s129
      %p135 = scmp.eq.s32.totalorder %s18, 0
      %p136 = por %p134, %p135
      %p137 = scmp.ne.s32.totalorder %s126, %s129
      %p138 = scmp.eq.s32.totalorder %s23, 3
      %p139 = por %p137, %p138
      %p140 = scmp.ne.s32.totalorder %s129, %s130
      %p141 = scmp.eq.s32.totalorder %s23, 0
      %p142 = por %p140, %p141
      %p143 = scmp.ne.s32.totalorder %s129, %s130
      %p144 = scmp.eq.s32.totalorder %s24, 3
      %p145 = por %p143, %p144
      %p147 = scmp.ne.s32.totalorder %s130, %s146
      %p148 = scmp.eq.s32.totalorder %s24, 0
      %p149 = por %p147, %p148
      %s151 = sadd.s32 %s150, 1
      %p154 = scmp.eq.s32.totalorder %s18, 3
      %p155 = scmp.ne.s32.totalorder %s150, %s152
      %p156 = scmp.eq.s32.totalorder %s18, 0
      %p157 = por %p155, %p156
      %p158 = scmp.ne.s32.totalorder %s150, %s152
      %p159 = scmp.eq.s32.totalorder %s23, 3
      %p160 = por %p158, %p159
      %p161 = scmp.ne.s32.totalorder %s152, %s153
      %p162 = scmp.eq.s32.totalorder %s23, 0
      %p163 = por %p161, %p162
      %p164 = scmp.ne.s32.totalorder %s152, %s153
      %p165 = scmp.eq.s32.totalorder %s24, 3
      %p166 = por %p164, %p165
      %p168 = scmp.ne.s32.totalorder %s153, %s167
      %p169 = scmp.eq.s32.totalorder %s24, 0
      %p170 = por %p168, %p169
      %s172 = sadd.s32 %s171, 1
      %p175 = scmp.eq.s32.totalorder %s18, 3
      %p176 = scmp.ne.s32.totalorder %s171, %s173
      %p177 = scmp.eq.s32.totalorder %s18, 0
      %p178 = por %p176, %p177
      %p179 = scmp.ne.s32.totalorder %s171, %s173
      %p180 = scmp.eq.s32.totalorder %s23, 3
      %p181 = por %p179, %p180
      %p182 = scmp.ne.s32.totalorder %s173, %s174
      %p183 = scmp.eq.s32.totalorder %s23, 0
      %p184 = por %p182, %p183
      %p185 = scmp.ne.s32.totalorder %s173, %s174
      %p186 = scmp.eq.s32.totalorder %s24, 3
      %p187 = por %p185, %p186
      %p189 = scmp.ne.s32.totalorder %s174, %s188
      %p190 = scmp.eq.s32.totalorder %s24, 0
      %p191 = por %p189, %p190
      %s193 = sadd.s32 %s192, 1
      %p196 = scmp.eq.s32.totalorder %s18, 3
      %p197 = scmp.ne.s32.totalorder %s192, %s194
      %p198 = scmp.eq.s32.totalorder %s18, 0
      %p199 = por %p197, %p198
      %p200 = scmp.ne.s32.totalorder %s192, %s194
      %p201 = scmp.eq.s32.totalorder %s23, 3
      %p202 = por %p200, %p201
      %p203 = scmp.ne.s32.totalorder %s194, %s195
      %p204 = scmp.eq.s32.totalorder %s23, 0
      %p205 = por %p203, %p204
      %p206 = scmp.ne.s32.totalorder %s194, %s195
      %p207 = scmp.eq.s32.totalorder %s24, 3
      %p208 = por %p206, %p207
      %p210 = scmp.ne.s32.totalorder %s195, %s209
      %p211 = scmp.eq.s32.totalorder %s24, 0
      %p212 = por %p210, %p211
      %s214 = sadd.s32 %s213, 1
      %p217 = scmp.eq.s32.totalorder %s18, 3
      %p218 = scmp.ne.s32.totalorder %s213, %s215
      %p219 = scmp.eq.s32.totalorder %s18, 0
      %p220 = por %p218, %p219
      %p221 = scmp.ne.s32.totalorder %s213, %s215
      %p222 = scmp.eq.s32.totalorder %s23, 3
      %p223 = por %p221, %p222
      %p224 = scmp.ne.s32.totalorder %s215, %s216
      %p225 = scmp.eq.s32.totalorder %s23, 0
      %p226 = por %p224, %p225
      %p227 = scmp.ne.s32.totalorder %s215, %s216
      %p228 = scmp.eq.s32.totalorder %s24, 3
      %p229 = por %p227, %p228
      %p231 = scmp.ne.s32.totalorder %s216, %s230
      %p232 = scmp.eq.s32.totalorder %s24, 0
      %p233 = por %p231, %p232
      %s235 = sadd.s32 %s234, 1
      %p238 = scmp.eq.s32.totalorder %s18, 3
      %p239 = scmp.ne.s32.totalorder %s234, %s236
      %p240 = scmp.eq.s32.totalorder %s18, 0
      %p241 = por %p239, %p240
      %p242 = scmp.ne.s32.totalorder %s234, %s236
      %p243 = scmp.eq.s32.totalorder %s23, 3
      %p244 = por %p242, %p243
      %p245 = scmp.ne.s32.totalorder %s236, %s237
      %p246 = scmp.eq.s32.totalorder %s23, 0
      %p247 = por %p245, %p246
      %p248 = scmp.ne.s32.totalorder %s236, %s237
      %p249 = scmp.eq.s32.totalorder %s24, 3
      %p250 = por %p248, %p249
      %p252 = scmp.ne.s32.totalorder %s237, %s251
      %p253 = scmp.eq.s32.totalorder %s24, 0
      %p254 = por %p252, %p253
      %s256 = sadd.s32 %s255, 1
      %p259 = scmp.eq.s32.totalorder %s18, 3
      %p260 = scmp.ne.s32.totalorder %s255, %s257
      %p261 = scmp.eq.s32.totalorder %s18, 0
      %p262 = por %p260, %p261
      %p263 = scmp.ne.s32.totalorder %s255, %s257
      %p264 = scmp.eq.s32.totalorder %s23, 3
      %p265 = por %p263, %p264
      %p266 = scmp.ne.s32.totalorder %s257, %s258
      %p267 = scmp.eq.s32.totalorder %s23, 0
      %p268 = por %p266, %p267
      %p269 = scmp.ne.s32.totalorder %s257, %s258
      %p270 = scmp.eq.s32.totalorder %s24, 3
      %p271 = por %p269, %p270
      %p273 = scmp.ne.s32.totalorder %s258, %s272
      %p274 = scmp.eq.s32.totalorder %s24, 0
      %p275 = por %p273, %p274
      %s277 = sadd.s32 %s276, 1
      %p280 = scmp.eq.s32.totalorder %s18, 3
      %p281 = scmp.ne.s32.totalorder %s276, %s278
      %p282 = scmp.eq.s32.totalorder %s18, 0
      %p283 = por %p281, %p282
      %p284 = scmp.ne.s32.totalorder %s276, %s278
      %p285 = scmp.eq.s32.totalorder %s23, 3
      %p286 = por %p284, %p285
      %p287 = scmp.ne.s32.totalorder %s278, %s279
      %p288 = scmp.eq.s32.totalorder %s23, 0
      %p289 = por %p287, %p288
      %p290 = scmp.ne.s32.totalorder %s278, %s279
      %p291 = scmp.eq.s32.totalorder %s24, 3
      %p292 = por %p290, %p291
      %p294 = scmp.ne.s32.totalorder %s279, %s293
      %p295 = scmp.eq.s32.totalorder %s24, 0
      %p296 = por %p294, %p295
      %s297 = ssub.s32 %s25, %s37
      %s298 = ssub.s32 %s26, %s33
      %s299 = sor.u32 %s297, %s298
      %p300 = scmp.eq.s32.totalorder %s299, 0
      %s302 = sadd.s32 %s301, 1
      %s303 = scalar_select %p300, %s301, %s302
      %p306 = pneg %p300
      %p307 = scmp.eq.s32.totalorder %s18, 3
      %p308 = por %p306, %p307
      %p309 = scmp.ne.s32.totalorder %s301, %s304
      %p310 = scmp.eq.s32.totalorder %s18, 0
      %p311 = por %p309, %p310
      %p312 = scmp.ne.s32.totalorder %s301, %s304
      %p313 = scmp.eq.s32.totalorder %s23, 3
      %p314 = por %p312, %p313
      %p315 = scmp.ne.s32.totalorder %s304, %s305
      %p316 = scmp.eq.s32.totalorder %s23, 0
      %p317 = por %p315, %p316
      %p318 = scmp.ne.s32.totalorder %s304, %s305
      %p319 = scmp.eq.s32.totalorder %s24, 3
      %p320 = por %p318, %p319
      %p322 = scmp.ne.s32.totalorder %s305, %s321
      %p323 = scmp.eq.s32.totalorder %s24, 0
      %p324 = por %p322, %p323
      %s325 = ssub.s32 %s25, %s37
      %s326 = ssub.s32 %s26, %s33
      %s327 = sor.u32 %s325, %s326
      %p328 = scmp.eq.s32.totalorder %s327, 0
      %s330 = sadd.s32 %s329, 1
      %s331 = scalar_select %p328, %s329, %s330
      %p334 = pneg %p328
      %p335 = scmp.eq.s32.totalorder %s18, 3
      %p336 = por %p334, %p335
      %p337 = scmp.ne.s32.totalorder %s329, %s332
      %p338 = scmp.eq.s32.totalorder %s18, 0
      %p339 = por %p337, %p338
      %p340 = scmp.ne.s32.totalorder %s329, %s332
      %p341 = scmp.eq.s32.totalorder %s23, 3
      %p342 = por %p340, %p341
      %p343 = scmp.ne.s32.totalorder %s332, %s333
      %p344 = scmp.eq.s32.totalorder %s23, 0
      %p345 = por %p343, %p344
      %p346 = scmp.ne.s32.totalorder %s332, %s333
      %p347 = scmp.eq.s32.totalorder %s24, 3
      %p348 = por %p346, %p347
      %p350 = scmp.ne.s32.totalorder %s333, %s349
      %p351 = scmp.eq.s32.totalorder %s24, 0
      %p352 = por %p350, %p351
      %p353 = scmp.le.s32.totalorder 1, %s18
      %p354 = scmp.lt.s32.totalorder %s18, 5
      %p355 = pnand %p353, %p354
      %p356 = pneg %p355
      // Predicated region
      $region9: #{unet_up2_forward.3} parent=5 // pred_check
        _
      $region10: #{unet_up2_forward.3} parent=5 // pred_check_branch
        %358 = sbr.rel (%p355) target = $region12
      $region11: #{unet_up2_forward.3} parent=5 // pred_region
        %s359 = ssub.s32 %s18, 1
        // Predicated region
        $region13: #{unet_up2_forward.3} parent=11 // pred_check
          %p360 = pneg %p163
        $region14: #{unet_up2_forward.3} parent=11 // pred_check_branch
          %362 = sbr.rel (%p360) target = $region16
        $region15: #{unet_up2_forward.3} parent=11 // pred_region
          _
        $region16: #{unet_up2_forward.3} parent=11 // pred_fallthru
          _
        // Predicated region
        $region17: #{unet_up2_forward.3} parent=11 // pred_check
          %p363 = pneg %p184
        $region18: #{unet_up2_forward.3} parent=11 // pred_check_branch
          %365 = sbr.rel (%p363) target = $region20
        $region19: #{unet_up2_forward.3} parent=11 // pred_region
          _
        $region20: #{unet_up2_forward.3} parent=11 // pred_fallthru
          _
        // Predicated region
        $region21: #{unet_up2_forward.3} parent=11 // pred_check
          %p366 = pneg %p205
        $region22: #{unet_up2_forward.3} parent=11 // pred_check_branch
          %368 = sbr.rel (%p366) target = $region24
        $region23: #{unet_up2_forward.3} parent=11 // pred_region
          _
        $region24: #{unet_up2_forward.3} parent=11 // pred_fallthru
          _
        // Predicated region
        $region25: #{unet_up2_forward.3} parent=11 // pred_check
          %p369 = pneg %p226
        $region26: #{unet_up2_forward.3} parent=11 // pred_check_branch
          %371 = sbr.rel (%p369) target = $region28
        $region27: #{unet_up2_forward.3} parent=11 // pred_region
          _
        $region28: #{unet_up2_forward.3} parent=11 // pred_fallthru
          _
        // Predicated region
        $region29: #{unet_up2_forward.3} parent=11 // pred_check
          %p372 = pneg %p247
        $region30: #{unet_up2_forward.3} parent=11 // pred_check_branch
          %374 = sbr.rel (%p372) target = $region32
        $region31: #{unet_up2_forward.3} parent=11 // pred_region
          _
        $region32: #{unet_up2_forward.3} parent=11 // pred_fallthru
          _
        // Predicated region
        $region33: #{unet_up2_forward.3} parent=11 // pred_check
          %p375 = pneg %p268
        $region34: #{unet_up2_forward.3} parent=11 // pred_check_branch
          %377 = sbr.rel (%p375) target = $region36
        $region35: #{unet_up2_forward.3} parent=11 // pred_region
          _
        $region36: #{unet_up2_forward.3} parent=11 // pred_fallthru
          _
        // Predicated region
        $region37: #{unet_up2_forward.3} parent=11 // pred_check
          %p378 = pneg %p289
        $region38: #{unet_up2_forward.3} parent=11 // pred_check_branch
          %380 = sbr.rel (%p378) target = $region40
        $region39: #{unet_up2_forward.3} parent=11 // pred_region
          _
        $region40: #{unet_up2_forward.3} parent=11 // pred_fallthru
          _
      $region12: #{unet_up2_forward.3} parent=5 // pred_fallthru
        _
      %p381 = scmp.lt.s32.totalorder %s18, 4
      // Predicated region
      $region41: #{unet_up2_forward.3} parent=5 // pred_check
        %p382 = pneg %p381
      $region42: #{unet_up2_forward.3} parent=5 // pred_check_branch
        %384 = sbr.rel (%p382) target = $region44
      $region43: #{unet_up2_forward.3} parent=5 // pred_region
        // Predicated region
        $region45: #{unet_up2_forward.3} parent=43 // pred_check
          %p385 = pneg %p52
        $region46: #{unet_up2_forward.3} parent=43 // pred_check_branch
          %387 = sbr.rel (%p385) target = $region48
        $region47: #{unet_up2_forward.3} parent=43 // pred_region
          %s388 = sand.u32 %s42, 1
          %s389 = sand.u32 %s42, 1
          %s390 = smul.addr %s389, 100
          %s391 = scalar_lea.vmem [#allocation2], %s390
          %s392 = smul.addr %s25, 50
          %s393 = sadd.s32 %s26, %s392
          %s394 = smul.addr %s393, 4
          %s395 = scalar_lea.vmem %s0, %s394
          // Predicated region
          $region49: #{unet_up2_forward.3} parent=47 // pred_check
            _
          $region50: #{unet_up2_forward.3} parent=47 // pred_check_branch
            %397 = sbr.rel (0) target = $region52
          $region51: #{unet_up2_forward.3} parent=47 // pred_region
            // Predicated region
            $region53: #{unet_up2_forward.3} parent=51 // pred_check
              _
            $region54: #{unet_up2_forward.3} parent=51 // pred_check_branch
              %399 = sbr.rel target = $region56
            $region55: #{unet_up2_forward.3} parent=51 // pred_region
              // Predicated region
              $region68: #{unet_up2_forward.3} parent=55 // pred_check
                _
              $region69: #{unet_up2_forward.3} parent=55 // pred_check_branch
                %462 = sbr.rel (0) target = $region71
              $region70: #{unet_up2_forward.3} parent=55 // pred_region
                loop: start=0, step=1, limit=1
                $region72: #{unet_up2_forward.3} parent=70 // loop_pre_header
                  _
                $region73: #{unet_up2_forward.3} parent=70 // loop_header
                  %s464 = sphi 0, %s468
                  %p465 = scmp.ge.s32.totalorder %s464, 1
                  %s469 = sphi %s395, %s395
                  %s470 = sphi %s391, %s391
                $region74: #{unet_up2_forward.3} parent=70 // loop_header_branch
                  %467 = sbr.rel (%p465) target = $region78
                $region75: #{unet_up2_forward.3} parent=70 // loop_body
                  _
                $region76: #{unet_up2_forward.3} parent=70 // loop_footer
                  %s468 = sadd.s32 1, %s464
                $region77: #{unet_up2_forward.3} parent=70 // loop_footer_branch
                  %463 = sbr.rel target = $region73
                $region78: #{unet_up2_forward.3} parent=70 // loop_exit
                  _
                loop: start=0, step=1, limit=1
                $region79: #{unet_up2_forward.3} parent=70 // loop_pre_header
                  _
                $region80: #{unet_up2_forward.3} parent=70 // loop_header
                  %s473 = sphi 0, %s477
                  %p474 = scmp.ge.s32.totalorder %s473, 1
                  %s478 = sphi %s395, %s395
                  %s479 = sphi %s391, %s391
                $region81: #{unet_up2_forward.3} parent=70 // loop_header_branch
                  %476 = sbr.rel (%p474) target = $region85
                $region82: #{unet_up2_forward.3} parent=70 // loop_body
                  %v480 = vld [vmem:[%s478] sm:$0xf]
                  %481 = vst [vmem:[%s479] sm:$0xf] %v480
                  %v482 = vld [vmem:[%s478 + $0x8] sm:$0xf]
                  %483 = vst [vmem:[%s479 + $0x4] sm:$0xf] %v482
                  %v484 = vld [vmem:[%s478 + $0x10] sm:$0xf]
                  %485 = vst [vmem:[%s479 + $0x8] sm:$0xf] %v484
                  %v486 = vld [vmem:[%s478 + $0x18] sm:$0xf]
                  %487 = vst [vmem:[%s479 + $0xc] sm:$0xf] %v486
                  %v488 = vld [vmem:[%s478 + $0x20] sm:$0xf]
                  %489 = vst [vmem:[%s479 + $0x10] sm:$0xf] %v488
                  %v490 = vld [vmem:[%s478 + $0x28] sm:$0xf]
                  %491 = vst [vmem:[%s479 + $0x14] sm:$0xf] %v490
                  %v492 = vld [vmem:[%s478 + $0x30] sm:$0xf]
                  %493 = vst [vmem:[%s479 + $0x18] sm:$0xf] %v492
                  %v494 = vld [vmem:[%s478 + $0x38] sm:$0xf]
                  %495 = vst [vmem:[%s479 + $0x1c] sm:$0xf] %v494
                  %v496 = vld [vmem:[%s478 + $0x40] sm:$0xf]
                  %497 = vst [vmem:[%s479 + $0x20] sm:$0xf] %v496
                  %v498 = vld [vmem:[%s478 + $0x48] sm:$0xf]
                  %499 = vst [vmem:[%s479 + $0x24] sm:$0xf] %v498
                  %v500 = vld [vmem:[%s478 + $0x50] sm:$0xf]
                  %501 = vst [vmem:[%s479 + $0x28] sm:$0xf] %v500
                  %v502 = vld [vmem:[%s478 + $0x58] sm:$0xf]
                  %503 = vst [vmem:[%s479 + $0x2c] sm:$0xf] %v502
                  %v504 = vld [vmem:[%s478 + $0x60] sm:$0xf]
                  %505 = vst [vmem:[%s479 + $0x30] sm:$0xf] %v504
                  %v506 = vld [vmem:[%s478 + $0x68] sm:$0xf]
                  %507 = vst [vmem:[%s479 + $0x34] sm:$0xf] %v506
                  %v508 = vld [vmem:[%s478 + $0x70] sm:$0xf]
                  %509 = vst [vmem:[%s479 + $0x38] sm:$0xf] %v508
                  %v510 = vld [vmem:[%s478 + $0x78] sm:$0xf]
                  %511 = vst [vmem:[%s479 + $0x3c] sm:$0xf] %v510
                  %v512 = vld [vmem:[%s478 + $0x80] sm:$0xf]
                  %513 = vst [vmem:[%s479 + $0x40] sm:$0xf] %v512
                  %v514 = vld [vmem:[%s478 + $0x88] sm:$0xf]
                  %515 = vst [vmem:[%s479 + $0x44] sm:$0xf] %v514
                  %v516 = vld [vmem:[%s478 + $0x90] sm:$0xf]
                  %517 = vst [vmem:[%s479 + $0x48] sm:$0xf] %v516
                  %v518 = vld [vmem:[%s478 + $0x98] sm:$0xf]
                  %519 = vst [vmem:[%s479 + $0x4c] sm:$0xf] %v518
                  %v520 = vld [vmem:[%s478 + $0xa0] sm:$0xf]
                  %521 = vst [vmem:[%s479 + $0x50] sm:$0xf] %v520
                  %v522 = vld [vmem:[%s478 + $0xa8] sm:$0xf]
                  %523 = vst [vmem:[%s479 + $0x54] sm:$0xf] %v522
                  %v524 = vld [vmem:[%s478 + $0xb0] sm:$0xf]
                  %525 = vst [vmem:[%s479 + $0x58] sm:$0xf] %v524
                  %v526 = vld [vmem:[%s478 + $0xb8] sm:$0xf]
                  %527 = vst [vmem:[%s479 + $0x5c] sm:$0xf] %v526
                  %v528 = vld [vmem:[%s478 + $0xc0] sm:$0xf]
                  %529 = vst [vmem:[%s479 + $0x60] sm:$0xf] %v528
                $region83: #{unet_up2_forward.3} parent=70 // loop_footer
                  %s477 = sadd.s32 1, %s473
                $region84: #{unet_up2_forward.3} parent=70 // loop_footer_branch
                  %472 = sbr.rel target = $region80
                $region85: #{unet_up2_forward.3} parent=70 // loop_exit
                  _
              $region71: #{unet_up2_forward.3} parent=55 // pred_fallthru
                _
            $region56: #{unet_up2_forward.3} parent=51 // pred_fallthru
              _
            // Predicated region
            $region57: #{unet_up2_forward.3} parent=51 // pred_check
              _
            $region58: #{unet_up2_forward.3} parent=51 // pred_check_branch
              %401 = sbr.rel (0) target = $region60
            $region59: #{unet_up2_forward.3} parent=51 // pred_region
              loop: start=0, step=1, limit=1
              $region61: #{unet_up2_forward.3} parent=59 // loop_pre_header
                _
              $region62: #{unet_up2_forward.3} parent=59 // loop_header
                %s404 = sphi 0, %s408
                %p405 = scmp.ge.s32.totalorder %s404, 1
                %s409 = sphi %s395, %s395
                %s410 = sphi %s391, %s391
              $region63: #{unet_up2_forward.3} parent=59 // loop_header_branch
                %407 = sbr.rel (%p405) target = $region67
              $region64: #{unet_up2_forward.3} parent=59 // loop_body
                %v411 = vld [vmem:[%s409] sm:$0xf]
                %412 = vst [vmem:[%s410] sm:$0xf] %v411
                %v413 = vld [vmem:[%s409 + $0x8] sm:$0xf]
                %414 = vst [vmem:[%s410 + $0x4] sm:$0xf] %v413
                %v415 = vld [vmem:[%s409 + $0x10] sm:$0xf]
                %416 = vst [vmem:[%s410 + $0x8] sm:$0xf] %v415
                %v417 = vld [vmem:[%s409 + $0x18] sm:$0xf]
                %418 = vst [vmem:[%s410 + $0xc] sm:$0xf] %v417
                %v419 = vld [vmem:[%s409 + $0x20] sm:$0xf]
                %420 = vst [vmem:[%s410 + $0x10] sm:$0xf] %v419
                %v421 = vld [vmem:[%s409 + $0x28] sm:$0xf]
                %422 = vst [vmem:[%s410 + $0x14] sm:$0xf] %v421
                %v423 = vld [vmem:[%s409 + $0x30] sm:$0xf]
                %424 = vst [vmem:[%s410 + $0x18] sm:$0xf] %v423
                %v425 = vld [vmem:[%s409 + $0x38] sm:$0xf]
                %426 = vst [vmem:[%s410 + $0x1c] sm:$0xf] %v425
                %v427 = vld [vmem:[%s409 + $0x40] sm:$0xf]
                %428 = vst [vmem:[%s410 + $0x20] sm:$0xf] %v427
                %v429 = vld [vmem:[%s409 + $0x48] sm:$0xf]
                %430 = vst [vmem:[%s410 + $0x24] sm:$0xf] %v429
                %v431 = vld [vmem:[%s409 + $0x50] sm:$0xf]
                %432 = vst [vmem:[%s410 + $0x28] sm:$0xf] %v431
                %v433 = vld [vmem:[%s409 + $0x58] sm:$0xf]
                %434 = vst [vmem:[%s410 + $0x2c] sm:$0xf] %v433
                %v435 = vld [vmem:[%s409 + $0x60] sm:$0xf]
                %436 = vst [vmem:[%s410 + $0x30] sm:$0xf] %v435
                %v437 = vld [vmem:[%s409 + $0x68] sm:$0xf]
                %438 = vst [vmem:[%s410 + $0x34] sm:$0xf] %v437
                %v439 = vld [vmem:[%s409 + $0x70] sm:$0xf]
                %440 = vst [vmem:[%s410 + $0x38] sm:$0xf] %v439
                %v441 = vld [vmem:[%s409 + $0x78] sm:$0xf]
                %442 = vst [vmem:[%s410 + $0x3c] sm:$0xf] %v441
                %v443 = vld [vmem:[%s409 + $0x80] sm:$0xf]
                %444 = vst [vmem:[%s410 + $0x40] sm:$0xf] %v443
                %v445 = vld [vmem:[%s409 + $0x88] sm:$0xf]
                %446 = vst [vmem:[%s410 + $0x44] sm:$0xf] %v445
                %v447 = vld [vmem:[%s409 + $0x90] sm:$0xf]
                %448 = vst [vmem:[%s410 + $0x48] sm:$0xf] %v447
                %v449 = vld [vmem:[%s409 + $0x98] sm:$0xf]
                %450 = vst [vmem:[%s410 + $0x4c] sm:$0xf] %v449
                %v451 = vld [vmem:[%s409 + $0xa0] sm:$0xf]
                %452 = vst [vmem:[%s410 + $0x50] sm:$0xf] %v451
                %v453 = vld [vmem:[%s409 + $0xa8] sm:$0xf]
                %454 = vst [vmem:[%s410 + $0x54] sm:$0xf] %v453
                %v455 = vld [vmem:[%s409 + $0xb0] sm:$0xf]
                %456 = vst [vmem:[%s410 + $0x58] sm:$0xf] %v455
                %v457 = vld [vmem:[%s409 + $0xb8] sm:$0xf]
                %458 = vst [vmem:[%s410 + $0x5c] sm:$0xf] %v457
                %v459 = vld [vmem:[%s409 + $0xc0] sm:$0xf]
                %460 = vst [vmem:[%s410 + $0x60] sm:$0xf] %v459
              $region65: #{unet_up2_forward.3} parent=59 // loop_footer
                %s408 = sadd.s32 1, %s404
              $region66: #{unet_up2_forward.3} parent=59 // loop_footer_branch
                %403 = sbr.rel target = $region62
              $region67: #{unet_up2_forward.3} parent=59 // loop_exit
                _
            $region60: #{unet_up2_forward.3} parent=51 // pred_fallthru
              _
          $region52: #{unet_up2_forward.3} parent=47 // pred_fallthru
            _
          %530 = vnop
        $region48: #{unet_up2_forward.3} parent=43 // pred_fallthru
          _
        // Predicated region
        $region86: #{unet_up2_forward.3} parent=43 // pred_check
          %p531 = pneg %p80
        $region87: #{unet_up2_forward.3} parent=43 // pred_check_branch
          %533 = sbr.rel (%p531) target = $region89
        $region88: #{unet_up2_forward.3} parent=43 // pred_region
          %s534 = sand.u32 %s70, 1
          %s535 = sand.u32 %s70, 1
          %s536 = smul.addr %s535, 164
          %s537 = scalar_lea.vmem [#allocation3], %s536
          %s538 = smul.addr %s25, 82
          %s539 = sadd.s32 %s26, %s538
          %s540 = smul.addr %s539, 4
          %s541 = scalar_lea.vmem %s1, %s540
          // Predicated region
          $region90: #{unet_up2_forward.3} parent=88 // pred_check
            _
          $region91: #{unet_up2_forward.3} parent=88 // pred_check_branch
            %543 = sbr.rel (0) target = $region93
          $region92: #{unet_up2_forward.3} parent=88 // pred_region
            // Predicated region
            $region94: #{unet_up2_forward.3} parent=92 // pred_check
              _
            $region95: #{unet_up2_forward.3} parent=92 // pred_check_branch
              %545 = sbr.rel target = $region97
            $region96: #{unet_up2_forward.3} parent=92 // pred_region
              // Predicated region
              $region109: #{unet_up2_forward.3} parent=96 // pred_check
                _
              $region110: #{unet_up2_forward.3} parent=96 // pred_check_branch
                %640 = sbr.rel (0) target = $region112
              $region111: #{unet_up2_forward.3} parent=96 // pred_region
                loop: start=0, step=1, limit=1
                $region113: #{unet_up2_forward.3} parent=111 // loop_pre_header
                  _
                $region114: #{unet_up2_forward.3} parent=111 // loop_header
                  %s642 = sphi 0, %s646
                  %p643 = scmp.ge.s32.totalorder %s642, 1
                  %s647 = sphi %s541, %s541
                  %s648 = sphi %s537, %s537
                $region115: #{unet_up2_forward.3} parent=111 // loop_header_branch
                  %645 = sbr.rel (%p643) target = $region119
                $region116: #{unet_up2_forward.3} parent=111 // loop_body
                  _
                $region117: #{unet_up2_forward.3} parent=111 // loop_footer
                  %s646 = sadd.s32 1, %s642
                $region118: #{unet_up2_forward.3} parent=111 // loop_footer_branch
                  %641 = sbr.rel target = $region114
                $region119: #{unet_up2_forward.3} parent=111 // loop_exit
                  _
                loop: start=0, step=1, limit=1
                $region120: #{unet_up2_forward.3} parent=111 // loop_pre_header
                  _
                $region121: #{unet_up2_forward.3} parent=111 // loop_header
                  %s651 = sphi 0, %s655
                  %p652 = scmp.ge.s32.totalorder %s651, 1
                  %s656 = sphi %s541, %s541
                  %s657 = sphi %s537, %s537
                $region122: #{unet_up2_forward.3} parent=111 // loop_header_branch
                  %654 = sbr.rel (%p652) target = $region126
                $region123: #{unet_up2_forward.3} parent=111 // loop_body
                  %v658 = vld [vmem:[%s656] sm:$0xf]
                  %659 = vst [vmem:[%s657] sm:$0xf] %v658
                  %v660 = vld [vmem:[%s656 + $0x8] sm:$0xf]
                  %661 = vst [vmem:[%s657 + $0x4] sm:$0xf] %v660
                  %v662 = vld [vmem:[%s656 + $0x10] sm:$0xf]
                  %663 = vst [vmem:[%s657 + $0x8] sm:$0xf] %v662
                  %v664 = vld [vmem:[%s656 + $0x18] sm:$0xf]
                  %665 = vst [vmem:[%s657 + $0xc] sm:$0xf] %v664
                  %v666 = vld [vmem:[%s656 + $0x20] sm:$0xf]
                  %667 = vst [vmem:[%s657 + $0x10] sm:$0xf] %v666
                  %v668 = vld [vmem:[%s656 + $0x28] sm:$0xf]
                  %669 = vst [vmem:[%s657 + $0x14] sm:$0xf] %v668
                  %v670 = vld [vmem:[%s656 + $0x30] sm:$0xf]
                  %671 = vst [vmem:[%s657 + $0x18] sm:$0xf] %v670
                  %v672 = vld [vmem:[%s656 + $0x38] sm:$0xf]
                  %673 = vst [vmem:[%s657 + $0x1c] sm:$0xf] %v672
                  %v674 = vld [vmem:[%s656 + $0x40] sm:$0xf]
                  %675 = vst [vmem:[%s657 + $0x20] sm:$0xf] %v674
                  %v676 = vld [vmem:[%s656 + $0x48] sm:$0xf]
                  %677 = vst [vmem:[%s657 + $0x24] sm:$0xf] %v676
                  %v678 = vld [vmem:[%s656 + $0x50] sm:$0xf]
                  %679 = vst [vmem:[%s657 + $0x28] sm:$0xf] %v678
                  %v680 = vld [vmem:[%s656 + $0x58] sm:$0xf]
                  %681 = vst [vmem:[%s657 + $0x2c] sm:$0xf] %v680
                  %v682 = vld [vmem:[%s656 + $0x60] sm:$0xf]
                  %683 = vst [vmem:[%s657 + $0x30] sm:$0xf] %v682
                  %v684 = vld [vmem:[%s656 + $0x68] sm:$0xf]
                  %685 = vst [vmem:[%s657 + $0x34] sm:$0xf] %v684
                  %v686 = vld [vmem:[%s656 + $0x70] sm:$0xf]
                  %687 = vst [vmem:[%s657 + $0x38] sm:$0xf] %v686
                  %v688 = vld [vmem:[%s656 + $0x78] sm:$0xf]
                  %689 = vst [vmem:[%s657 + $0x3c] sm:$0xf] %v688
                  %v690 = vld [vmem:[%s656 + $0x80] sm:$0xf]
                  %691 = vst [vmem:[%s657 + $0x40] sm:$0xf] %v690
                  %v692 = vld [vmem:[%s656 + $0x88] sm:$0xf]
                  %693 = vst [vmem:[%s657 + $0x44] sm:$0xf] %v692
                  %v694 = vld [vmem:[%s656 + $0x90] sm:$0xf]
                  %695 = vst [vmem:[%s657 + $0x48] sm:$0xf] %v694
                  %v696 = vld [vmem:[%s656 + $0x98] sm:$0xf]
                  %697 = vst [vmem:[%s657 + $0x4c] sm:$0xf] %v696
                  %v698 = vld [vmem:[%s656 + $0xa0] sm:$0xf]
                  %699 = vst [vmem:[%s657 + $0x50] sm:$0xf] %v698
                  %v700 = vld [vmem:[%s656 + $0xa8] sm:$0xf]
                  %701 = vst [vmem:[%s657 + $0x54] sm:$0xf] %v700
                  %v702 = vld [vmem:[%s656 + $0xb0] sm:$0xf]
                  %703 = vst [vmem:[%s657 + $0x58] sm:$0xf] %v702
                  %v704 = vld [vmem:[%s656 + $0xb8] sm:$0xf]
                  %705 = vst [vmem:[%s657 + $0x5c] sm:$0xf] %v704
                  %v706 = vld [vmem:[%s656 + $0xc0] sm:$0xf]
                  %707 = vst [vmem:[%s657 + $0x60] sm:$0xf] %v706
                  %v708 = vld [vmem:[%s656 + $0xc8] sm:$0xf]
                  %709 = vst [vmem:[%s657 + $0x64] sm:$0xf] %v708
                  %v710 = vld [vmem:[%s656 + $0xd0] sm:$0xf]
                  %711 = vst [vmem:[%s657 + $0x68] sm:$0xf] %v710
                  %v712 = vld [vmem:[%s656 + $0xd8] sm:$0xf]
                  %713 = vst [vmem:[%s657 + $0x6c] sm:$0xf] %v712
                  %v714 = vld [vmem:[%s656 + $0xe0] sm:$0xf]
                  %715 = vst [vmem:[%s657 + $0x70] sm:$0xf] %v714
                  %v716 = vld [vmem:[%s656 + $0xe8] sm:$0xf]
                  %717 = vst [vmem:[%s657 + $0x74] sm:$0xf] %v716
                  %v718 = vld [vmem:[%s656 + $0xf0] sm:$0xf]
                  %719 = vst [vmem:[%s657 + $0x78] sm:$0xf] %v718
                  %v720 = vld [vmem:[%s656 + $0xf8] sm:$0xf]
                  %721 = vst [vmem:[%s657 + $0x7c] sm:$0xf] %v720
                  %v722 = vld [vmem:[%s656 + $0x100] sm:$0xf]
                  %723 = vst [vmem:[%s657 + $0x80] sm:$0xf] %v722
                  %v724 = vld [vmem:[%s656 + $0x108] sm:$0xf]
                  %725 = vst [vmem:[%s657 + $0x84] sm:$0xf] %v724
                  %v726 = vld [vmem:[%s656 + $0x110] sm:$0xf]
                  %727 = vst [vmem:[%s657 + $0x88] sm:$0xf] %v726
                  %v728 = vld [vmem:[%s656 + $0x118] sm:$0xf]
                  %729 = vst [vmem:[%s657 + $0x8c] sm:$0xf] %v728
                  %v730 = vld [vmem:[%s656 + $0x120] sm:$0xf]
                  %731 = vst [vmem:[%s657 + $0x90] sm:$0xf] %v730
                  %v732 = vld [vmem:[%s656 + $0x128] sm:$0xf]
                  %733 = vst [vmem:[%s657 + $0x94] sm:$0xf] %v732
                  %v734 = vld [vmem:[%s656 + $0x130] sm:$0xf]
                  %735 = vst [vmem:[%s657 + $0x98] sm:$0xf] %v734
                  %v736 = vld [vmem:[%s656 + $0x138] sm:$0xf]
                  %737 = vst [vmem:[%s657 + $0x9c] sm:$0xf] %v736
                  %v738 = vld [vmem:[%s656 + $0x140] sm:$0xf]
                  %739 = vst [vmem:[%s657 + $0xa0] sm:$0xf] %v738
                $region124: #{unet_up2_forward.3} parent=111 // loop_footer
                  %s655 = sadd.s32 1, %s651
                $region125: #{unet_up2_forward.3} parent=111 // loop_footer_branch
                  %650 = sbr.rel target = $region121
                $region126: #{unet_up2_forward.3} parent=111 // loop_exit
                  _
              $region112: #{unet_up2_forward.3} parent=96 // pred_fallthru
                _
            $region97: #{unet_up2_forward.3} parent=92 // pred_fallthru
              _
            // Predicated region
            $region98: #{unet_up2_forward.3} parent=92 // pred_check
              _
            $region99: #{unet_up2_forward.3} parent=92 // pred_check_branch
              %547 = sbr.rel (0) target = $region101
            $region100: #{unet_up2_forward.3} parent=92 // pred_region
              loop: start=0, step=1, limit=1
              $region102: #{unet_up2_forward.3} parent=100 // loop_pre_header
                _
              $region103: #{unet_up2_forward.3} parent=100 // loop_header
                %s550 = sphi 0, %s554
                %p551 = scmp.ge.s32.totalorder %s550, 1
                %s555 = sphi %s541, %s541
                %s556 = sphi %s537, %s537
              $region104: #{unet_up2_forward.3} parent=100 // loop_header_branch
                %553 = sbr.rel (%p551) target = $region108
              $region105: #{unet_up2_forward.3} parent=100 // loop_body
                %v557 = vld [vmem:[%s555] sm:$0xf]
                %558 = vst [vmem:[%s556] sm:$0xf] %v557
                %v559 = vld [vmem:[%s555 + $0x8] sm:$0xf]
                %560 = vst [vmem:[%s556 + $0x4] sm:$0xf] %v559
                %v561 = vld [vmem:[%s555 + $0x10] sm:$0xf]
                %562 = vst [vmem:[%s556 + $0x8] sm:$0xf] %v561
                %v563 = vld [vmem:[%s555 + $0x18] sm:$0xf]
                %564 = vst [vmem:[%s556 + $0xc] sm:$0xf] %v563
                %v565 = vld [vmem:[%s555 + $0x20] sm:$0xf]
                %566 = vst [vmem:[%s556 + $0x10] sm:$0xf] %v565
                %v567 = vld [vmem:[%s555 + $0x28] sm:$0xf]
                %568 = vst [vmem:[%s556 + $0x14] sm:$0xf] %v567
                %v569 = vld [vmem:[%s555 + $0x30] sm:$0xf]
                %570 = vst [vmem:[%s556 + $0x18] sm:$0xf] %v569
                %v571 = vld [vmem:[%s555 + $0x38] sm:$0xf]
                %572 = vst [vmem:[%s556 + $0x1c] sm:$0xf] %v571
                %v573 = vld [vmem:[%s555 + $0x40] sm:$0xf]
                %574 = vst [vmem:[%s556 + $0x20] sm:$0xf] %v573
                %v575 = vld [vmem:[%s555 + $0x48] sm:$0xf]
                %576 = vst [vmem:[%s556 + $0x24] sm:$0xf] %v575
                %v577 = vld [vmem:[%s555 + $0x50] sm:$0xf]
                %578 = vst [vmem:[%s556 + $0x28] sm:$0xf] %v577
                %v579 = vld [vmem:[%s555 + $0x58] sm:$0xf]
                %580 = vst [vmem:[%s556 + $0x2c] sm:$0xf] %v579
                %v581 = vld [vmem:[%s555 + $0x60] sm:$0xf]
                %582 = vst [vmem:[%s556 + $0x30] sm:$0xf] %v581
                %v583 = vld [vmem:[%s555 + $0x68] sm:$0xf]
                %584 = vst [vmem:[%s556 + $0x34] sm:$0xf] %v583
                %v585 = vld [vmem:[%s555 + $0x70] sm:$0xf]
                %586 = vst [vmem:[%s556 + $0x38] sm:$0xf] %v585
                %v587 = vld [vmem:[%s555 + $0x78] sm:$0xf]
                %588 = vst [vmem:[%s556 + $0x3c] sm:$0xf] %v587
                %v589 = vld [vmem:[%s555 + $0x80] sm:$0xf]
                %590 = vst [vmem:[%s556 + $0x40] sm:$0xf] %v589
                %v591 = vld [vmem:[%s555 + $0x88] sm:$0xf]
                %592 = vst [vmem:[%s556 + $0x44] sm:$0xf] %v591
                %v593 = vld [vmem:[%s555 + $0x90] sm:$0xf]
                %594 = vst [vmem:[%s556 + $0x48] sm:$0xf] %v593
                %v595 = vld [vmem:[%s555 + $0x98] sm:$0xf]
                %596 = vst [vmem:[%s556 + $0x4c] sm:$0xf] %v595
                %v597 = vld [vmem:[%s555 + $0xa0] sm:$0xf]
                %598 = vst [vmem:[%s556 + $0x50] sm:$0xf] %v597
                %v599 = vld [vmem:[%s555 + $0xa8] sm:$0xf]
                %600 = vst [vmem:[%s556 + $0x54] sm:$0xf] %v599
                %v601 = vld [vmem:[%s555 + $0xb0] sm:$0xf]
                %602 = vst [vmem:[%s556 + $0x58] sm:$0xf] %v601
                %v603 = vld [vmem:[%s555 + $0xb8] sm:$0xf]
                %604 = vst [vmem:[%s556 + $0x5c] sm:$0xf] %v603
                %v605 = vld [vmem:[%s555 + $0xc0] sm:$0xf]
                %606 = vst [vmem:[%s556 + $0x60] sm:$0xf] %v605
                %v607 = vld [vmem:[%s555 + $0xc8] sm:$0xf]
                %608 = vst [vmem:[%s556 + $0x64] sm:$0xf] %v607
                %v609 = vld [vmem:[%s555 + $0xd0] sm:$0xf]
                %610 = vst [vmem:[%s556 + $0x68] sm:$0xf] %v609
                %v611 = vld [vmem:[%s555 + $0xd8] sm:$0xf]
                %612 = vst [vmem:[%s556 + $0x6c] sm:$0xf] %v611
                %v613 = vld [vmem:[%s555 + $0xe0] sm:$0xf]
                %614 = vst [vmem:[%s556 + $0x70] sm:$0xf] %v613
                %v615 = vld [vmem:[%s555 + $0xe8] sm:$0xf]
                %616 = vst [vmem:[%s556 + $0x74] sm:$0xf] %v615
                %v617 = vld [vmem:[%s555 + $0xf0] sm:$0xf]
                %618 = vst [vmem:[%s556 + $0x78] sm:$0xf] %v617
                %v619 = vld [vmem:[%s555 + $0xf8] sm:$0xf]
                %620 = vst [vmem:[%s556 + $0x7c] sm:$0xf] %v619
                %v621 = vld [vmem:[%s555 + $0x100] sm:$0xf]
                %622 = vst [vmem:[%s556 + $0x80] sm:$0xf] %v621
                %v623 = vld [vmem:[%s555 + $0x108] sm:$0xf]
                %624 = vst [vmem:[%s556 + $0x84] sm:$0xf] %v623
                %v625 = vld [vmem:[%s555 + $0x110] sm:$0xf]
                %626 = vst [vmem:[%s556 + $0x88] sm:$0xf] %v625
                %v627 = vld [vmem:[%s555 + $0x118] sm:$0xf]
                %628 = vst [vmem:[%s556 + $0x8c] sm:$0xf] %v627
                %v629 = vld [vmem:[%s555 + $0x120] sm:$0xf]
                %630 = vst [vmem:[%s556 + $0x90] sm:$0xf] %v629
                %v631 = vld [vmem:[%s555 + $0x128] sm:$0xf]
                %632 = vst [vmem:[%s556 + $0x94] sm:$0xf] %v631
                %v633 = vld [vmem:[%s555 + $0x130] sm:$0xf]
                %634 = vst [vmem:[%s556 + $0x98] sm:$0xf] %v633
                %v635 = vld [vmem:[%s555 + $0x138] sm:$0xf]
                %636 = vst [vmem:[%s556 + $0x9c] sm:$0xf] %v635
                %v637 = vld [vmem:[%s555 + $0x140] sm:$0xf]
                %638 = vst [vmem:[%s556 + $0xa0] sm:$0xf] %v637
              $region106: #{unet_up2_forward.3} parent=100 // loop_footer
                %s554 = sadd.s32 1, %s550
              $region107: #{unet_up2_forward.3} parent=100 // loop_footer_branch
                %549 = sbr.rel target = $region103
              $region108: #{unet_up2_forward.3} parent=100 // loop_exit
                _
            $region101: #{unet_up2_forward.3} parent=92 // pred_fallthru
              _
          $region93: #{unet_up2_forward.3} parent=88 // pred_fallthru
            _
          %740 = vnop
        $region89: #{unet_up2_forward.3} parent=43 // pred_fallthru
          _
        // Predicated region
        $region127: #{unet_up2_forward.3} parent=43 // pred_check
          %p741 = pneg %p108
        $region128: #{unet_up2_forward.3} parent=43 // pred_check_branch
          %743 = sbr.rel (%p741) target = $region130
        $region129: #{unet_up2_forward.3} parent=43 // pred_region
          %s744 = sand.u32 %s98, 1
          %s745 = sand.u32 %s98, 1
          %s746 = smul.addr %s745, 244
          %s747 = scalar_lea.vmem [#allocation4], %s746
          %s748 = smul.addr %s25, 122
          %s749 = sadd.s32 %s26, %s748
          %s750 = smul.addr %s749, 4
          %s751 = scalar_lea.vmem %s2, %s750
          // Predicated region
          $region131: #{unet_up2_forward.3} parent=129 // pred_check
            _
          $region132: #{unet_up2_forward.3} parent=129 // pred_check_branch
            %753 = sbr.rel (0) target = $region134
          $region133: #{unet_up2_forward.3} parent=129 // pred_region
            // Predicated region
            $region135: #{unet_up2_forward.3} parent=133 // pred_check
              _
            $region136: #{unet_up2_forward.3} parent=133 // pred_check_branch
              %755 = sbr.rel target = $region138
            $region137: #{unet_up2_forward.3} parent=133 // pred_region
              // Predicated region
              $region150: #{unet_up2_forward.3} parent=137 // pred_check
                _
              $region151: #{unet_up2_forward.3} parent=137 // pred_check_branch
                %890 = sbr.rel (0) target = $region153
              $region152: #{unet_up2_forward.3} parent=137 // pred_region
                loop: start=0, step=1, limit=1
                $region154: #{unet_up2_forward.3} parent=152 // loop_pre_header
                  _
                $region155: #{unet_up2_forward.3} parent=152 // loop_header
                  %s892 = sphi 0, %s896
                  %p893 = scmp.ge.s32.totalorder %s892, 1
                  %s897 = sphi %s751, %s751
                  %s898 = sphi %s747, %s747
                $region156: #{unet_up2_forward.3} parent=152 // loop_header_branch
                  %895 = sbr.rel (%p893) target = $region160
                $region157: #{unet_up2_forward.3} parent=152 // loop_body
                  _
                $region158: #{unet_up2_forward.3} parent=152 // loop_footer
                  %s896 = sadd.s32 1, %s892
                $region159: #{unet_up2_forward.3} parent=152 // loop_footer_branch
                  %891 = sbr.rel target = $region155
                $region160: #{unet_up2_forward.3} parent=152 // loop_exit
                  _
                loop: start=0, step=1, limit=1
                $region161: #{unet_up2_forward.3} parent=152 // loop_pre_header
                  _
                $region162: #{unet_up2_forward.3} parent=152 // loop_header
                  %s901 = sphi 0, %s905
                  %p902 = scmp.ge.s32.totalorder %s901, 1
                  %s906 = sphi %s751, %s751
                  %s907 = sphi %s747, %s747
                $region163: #{unet_up2_forward.3} parent=152 // loop_header_branch
                  %904 = sbr.rel (%p902) target = $region167
                $region164: #{unet_up2_forward.3} parent=152 // loop_body
                  %v908 = vld [vmem:[%s906] sm:$0xf]
                  %909 = vst [vmem:[%s907] sm:$0xf] %v908
                  %v910 = vld [vmem:[%s906 + $0x8] sm:$0xf]
                  %911 = vst [vmem:[%s907 + $0x4] sm:$0xf] %v910
                  %v912 = vld [vmem:[%s906 + $0x10] sm:$0xf]
                  %913 = vst [vmem:[%s907 + $0x8] sm:$0xf] %v912
                  %v914 = vld [vmem:[%s906 + $0x18] sm:$0xf]
                  %915 = vst [vmem:[%s907 + $0xc] sm:$0xf] %v914
                  %v916 = vld [vmem:[%s906 + $0x20] sm:$0xf]
                  %917 = vst [vmem:[%s907 + $0x10] sm:$0xf] %v916
                  %v918 = vld [vmem:[%s906 + $0x28] sm:$0xf]
                  %919 = vst [vmem:[%s907 + $0x14] sm:$0xf] %v918
                  %v920 = vld [vmem:[%s906 + $0x30] sm:$0xf]
                  %921 = vst [vmem:[%s907 + $0x18] sm:$0xf] %v920
                  %v922 = vld [vmem:[%s906 + $0x38] sm:$0xf]
                  %923 = vst [vmem:[%s907 + $0x1c] sm:$0xf] %v922
                  %v924 = vld [vmem:[%s906 + $0x40] sm:$0xf]
                  %925 = vst [vmem:[%s907 + $0x20] sm:$0xf] %v924
                  %v926 = vld [vmem:[%s906 + $0x48] sm:$0xf]
                  %927 = vst [vmem:[%s907 + $0x24] sm:$0xf] %v926
                  %v928 = vld [vmem:[%s906 + $0x50] sm:$0xf]
                  %929 = vst [vmem:[%s907 + $0x28] sm:$0xf] %v928
                  %v930 = vld [vmem:[%s906 + $0x58] sm:$0xf]
                  %931 = vst [vmem:[%s907 + $0x2c] sm:$0xf] %v930
                  %v932 = vld [vmem:[%s906 + $0x60] sm:$0xf]
                  %933 = vst [vmem:[%s907 + $0x30] sm:$0xf] %v932
                  %v934 = vld [vmem:[%s906 + $0x68] sm:$0xf]
                  %935 = vst [vmem:[%s907 + $0x34] sm:$0xf] %v934
                  %v936 = vld [vmem:[%s906 + $0x70] sm:$0xf]
                  %937 = vst [vmem:[%s907 + $0x38] sm:$0xf] %v936
                  %v938 = vld [vmem:[%s906 + $0x78] sm:$0xf]
                  %939 = vst [vmem:[%s907 + $0x3c] sm:$0xf] %v938
                  %v940 = vld [vmem:[%s906 + $0x80] sm:$0xf]
                  %941 = vst [vmem:[%s907 + $0x40] sm:$0xf] %v940
                  %v942 = vld [vmem:[%s906 + $0x88] sm:$0xf]
                  %943 = vst [vmem:[%s907 + $0x44] sm:$0xf] %v942
                  %v944 = vld [vmem:[%s906 + $0x90] sm:$0xf]
                  %945 = vst [vmem:[%s907 + $0x48] sm:$0xf] %v944
                  %v946 = vld [vmem:[%s906 + $0x98] sm:$0xf]
                  %947 = vst [vmem:[%s907 + $0x4c] sm:$0xf] %v946
                  %v948 = vld [vmem:[%s906 + $0xa0] sm:$0xf]
                  %949 = vst [vmem:[%s907 + $0x50] sm:$0xf] %v948
                  %v950 = vld [vmem:[%s906 + $0xa8] sm:$0xf]
                  %951 = vst [vmem:[%s907 + $0x54] sm:$0xf] %v950
                  %v952 = vld [vmem:[%s906 + $0xb0] sm:$0xf]
                  %953 = vst [vmem:[%s907 + $0x58] sm:$0xf] %v952
                  %v954 = vld [vmem:[%s906 + $0xb8] sm:$0xf]
                  %955 = vst [vmem:[%s907 + $0x5c] sm:$0xf] %v954
                  %v956 = vld [vmem:[%s906 + $0xc0] sm:$0xf]
                  %957 = vst [vmem:[%s907 + $0x60] sm:$0xf] %v956
                  %v958 = vld [vmem:[%s906 + $0xc8] sm:$0xf]
                  %959 = vst [vmem:[%s907 + $0x64] sm:$0xf] %v958
                  %v960 = vld [vmem:[%s906 + $0xd0] sm:$0xf]
                  %961 = vst [vmem:[%s907 + $0x68] sm:$0xf] %v960
                  %v962 = vld [vmem:[%s906 + $0xd8] sm:$0xf]
                  %963 = vst [vmem:[%s907 + $0x6c] sm:$0xf] %v962
                  %v964 = vld [vmem:[%s906 + $0xe0] sm:$0xf]
                  %965 = vst [vmem:[%s907 + $0x70] sm:$0xf] %v964
                  %v966 = vld [vmem:[%s906 + $0xe8] sm:$0xf]
                  %967 = vst [vmem:[%s907 + $0x74] sm:$0xf] %v966
                  %v968 = vld [vmem:[%s906 + $0xf0] sm:$0xf]
                  %969 = vst [vmem:[%s907 + $0x78] sm:$0xf] %v968
                  %v970 = vld [vmem:[%s906 + $0xf8] sm:$0xf]
                  %971 = vst [vmem:[%s907 + $0x7c] sm:$0xf] %v970
                  %v972 = vld [vmem:[%s906 + $0x100] sm:$0xf]
                  %973 = vst [vmem:[%s907 + $0x80] sm:$0xf] %v972
                  %v974 = vld [vmem:[%s906 + $0x108] sm:$0xf]
                  %975 = vst [vmem:[%s907 + $0x84] sm:$0xf] %v974
                  %v976 = vld [vmem:[%s906 + $0x110] sm:$0xf]
                  %977 = vst [vmem:[%s907 + $0x88] sm:$0xf] %v976
                  %v978 = vld [vmem:[%s906 + $0x118] sm:$0xf]
                  %979 = vst [vmem:[%s907 + $0x8c] sm:$0xf] %v978
                  %v980 = vld [vmem:[%s906 + $0x120] sm:$0xf]
                  %981 = vst [vmem:[%s907 + $0x90] sm:$0xf] %v980
                  %v982 = vld [vmem:[%s906 + $0x128] sm:$0xf]
                  %983 = vst [vmem:[%s907 + $0x94] sm:$0xf] %v982
                  %v984 = vld [vmem:[%s906 + $0x130] sm:$0xf]
                  %985 = vst [vmem:[%s907 + $0x98] sm:$0xf] %v984
                  %v986 = vld [vmem:[%s906 + $0x138] sm:$0xf]
                  %987 = vst [vmem:[%s907 + $0x9c] sm:$0xf] %v986
                  %v988 = vld [vmem:[%s906 + $0x140] sm:$0xf]
                  %989 = vst [vmem:[%s907 + $0xa0] sm:$0xf] %v988
                  %v990 = vld [vmem:[%s906 + $0x148] sm:$0xf]
                  %991 = vst [vmem:[%s907 + $0xa4] sm:$0xf] %v990
                  %v992 = vld [vmem:[%s906 + $0x150] sm:$0xf]
                  %993 = vst [vmem:[%s907 + $0xa8] sm:$0xf] %v992
                  %v994 = vld [vmem:[%s906 + $0x158] sm:$0xf]
                  %995 = vst [vmem:[%s907 + $0xac] sm:$0xf] %v994
                  %v996 = vld [vmem:[%s906 + $0x160] sm:$0xf]
                  %997 = vst [vmem:[%s907 + $0xb0] sm:$0xf] %v996
                  %v998 = vld [vmem:[%s906 + $0x168] sm:$0xf]
                  %999 = vst [vmem:[%s907 + $0xb4] sm:$0xf] %v998
                  %v1000 = vld [vmem:[%s906 + $0x170] sm:$0xf]
                  %1001 = vst [vmem:[%s907 + $0xb8] sm:$0xf] %v1000
                  %v1002 = vld [vmem:[%s906 + $0x178] sm:$0xf]
                  %1003 = vst [vmem:[%s907 + $0xbc] sm:$0xf] %v1002
                  %v1004 = vld [vmem:[%s906 + $0x180] sm:$0xf]
                  %1005 = vst [vmem:[%s907 + $0xc0] sm:$0xf] %v1004
                  %v1006 = vld [vmem:[%s906 + $0x188] sm:$0xf]
                  %1007 = vst [vmem:[%s907 + $0xc4] sm:$0xf] %v1006
                  %v1008 = vld [vmem:[%s906 + $0x190] sm:$0xf]
                  %1009 = vst [vmem:[%s907 + $0xc8] sm:$0xf] %v1008
                  %v1010 = vld [vmem:[%s906 + $0x198] sm:$0xf]
                  %1011 = vst [vmem:[%s907 + $0xcc] sm:$0xf] %v1010
                  %v1012 = vld [vmem:[%s906 + $0x1a0] sm:$0xf]
                  %1013 = vst [vmem:[%s907 + $0xd0] sm:$0xf] %v1012
                  %v1014 = vld [vmem:[%s906 + $0x1a8] sm:$0xf]
                  %1015 = vst [vmem:[%s907 + $0xd4] sm:$0xf] %v1014
                  %v1016 = vld [vmem:[%s906 + $0x1b0] sm:$0xf]
                  %1017 = vst [vmem:[%s907 + $0xd8] sm:$0xf] %v1016
                  %v1018 = vld [vmem:[%s906 + $0x1b8] sm:$0xf]
                  %1019 = vst [vmem:[%s907 + $0xdc] sm:$0xf] %v1018
                  %v1020 = vld [vmem:[%s906 + $0x1c0] sm:$0xf]
                  %1021 = vst [vmem:[%s907 + $0xe0] sm:$0xf] %v1020
                  %v1022 = vld [vmem:[%s906 + $0x1c8] sm:$0xf]
                  %1023 = vst [vmem:[%s907 + $0xe4] sm:$0xf] %v1022
                  %v1024 = vld [vmem:[%s906 + $0x1d0] sm:$0xf]
                  %1025 = vst [vmem:[%s907 + $0xe8] sm:$0xf] %v1024
                  %v1026 = vld [vmem:[%s906 + $0x1d8] sm:$0xf]
                  %1027 = vst [vmem:[%s907 + $0xec] sm:$0xf] %v1026
                  %v1028 = vld [vmem:[%s906 + $0x1e0] sm:$0xf]
                  %1029 = vst [vmem:[%s907 + $0xf0] sm:$0xf] %v1028
                $region165: #{unet_up2_forward.3} parent=152 // loop_footer
                  %s905 = sadd.s32 1, %s901
                $region166: #{unet_up2_forward.3} parent=152 // loop_footer_branch
                  %900 = sbr.rel target = $region162
                $region167: #{unet_up2_forward.3} parent=152 // loop_exit
                  _
              $region153: #{unet_up2_forward.3} parent=137 // pred_fallthru
                _
            $region138: #{unet_up2_forward.3} parent=133 // pred_fallthru
              _
            // Predicated region
            $region139: #{unet_up2_forward.3} parent=133 // pred_check
              _
            $region140: #{unet_up2_forward.3} parent=133 // pred_check_branch
              %757 = sbr.rel (0) target = $region142
            $region141: #{unet_up2_forward.3} parent=133 // pred_region
              loop: start=0, step=1, limit=1
              $region143: #{unet_up2_forward.3} parent=141 // loop_pre_header
                _
              $region144: #{unet_up2_forward.3} parent=141 // loop_header
                %s760 = sphi 0, %s764
                %p761 = scmp.ge.s32.totalorder %s760, 1
                %s765 = sphi %s751, %s751
                %s766 = sphi %s747, %s747
              $region145: #{unet_up2_forward.3} parent=141 // loop_header_branch
                %763 = sbr.rel (%p761) target = $region149
              $region146: #{unet_up2_forward.3} parent=141 // loop_body
                %v767 = vld [vmem:[%s765] sm:$0xf]
                %768 = vst [vmem:[%s766] sm:$0xf] %v767
                %v769 = vld [vmem:[%s765 + $0x8] sm:$0xf]
                %770 = vst [vmem:[%s766 + $0x4] sm:$0xf] %v769
                %v771 = vld [vmem:[%s765 + $0x10] sm:$0xf]
                %772 = vst [vmem:[%s766 + $0x8] sm:$0xf] %v771
                %v773 = vld [vmem:[%s765 + $0x18] sm:$0xf]
                %774 = vst [vmem:[%s766 + $0xc] sm:$0xf] %v773
                %v775 = vld [vmem:[%s765 + $0x20] sm:$0xf]
                %776 = vst [vmem:[%s766 + $0x10] sm:$0xf] %v775
                %v777 = vld [vmem:[%s765 + $0x28] sm:$0xf]
                %778 = vst [vmem:[%s766 + $0x14] sm:$0xf] %v777
                %v779 = vld [vmem:[%s765 + $0x30] sm:$0xf]
                %780 = vst [vmem:[%s766 + $0x18] sm:$0xf] %v779
                %v781 = vld [vmem:[%s765 + $0x38] sm:$0xf]
                %782 = vst [vmem:[%s766 + $0x1c] sm:$0xf] %v781
                %v783 = vld [vmem:[%s765 + $0x40] sm:$0xf]
                %784 = vst [vmem:[%s766 + $0x20] sm:$0xf] %v783
                %v785 = vld [vmem:[%s765 + $0x48] sm:$0xf]
                %786 = vst [vmem:[%s766 + $0x24] sm:$0xf] %v785
                %v787 = vld [vmem:[%s765 + $0x50] sm:$0xf]
                %788 = vst [vmem:[%s766 + $0x28] sm:$0xf] %v787
                %v789 = vld [vmem:[%s765 + $0x58] sm:$0xf]
                %790 = vst [vmem:[%s766 + $0x2c] sm:$0xf] %v789
                %v791 = vld [vmem:[%s765 + $0x60] sm:$0xf]
                %792 = vst [vmem:[%s766 + $0x30] sm:$0xf] %v791
                %v793 = vld [vmem:[%s765 + $0x68] sm:$0xf]
                %794 = vst [vmem:[%s766 + $0x34] sm:$0xf] %v793
                %v795 = vld [vmem:[%s765 + $0x70] sm:$0xf]
                %796 = vst [vmem:[%s766 + $0x38] sm:$0xf] %v795
                %v797 = vld [vmem:[%s765 + $0x78] sm:$0xf]
                %798 = vst [vmem:[%s766 + $0x3c] sm:$0xf] %v797
                %v799 = vld [vmem:[%s765 + $0x80] sm:$0xf]
                %800 = vst [vmem:[%s766 + $0x40] sm:$0xf] %v799
                %v801 = vld [vmem:[%s765 + $0x88] sm:$0xf]
                %802 = vst [vmem:[%s766 + $0x44] sm:$0xf] %v801
                %v803 = vld [vmem:[%s765 + $0x90] sm:$0xf]
                %804 = vst [vmem:[%s766 + $0x48] sm:$0xf] %v803
                %v805 = vld [vmem:[%s765 + $0x98] sm:$0xf]
                %806 = vst [vmem:[%s766 + $0x4c] sm:$0xf] %v805
                %v807 = vld [vmem:[%s765 + $0xa0] sm:$0xf]
                %808 = vst [vmem:[%s766 + $0x50] sm:$0xf] %v807
                %v809 = vld [vmem:[%s765 + $0xa8] sm:$0xf]
                %810 = vst [vmem:[%s766 + $0x54] sm:$0xf] %v809
                %v811 = vld [vmem:[%s765 + $0xb0] sm:$0xf]
                %812 = vst [vmem:[%s766 + $0x58] sm:$0xf] %v811
                %v813 = vld [vmem:[%s765 + $0xb8] sm:$0xf]
                %814 = vst [vmem:[%s766 + $0x5c] sm:$0xf] %v813
                %v815 = vld [vmem:[%s765 + $0xc0] sm:$0xf]
                %816 = vst [vmem:[%s766 + $0x60] sm:$0xf] %v815
                %v817 = vld [vmem:[%s765 + $0xc8] sm:$0xf]
                %818 = vst [vmem:[%s766 + $0x64] sm:$0xf] %v817
                %v819 = vld [vmem:[%s765 + $0xd0] sm:$0xf]
                %820 = vst [vmem:[%s766 + $0x68] sm:$0xf] %v819
                %v821 = vld [vmem:[%s765 + $0xd8] sm:$0xf]
                %822 = vst [vmem:[%s766 + $0x6c] sm:$0xf] %v821
                %v823 = vld [vmem:[%s765 + $0xe0] sm:$0xf]
                %824 = vst [vmem:[%s766 + $0x70] sm:$0xf] %v823
                %v825 = vld [vmem:[%s765 + $0xe8] sm:$0xf]
                %826 = vst [vmem:[%s766 + $0x74] sm:$0xf] %v825
                %v827 = vld [vmem:[%s765 + $0xf0] sm:$0xf]
                %828 = vst [vmem:[%s766 + $0x78] sm:$0xf] %v827
                %v829 = vld [vmem:[%s765 + $0xf8] sm:$0xf]
                %830 = vst [vmem:[%s766 + $0x7c] sm:$0xf] %v829
                %v831 = vld [vmem:[%s765 + $0x100] sm:$0xf]
                %832 = vst [vmem:[%s766 + $0x80] sm:$0xf] %v831
                %v833 = vld [vmem:[%s765 + $0x108] sm:$0xf]
                %834 = vst [vmem:[%s766 + $0x84] sm:$0xf] %v833
                %v835 = vld [vmem:[%s765 + $0x110] sm:$0xf]
                %836 = vst [vmem:[%s766 + $0x88] sm:$0xf] %v835
                %v837 = vld [vmem:[%s765 + $0x118] sm:$0xf]
                %838 = vst [vmem:[%s766 + $0x8c] sm:$0xf] %v837
                %v839 = vld [vmem:[%s765 + $0x120] sm:$0xf]
                %840 = vst [vmem:[%s766 + $0x90] sm:$0xf] %v839
                %v841 = vld [vmem:[%s765 + $0x128] sm:$0xf]
                %842 = vst [vmem:[%s766 + $0x94] sm:$0xf] %v841
                %v843 = vld [vmem:[%s765 + $0x130] sm:$0xf]
                %844 = vst [vmem:[%s766 + $0x98] sm:$0xf] %v843
                %v845 = vld [vmem:[%s765 + $0x138] sm:$0xf]
                %846 = vst [vmem:[%s766 + $0x9c] sm:$0xf] %v845
                %v847 = vld [vmem:[%s765 + $0x140] sm:$0xf]
                %848 = vst [vmem:[%s766 + $0xa0] sm:$0xf] %v847
                %v849 = vld [vmem:[%s765 + $0x148] sm:$0xf]
                %850 = vst [vmem:[%s766 + $0xa4] sm:$0xf] %v849
                %v851 = vld [vmem:[%s765 + $0x150] sm:$0xf]
                %852 = vst [vmem:[%s766 + $0xa8] sm:$0xf] %v851
                %v853 = vld [vmem:[%s765 + $0x158] sm:$0xf]
                %854 = vst [vmem:[%s766 + $0xac] sm:$0xf] %v853
                %v855 = vld [vmem:[%s765 + $0x160] sm:$0xf]
                %856 = vst [vmem:[%s766 + $0xb0] sm:$0xf] %v855
                %v857 = vld [vmem:[%s765 + $0x168] sm:$0xf]
                %858 = vst [vmem:[%s766 + $0xb4] sm:$0xf] %v857
                %v859 = vld [vmem:[%s765 + $0x170] sm:$0xf]
                %860 = vst [vmem:[%s766 + $0xb8] sm:$0xf] %v859
                %v861 = vld [vmem:[%s765 + $0x178] sm:$0xf]
                %862 = vst [vmem:[%s766 + $0xbc] sm:$0xf] %v861
                %v863 = vld [vmem:[%s765 + $0x180] sm:$0xf]
                %864 = vst [vmem:[%s766 + $0xc0] sm:$0xf] %v863
                %v865 = vld [vmem:[%s765 + $0x188] sm:$0xf]
                %866 = vst [vmem:[%s766 + $0xc4] sm:$0xf] %v865
                %v867 = vld [vmem:[%s765 + $0x190] sm:$0xf]
                %868 = vst [vmem:[%s766 + $0xc8] sm:$0xf] %v867
                %v869 = vld [vmem:[%s765 + $0x198] sm:$0xf]
                %870 = vst [vmem:[%s766 + $0xcc] sm:$0xf] %v869
                %v871 = vld [vmem:[%s765 + $0x1a0] sm:$0xf]
                %872 = vst [vmem:[%s766 + $0xd0] sm:$0xf] %v871
                %v873 = vld [vmem:[%s765 + $0x1a8] sm:$0xf]
                %874 = vst [vmem:[%s766 + $0xd4] sm:$0xf] %v873
                %v875 = vld [vmem:[%s765 + $0x1b0] sm:$0xf]
                %876 = vst [vmem:[%s766 + $0xd8] sm:$0xf] %v875
                %v877 = vld [vmem:[%s765 + $0x1b8] sm:$0xf]
                %878 = vst [vmem:[%s766 + $0xdc] sm:$0xf] %v877
                %v879 = vld [vmem:[%s765 + $0x1c0] sm:$0xf]
                %880 = vst [vmem:[%s766 + $0xe0] sm:$0xf] %v879
                %v881 = vld [vmem:[%s765 + $0x1c8] sm:$0xf]
                %882 = vst [vmem:[%s766 + $0xe4] sm:$0xf] %v881
                %v883 = vld [vmem:[%s765 + $0x1d0] sm:$0xf]
                %884 = vst [vmem:[%s766 + $0xe8] sm:$0xf] %v883
                %v885 = vld [vmem:[%s765 + $0x1d8] sm:$0xf]
                %886 = vst [vmem:[%s766 + $0xec] sm:$0xf] %v885
                %v887 = vld [vmem:[%s765 + $0x1e0] sm:$0xf]
                %888 = vst [vmem:[%s766 + $0xf0] sm:$0xf] %v887
              $region147: #{unet_up2_forward.3} parent=141 // loop_footer
                %s764 = sadd.s32 1, %s760
              $region148: #{unet_up2_forward.3} parent=141 // loop_footer_branch
                %759 = sbr.rel target = $region144
              $region149: #{unet_up2_forward.3} parent=141 // loop_exit
                _
            $region142: #{unet_up2_forward.3} parent=133 // pred_fallthru
              _
          $region134: #{unet_up2_forward.3} parent=129 // pred_fallthru
            _
          %1030 = vnop
        $region130: #{unet_up2_forward.3} parent=43 // pred_fallthru
          _
        // Predicated region
        $region168: #{unet_up2_forward.3} parent=43 // pred_check
          %p1031 = pneg %p136
        $region169: #{unet_up2_forward.3} parent=43 // pred_check_branch
          %1033 = sbr.rel (%p1031) target = $region171
        $region170: #{unet_up2_forward.3} parent=43 // pred_region
          %s1034 = sand.u32 %s126, 1
          %s1035 = sand.u32 %s126, 1
          %s1036 = smul.addr %s1035, 20
          %s1037 = scalar_lea.vmem [#allocation5], %s1036
          %s1038 = smul.addr %s25, 10
          %s1039 = sadd.s32 %s26, %s1038
          %s1040 = smul.addr %s1039, 4
          %s1041 = scalar_lea.vmem %s3, %s1040
          // Predicated region
          $region172: #{unet_up2_forward.3} parent=170 // pred_check
            _
          $region173: #{unet_up2_forward.3} parent=170 // pred_check_branch
            %1043 = sbr.rel (0) target = $region175
          $region174: #{unet_up2_forward.3} parent=170 // pred_region
            // Predicated region
            $region176: #{unet_up2_forward.3} parent=174 // pred_check
              _
            $region177: #{unet_up2_forward.3} parent=174 // pred_check_branch
              %1045 = sbr.rel target = $region179
            $region178: #{unet_up2_forward.3} parent=174 // pred_region
              // Predicated region
              $region191: #{unet_up2_forward.3} parent=178 // pred_check
                _
              $region192: #{unet_up2_forward.3} parent=178 // pred_check_branch
                %1068 = sbr.rel (0) target = $region194
              $region193: #{unet_up2_forward.3} parent=178 // pred_region
                loop: start=0, step=1, limit=1
                $region195: #{unet_up2_forward.3} parent=193 // loop_pre_header
                  _
                $region196: #{unet_up2_forward.3} parent=193 // loop_header
                  %s1070 = sphi 0, %s1074
                  %p1071 = scmp.ge.s32.totalorder %s1070, 1
                  %s1075 = sphi %s1041, %s1041
                  %s1076 = sphi %s1037, %s1037
                $region197: #{unet_up2_forward.3} parent=193 // loop_header_branch
                  %1073 = sbr.rel (%p1071) target = $region201
                $region198: #{unet_up2_forward.3} parent=193 // loop_body
                  _
                $region199: #{unet_up2_forward.3} parent=193 // loop_footer
                  %s1074 = sadd.s32 1, %s1070
                $region200: #{unet_up2_forward.3} parent=193 // loop_footer_branch
                  %1069 = sbr.rel target = $region196
                $region201: #{unet_up2_forward.3} parent=193 // loop_exit
                  _
                loop: start=0, step=1, limit=1
                $region202: #{unet_up2_forward.3} parent=193 // loop_pre_header
                  _
                $region203: #{unet_up2_forward.3} parent=193 // loop_header
                  %s1079 = sphi 0, %s1083
                  %p1080 = scmp.ge.s32.totalorder %s1079, 1
                  %s1084 = sphi %s1041, %s1041
                  %s1085 = sphi %s1037, %s1037
                $region204: #{unet_up2_forward.3} parent=193 // loop_header_branch
                  %1082 = sbr.rel (%p1080) target = $region208
                $region205: #{unet_up2_forward.3} parent=193 // loop_body
                  %v1086 = vld [vmem:[%s1084] sm:$0xf]
                  %1087 = vst [vmem:[%s1085] sm:$0xf] %v1086
                  %v1088 = vld [vmem:[%s1084 + $0x8] sm:$0xf]
                  %1089 = vst [vmem:[%s1085 + $0x4] sm:$0xf] %v1088
                  %v1090 = vld [vmem:[%s1084 + $0x10] sm:$0xf]
                  %1091 = vst [vmem:[%s1085 + $0x8] sm:$0xf] %v1090
                  %v1092 = vld [vmem:[%s1084 + $0x18] sm:$0xf]
                  %1093 = vst [vmem:[%s1085 + $0xc] sm:$0xf] %v1092
                  %v1094 = vld [vmem:[%s1084 + $0x20] sm:$0xf]
                  %1095 = vst [vmem:[%s1085 + $0x10] sm:$0xf] %v1094
                $region206: #{unet_up2_forward.3} parent=193 // loop_footer
                  %s1083 = sadd.s32 1, %s1079
                $region207: #{unet_up2_forward.3} parent=193 // loop_footer_branch
                  %1078 = sbr.rel target = $region203
                $region208: #{unet_up2_forward.3} parent=193 // loop_exit
                  _
              $region194: #{unet_up2_forward.3} parent=178 // pred_fallthru
                _
            $region179: #{unet_up2_forward.3} parent=174 // pred_fallthru
              _
            // Predicated region
            $region180: #{unet_up2_forward.3} parent=174 // pred_check
              _
            $region181: #{unet_up2_forward.3} parent=174 // pred_check_branch
              %1047 = sbr.rel (0) target = $region183
            $region182: #{unet_up2_forward.3} parent=174 // pred_region
              loop: start=0, step=1, limit=1
              $region184: #{unet_up2_forward.3} parent=182 // loop_pre_header
                _
              $region185: #{unet_up2_forward.3} parent=182 // loop_header
                %s1050 = sphi 0, %s1054
                %p1051 = scmp.ge.s32.totalorder %s1050, 1
                %s1055 = sphi %s1041, %s1041
                %s1056 = sphi %s1037, %s1037
              $region186: #{unet_up2_forward.3} parent=182 // loop_header_branch
                %1053 = sbr.rel (%p1051) target = $region190
              $region187: #{unet_up2_forward.3} parent=182 // loop_body
                %v1057 = vld [vmem:[%s1055] sm:$0xf]
                %1058 = vst [vmem:[%s1056] sm:$0xf] %v1057
                %v1059 = vld [vmem:[%s1055 + $0x8] sm:$0xf]
                %1060 = vst [vmem:[%s1056 + $0x4] sm:$0xf] %v1059
                %v1061 = vld [vmem:[%s1055 + $0x10] sm:$0xf]
                %1062 = vst [vmem:[%s1056 + $0x8] sm:$0xf] %v1061
                %v1063 = vld [vmem:[%s1055 + $0x18] sm:$0xf]
                %1064 = vst [vmem:[%s1056 + $0xc] sm:$0xf] %v1063
                %v1065 = vld [vmem:[%s1055 + $0x20] sm:$0xf]
                %1066 = vst [vmem:[%s1056 + $0x10] sm:$0xf] %v1065
              $region188: #{unet_up2_forward.3} parent=182 // loop_footer
                %s1054 = sadd.s32 1, %s1050
              $region189: #{unet_up2_forward.3} parent=182 // loop_footer_branch
                %1049 = sbr.rel target = $region185
              $region190: #{unet_up2_forward.3} parent=182 // loop_exit
                _
            $region183: #{unet_up2_forward.3} parent=174 // pred_fallthru
              _
          $region175: #{unet_up2_forward.3} parent=170 // pred_fallthru
            _
          %1096 = vnop
        $region171: #{unet_up2_forward.3} parent=43 // pred_fallthru
          _
        // Predicated region
        $region209: #{unet_up2_forward.3} parent=43 // pred_check
          %p1097 = pneg %p311
        $region210: #{unet_up2_forward.3} parent=43 // pred_check_branch
          %1099 = sbr.rel (%p1097) target = $region212
        $region211: #{unet_up2_forward.3} parent=43 // pred_region
          %p1100 = scmp.lt.s32.totalorder %s25, 1
          %s1101 = scalar_select %p1100, %s25, 1
          %p1102 = scmp.lt.s32.totalorder %s26, 1
          %s1103 = scalar_select %p1102, %s26, 1
          %s1104 = smul.addr %s1101, 2
          %s1105 = sadd.s32 %s1103, %s1104
          %s1106 = smul.addr %s1105, 8
          %s1107 = scalar_lea.vmem %s11, %s1106
        $region212: #{unet_up2_forward.3} parent=43 // pred_fallthru
          _
      $region44: #{unet_up2_forward.3} parent=5 // pred_fallthru
        _
      %p1108 = scmp.le.s32.totalorder 1, %s18
      %p1109 = scmp.lt.s32.totalorder %s18, 5
      %p1110 = pnand %p1108, %p1109
      %p1111 = pneg %p1110
      // Predicated region
      $region213: #{unet_up2_forward.3} parent=5 // pred_check
        _
      $region214: #{unet_up2_forward.3} parent=5 // pred_check_branch
        %1113 = sbr.rel (%p1110) target = $region216
      $region215: #{unet_up2_forward.3} parent=5 // pred_region
        %s1114 = ssub.s32 %s18, 1
        %s1115 = sand.u32 %s45, 1
        %s1116 = sand.u32 %s45, 1
        %s1117 = smul.addr %s1116, 100
        %s1118 = scalar_lea.vmem [#allocation2], %s1117
        // Predicated region
        $region217: #{unet_up2_forward.3} parent=215 // pred_check
          %p1119 = pneg %p58
        $region218: #{unet_up2_forward.3} parent=215 // pred_check_branch
          %1121 = sbr.rel (%p1119) target = $region220
        $region219: #{unet_up2_forward.3} parent=215 // pred_region
          _
        $region220: #{unet_up2_forward.3} parent=215 // pred_fallthru
          _
        %s1122 = sand.u32 %s73, 1
        %s1123 = sand.u32 %s73, 1
        %s1124 = smul.addr %s1123, 164
        %s1125 = scalar_lea.vmem [#allocation3], %s1124
        // Predicated region
        $region221: #{unet_up2_forward.3} parent=215 // pred_check
          %p1126 = pneg %p86
        $region222: #{unet_up2_forward.3} parent=215 // pred_check_branch
          %1128 = sbr.rel (%p1126) target = $region224
        $region223: #{unet_up2_forward.3} parent=215 // pred_region
          _
        $region224: #{unet_up2_forward.3} parent=215 // pred_fallthru
          _
        %s1129 = sand.u32 %s101, 1
        %s1130 = sand.u32 %s101, 1
        %s1131 = smul.addr %s1130, 244
        %s1132 = scalar_lea.vmem [#allocation4], %s1131
        // Predicated region
        $region225: #{unet_up2_forward.3} parent=215 // pred_check
          %p1133 = pneg %p114
        $region226: #{unet_up2_forward.3} parent=215 // pred_check_branch
          %1135 = sbr.rel (%p1133) target = $region228
        $region227: #{unet_up2_forward.3} parent=215 // pred_region
          _
        $region228: #{unet_up2_forward.3} parent=215 // pred_fallthru
          _
        %s1136 = sand.u32 %s129, 1
        %s1137 = sand.u32 %s129, 1
        %s1138 = smul.addr %s1137, 20
        %s1139 = scalar_lea.vmem [#allocation5], %s1138
        // Predicated region
        $region229: #{unet_up2_forward.3} parent=215 // pred_check
          %p1140 = pneg %p142
        $region230: #{unet_up2_forward.3} parent=215 // pred_check_branch
          %1142 = sbr.rel (%p1140) target = $region232
        $region231: #{unet_up2_forward.3} parent=215 // pred_region
          _
        $region232: #{unet_up2_forward.3} parent=215 // pred_fallthru
          _
        %s1143 = sand.u32 %s45, 1
        %s1144 = sand.u32 %s45, 1
        %s1145 = smul.addr %s1144, 100
        %s1146 = scalar_lea.vmem [#allocation2], %s1145
        %p1147 = pneg %p58
        %p1148 = pneg %p55
        %s1149 = sand.u32 %s73, 1
        %s1150 = sand.u32 %s73, 1
        %s1151 = smul.addr %s1150, 164
        %s1152 = scalar_lea.vmem [#allocation3], %s1151
        %p1153 = pneg %p86
        %p1154 = pneg %p83
        %s1155 = sand.u32 %s101, 1
        %s1156 = sand.u32 %s101, 1
        %s1157 = smul.addr %s1156, 244
        %s1158 = scalar_lea.vmem [#allocation4], %s1157
        %p1159 = pneg %p114
        %p1160 = pneg %p111
        %s1161 = sand.u32 %s129, 1
        %s1162 = sand.u32 %s129, 1
        %s1163 = smul.addr %s1162, 20
        %s1164 = scalar_lea.vmem [#allocation5], %s1163
        %p1165 = pneg %p142
        %p1166 = pneg %p139
        %p1167 = pneg %p163
        %p1168 = pneg %p160
        %p1169 = pneg %p184
        %p1170 = pneg %p181
        %p1171 = pneg %p205
        %p1172 = pneg %p202
        %p1173 = pneg %p226
        %p1174 = pneg %p223
        %p1175 = pneg %p247
        %p1176 = pneg %p244
        %p1177 = pneg %p268
        %p1178 = pneg %p265
        %p1179 = pneg %p289
        %p1180 = pneg %p286
        %p1181 = scmp.lt.s32.totalorder %s27, 1
        %s1182 = scalar_select %p1181, %s27, 1
        %p1183 = scmp.lt.s32.totalorder %s28, 1
        %s1184 = scalar_select %p1183, %s28, 1
        %s1185 = smul.addr %s1182, 2
        %s1186 = sadd.s32 %s1184, %s1185
        %s1187 = smul.addr %s1186, 8
        %s1188 = scalar_lea.vmem %s11, %s1187
        %p1189 = pneg %p317
        %p1190 = pneg %p314
        %p1191 = pneg %p345
        %p1192 = pneg %p342
        %p1193 = scmp.lt.s32.totalorder %s27, 1
        %s1194 = scalar_select %p1193, %s27, 1
        %p1195 = scmp.lt.s32.totalorder %s28, 1
        %s1196 = scalar_select %p1195, %s28, 1
        %s1197 = smul.addr %s1194, 2
        %s1198 = sadd.s32 %s1196, %s1197
        %s1199 = smul.addr %s1198, 8
        %s1200 = scalar_lea.vmem %s12, %s1199
        %p1201 = scmp.lt.s32.totalorder %s27, 1
        %s1202 = scalar_select %p1201, %s27, 1
        %p1203 = scmp.lt.s32.totalorder %s28, 1
        %s1204 = scalar_select %p1203, %s28, 1
        %s1205 = smul.addr %s1202, 2
        %s1206 = sadd.s32 %s1204, %s1205
        %s1207 = smul.addr %s1206, 8
        %s1208 = scalar_lea.vmem %s11, %s1207
        %p1209 = scmp.lt.s32.totalorder %s27, 1
        %s1210 = scalar_select %p1209, %s27, 1
        %p1211 = scmp.lt.s32.totalorder %s28, 1
        %s1212 = scalar_select %p1211, %s28, 1
        %s1213 = smul.addr %s1210, 2
        %s1214 = sadd.s32 %s1212, %s1213
        %s1215 = smul.addr %s1214, 8
        %s1216 = scalar_lea.vmem %s12, %s1215
        %v1218 = vld [vmem:[%s4] sm:$0xf]
        %v1219 = vld [vmem:[%s1118] sm:$0xf]
        %v1220 = vld [vmem:[%s1118 + $0x4] sm:$0xf]
        %v1221 = vld [vmem:[%s1118 + $0x8] sm:$0xf]
        %v1222 = vld [vmem:[%s1118 + $0xc] sm:$0xf]
        %v1223 = vld [vmem:[%s1118 + $0x10] sm:$0xf]
        %v1224 = vld [vmem:[%s1118 + $0x14] sm:$0xf]
        %v1225 = vld [vmem:[%s1118 + $0x18] sm:$0xf]
        %v1226 = vld [vmem:[%s1118 + $0x1c] sm:$0xf]
        %v1227 = vld [vmem:[%s1118 + $0x20] sm:$0xf]
        %v1228 = vld [vmem:[%s1118 + $0x24] sm:$0xf]
        %v1229 = vld [vmem:[%s1118 + $0x28] sm:$0xf]
        %v1230 = vld [vmem:[%s1118 + $0x2c] sm:$0xf]
        %v1231 = vld [vmem:[%s1118 + $0x30] sm:$0xf]
        %v1232 = vld [vmem:[%s1118 + $0x34] sm:$0xf]
        %v1233 = vld [vmem:[%s1118 + $0x38] sm:$0xf]
        %v1234 = vld [vmem:[%s1118 + $0x3c] sm:$0xf]
        %v1235 = vld [vmem:[%s1118 + $0x40] sm:$0xf]
        %v1236 = vld [vmem:[%s1118 + $0x44] sm:$0xf]
        %v1237 = vld [vmem:[%s1118 + $0x48] sm:$0xf]
        %v1238 = vld [vmem:[%s1118 + $0x4c] sm:$0xf]
        %v1239 = vld [vmem:[%s1118 + $0x50] sm:$0xf]
        %v1240 = vld [vmem:[%s1118 + $0x54] sm:$0xf]
        %v1241 = vld [vmem:[%s1118 + $0x58] sm:$0xf]
        %v1242 = vld [vmem:[%s1118 + $0x5c] sm:$0xf]
        %v1243 = vld [vmem:[%s1118 + $0x60] sm:$0x3]
        %v1244 = vld [vmem:[%s8] sm:$0xf]
        %1246 = vset.pattern.permute.xlu0 0
        %1247 = vperm.xlu0 %1246, %v1244
        %v1248 = vpop.permute.xlu0 %1247
        %v1252 = vunpack.c.l.s4 1983009808
        %v1253 = vunpack.c.0.s8 %v1252
        %v1254 = vlaneseq
        %v1255 = vshrl.u32 %v1254, 7
        %v1256 = vsub.s32 %v1253, %v1255
        %v1257 = vrot.slane %v1218, %v1256
        %v1258 = vcombine.high %v1257, %v1257
        %v1285 = vunpack.c.l.b16 %v1219
        %v1286 = vunpack.c.l.b16 %v1220
        %v1287 = vunpack.c.l.b16 %v1221
        %v1288 = vunpack.c.l.b16 %v1222
        %v1289 = vunpack.c.l.b16 %v1223
        %v1290 = vunpack.c.l.b16 %v1224
        %v1291 = vunpack.c.l.b16 %v1225
        %v1292 = vunpack.c.l.b16 %v1226
        %v1293 = vunpack.c.l.b16 %v1227
        %v1294 = vunpack.c.l.b16 %v1228
        %v1295 = vunpack.c.l.b16 %v1229
        %v1296 = vunpack.c.l.b16 %v1230
        %v1297 = vunpack.c.l.b16 %v1231
        %v1298 = vunpack.c.l.b16 %v1232
        %v1299 = vunpack.c.l.b16 %v1233
        %v1300 = vunpack.c.l.b16 %v1234
        %v1301 = vunpack.c.l.b16 %v1235
        %v1302 = vunpack.c.l.b16 %v1236
        %v1303 = vunpack.c.l.b16 %v1237
        %v1304 = vunpack.c.l.b16 %v1238
        %v1305 = vunpack.c.l.b16 %v1239
        %v1306 = vunpack.c.l.b16 %v1240
        %v1307 = vunpack.c.l.b16 %v1241
        %v1308 = vunpack.c.l.b16 %v1242
        %v1309 = vunpack.c.l.b16 %v1243
        %v1310 = vpack.c.b16 %v1286, %v1285
        %v1311 = vpack.c.b16 %v1288, %v1287
        %v1312 = vpack.c.b16 %v1290, %v1289
        %v1313 = vpack.c.b16 %v1292, %v1291
        %v1314 = vpack.c.b16 %v1294, %v1293
        %v1315 = vpack.c.b16 %v1296, %v1295
        %v1316 = vpack.c.b16 %v1298, %v1297
        %v1317 = vpack.c.b16 %v1300, %v1299
        %v1318 = vpack.c.b16 %v1302, %v1301
        %v1319 = vpack.c.b16 %v1304, %v1303
        %v1320 = vpack.c.b16 %v1306, %v1305
        %v1321 = vpack.c.b16 %v1308, %v1307
        %v1322 = vpack.c.b16 %v1309, %v1309
        %vm1335 = vcmask 556032
        %v1337 = vsel %vm1335, %v1258, 0
        %vm1339 = vcmask 1041408
        %v1341 = vsel %vm1339, %v1322, 0
        %1343 = vmatprep.subr.bf16.mxu0 0
        %1344 = vmatpush1.bf16.msra.mxu0 %v1310
        %1345 = vmatprep.subr.bf16.mxu0 0
        %1346 = vmatpush1.bf16.msra.mxu0 %v1311
        %1347 = vmatprep.subr.bf16.mxu0 0
        %1348 = vmatpush1.bf16.msra.mxu0 %v1312
        %1349 = vmatprep.subr.bf16.mxu0 0
        %1350 = vmatpush1.bf16.msra.mxu0 %v1313
        %1351 = vmatprep.subr.bf16.mxu0 0
        %1352 = vmatpush1.bf16.msra.mxu0 %v1314
        %1353 = vmatprep.subr.bf16.mxu0 0
        %1354 = vmatpush1.bf16.msra.mxu0 %v1315
        %1355 = vmatprep.subr.bf16.mxu0 0
        %1356 = vmatpush1.bf16.msra.mxu0 %v1316
        %1357 = vmatprep.subr.bf16.mxu0 0
        %1358 = vmatpush1.bf16.msra.mxu0 %v1317
        %1359 = vmatprep.subr.bf16.mxu0 0
        %1360 = vmatpush1.bf16.msra.mxu0 %v1318
        %1361 = vmatprep.subr.bf16.mxu0 0
        %1362 = vmatpush1.bf16.msra.mxu0 %v1319
        %1363 = vmatprep.subr.bf16.mxu0 0
        %1364 = vmatpush1.bf16.msra.mxu0 %v1320
        %1365 = vmatprep.subr.bf16.mxu0 0
        %1366 = vmatpush1.bf16.msra.mxu0 %v1321
        %1367 = vmatprep.subr.bf16.mxu0 0
        %1368 = vmatpush1.bf16.msra.mxu0 %v1341
        %1369 = vmatprep.subr.bf16.mxu0 0
        %1370 = vmatpush1.bf16.msra.mxu0 0
        %1371 = vmatprep.subr.bf16.mxu0 0
        %1372 = vmatpush1.bf16.msra.mxu0 0
        %1373 = vmatprep.subr.bf16.mxu0 0
        %1374 = vmatpush1.bf16.msra.mxu0 0
        %1375 = vmatprep.mubr.bf16.mxu0 %v1337
        %1376 = vmatmul.mubr.bf16.gmra.mrb[0].mxu0 %v1257
        %v1377 = vpop.f32.mrb[0].mxu0
        %v1378 = vadd.f32 %v1248, %v1377
        %v1379 = vpop.f32.mrb[0].mxu0
        %v1380 = vpop.f32.mrb[0].mxu0
        %v1381 = vpop.f32.mrb[0].mxu0
        %1382 = vdwg.mxu0
        %v1383 = vmax.f32 %v1378, 0.0
        %v1384 = vld [vmem:[%s5] sm:$0x3f]
        %v1385 = vld [vmem:[%s1125] sm:$0xf]
        %v1386 = vld [vmem:[%s1125 + $0x4] sm:$0xf]
        %v1387 = vld [vmem:[%s1125 + $0x8] sm:$0xf]
        %v1388 = vld [vmem:[%s1125 + $0xc] sm:$0xf]
        %v1389 = vld [vmem:[%s1125 + $0x10] sm:$0xf]
        %v1390 = vld [vmem:[%s1125 + $0x14] sm:$0xf]
        %v1391 = vld [vmem:[%s1125 + $0x18] sm:$0xf]
        %v1392 = vld [vmem:[%s1125 + $0x1c] sm:$0xf]
        %v1393 = vld [vmem:[%s1125 + $0x20] sm:$0xf]
        %v1394 = vld [vmem:[%s1125 + $0x24] sm:$0xf]
        %v1395 = vld [vmem:[%s1125 + $0x28] sm:$0xf]
        %v1396 = vld [vmem:[%s1125 + $0x2c] sm:$0xf]
        %v1397 = vld [vmem:[%s1125 + $0x30] sm:$0xf]
        %v1398 = vld [vmem:[%s1125 + $0x34] sm:$0xf]
        %v1399 = vld [vmem:[%s1125 + $0x38] sm:$0xf]
        %v1400 = vld [vmem:[%s1125 + $0x3c] sm:$0xf]
        %v1401 = vld [vmem:[%s1125 + $0x40] sm:$0xf]
        %v1402 = vld [vmem:[%s1125 + $0x44] sm:$0xf]
        %v1403 = vld [vmem:[%s1125 + $0x48] sm:$0xf]
        %v1404 = vld [vmem:[%s1125 + $0x4c] sm:$0xf]
        %v1405 = vld [vmem:[%s1125 + $0x50] sm:$0xf]
        %v1406 = vld [vmem:[%s1125 + $0x54] sm:$0xf]
        %v1407 = vld [vmem:[%s1125 + $0x58] sm:$0xf]
        %v1408 = vld [vmem:[%s1125 + $0x5c] sm:$0xf]
        %v1409 = vld [vmem:[%s1125 + $0x60] sm:$0xf]
        %v1410 = vld [vmem:[%s1125 + $0x64] sm:$0xf]
        %v1411 = vld [vmem:[%s1125 + $0x68] sm:$0xf]
        %v1412 = vld [vmem:[%s1125 + $0x6c] sm:$0xf]
        %v1413 = vld [vmem:[%s1125 + $0x70] sm:$0xf]
        %v1414 = vld [vmem:[%s1125 + $0x74] sm:$0xf]
        %v1415 = vld [vmem:[%s1125 + $0x78] sm:$0xf]
        %v1416 = vld [vmem:[%s1125 + $0x7c] sm:$0xf]
        %v1417 = vld [vmem:[%s1125 + $0x80] sm:$0xf]
        %v1418 = vld [vmem:[%s1125 + $0x84] sm:$0xf]
        %v1419 = vld [vmem:[%s1125 + $0x88] sm:$0xf]
        %v1420 = vld [vmem:[%s1125 + $0x8c] sm:$0xf]
        %v1421 = vld [vmem:[%s1125 + $0x90] sm:$0xf]
        %v1422 = vld [vmem:[%s1125 + $0x94] sm:$0xf]
        %v1423 = vld [vmem:[%s1125 + $0x98] sm:$0xf]
        %v1424 = vld [vmem:[%s1125 + $0x9c] sm:$0xf]
        %v1425 = vld [vmem:[%s1125 + $0xa0] sm:$0x3]
        %s1426 = scalar_lea.vmem %s8, 4
        %v1427 = vld [vmem:[%s1426] sm:$0xf]
        %1429 = vset.pattern.permute.xlu0 0
        %1430 = vperm.xlu0 %1429, %v1427
        %v1431 = vpop.permute.xlu0 %1430
        %v1434 = vcombine.high %v1384, %v1384
        %v1436 = vunpack.c.l.s4 1983009808
        %v1437 = vunpack.c.0.s8 %v1436
        %v1438 = vlaneseq
        %v1439 = vshrl.u32 %v1438, 7
        %v1440 = vsub.s32 %v1437, %v1439
        %v1441 = vrot.slane %v1384, %v1440
        %v1443 = vunpack.c.l.s4 1983009808
        %v1444 = vunpack.c.0.s8 %v1443
        %v1445 = vlaneseq
        %v1446 = vshrl.u32 %v1445, 7
        %v1447 = vsub.s32 %v1444, %v1446
        %v1448 = vrot.slane %v1434, %v1447
        %v1449 = vcombine.high %v1441, %v1441
        %v1493 = vunpack.c.l.b16 %v1385
        %v1494 = vunpack.c.l.b16 %v1386
        %v1495 = vunpack.c.l.b16 %v1387
        %v1496 = vunpack.c.l.b16 %v1388
        %v1497 = vunpack.c.l.b16 %v1389
        %v1498 = vunpack.c.l.b16 %v1390
        %v1499 = vunpack.c.l.b16 %v1391
        %v1500 = vunpack.c.l.b16 %v1392
        %v1501 = vunpack.c.l.b16 %v1393
        %v1502 = vunpack.c.l.b16 %v1394
        %v1503 = vunpack.c.l.b16 %v1395
        %v1504 = vunpack.c.l.b16 %v1396
        %v1505 = vunpack.c.l.b16 %v1397
        %v1506 = vunpack.c.l.b16 %v1398
        %v1507 = vunpack.c.l.b16 %v1399
        %v1508 = vunpack.c.l.b16 %v1400
        %v1509 = vunpack.c.l.b16 %v1401
        %v1510 = vunpack.c.l.b16 %v1402
        %v1511 = vunpack.c.l.b16 %v1403
        %v1512 = vunpack.c.l.b16 %v1404
        %v1513 = vunpack.c.l.b16 %v1405
        %v1514 = vunpack.c.l.b16 %v1406
        %v1515 = vunpack.c.l.b16 %v1407
        %v1516 = vunpack.c.l.b16 %v1408
        %v1517 = vunpack.c.l.b16 %v1409
        %v1518 = vunpack.c.l.b16 %v1410
        %v1519 = vunpack.c.l.b16 %v1411
        %v1520 = vunpack.c.l.b16 %v1412
        %v1521 = vunpack.c.l.b16 %v1413
        %v1522 = vunpack.c.l.b16 %v1414
        %v1523 = vunpack.c.l.b16 %v1415
        %v1524 = vunpack.c.l.b16 %v1416
        %v1525 = vunpack.c.l.b16 %v1417
        %v1526 = vunpack.c.l.b16 %v1418
        %v1527 = vunpack.c.l.b16 %v1419
        %v1528 = vunpack.c.l.b16 %v1420
        %v1529 = vunpack.c.l.b16 %v1421
        %v1530 = vunpack.c.l.b16 %v1422
        %v1531 = vunpack.c.l.b16 %v1423
        %v1532 = vunpack.c.l.b16 %v1424
        %v1533 = vunpack.c.l.b16 %v1425
        %v1534 = vpack.c.b16 %v1494, %v1493
        %v1535 = vpack.c.b16 %v1496, %v1495
        %v1536 = vpack.c.b16 %v1498, %v1497
        %v1537 = vpack.c.b16 %v1500, %v1499
        %v1538 = vpack.c.b16 %v1502, %v1501
        %v1539 = vpack.c.b16 %v1504, %v1503
        %v1540 = vpack.c.b16 %v1506, %v1505
        %v1541 = vpack.c.b16 %v1508, %v1507
        %v1542 = vpack.c.b16 %v1510, %v1509
        %v1543 = vpack.c.b16 %v1512, %v1511
        %v1544 = vpack.c.b16 %v1514, %v1513
        %v1545 = vpack.c.b16 %v1516, %v1515
        %v1546 = vpack.c.b16 %v1518, %v1517
        %v1547 = vpack.c.b16 %v1520, %v1519
        %v1548 = vpack.c.b16 %v1522, %v1521
        %v1549 = vpack.c.b16 %v1524, %v1523
        %v1550 = vpack.c.b16 %v1526, %v1525
        %v1551 = vpack.c.b16 %v1528, %v1527
        %v1552 = vpack.c.b16 %v1530, %v1529
        %v1553 = vpack.c.b16 %v1532, %v1531
        %v1554 = vpack.c.b16 %v1533, %v1533
        %v1576 = vsel %vm1335, %v1448, 0
        %v1579 = vsel %vm1339, %v1554, 0
        %1581 = vmatprep.subr.bf16.mxu0 0
        %1582 = vmatpush1.bf16.msra.mxu0 %v1534
        %1583 = vmatprep.subr.bf16.mxu0 0
        %1584 = vmatpush1.bf16.msra.mxu0 %v1535
        %1585 = vmatprep.subr.bf16.mxu0 0
        %1586 = vmatpush1.bf16.msra.mxu0 %v1536
        %1587 = vmatprep.subr.bf16.mxu0 0
        %1588 = vmatpush1.bf16.msra.mxu0 %v1537
        %1589 = vmatprep.subr.bf16.mxu0 0
        %1590 = vmatpush1.bf16.msra.mxu0 %v1538
        %1591 = vmatprep.subr.bf16.mxu0 0
        %1592 = vmatpush1.bf16.msra.mxu0 %v1539
        %1593 = vmatprep.subr.bf16.mxu0 0
        %1594 = vmatpush1.bf16.msra.mxu0 %v1540
        %1595 = vmatprep.subr.bf16.mxu0 0
        %1596 = vmatpush1.bf16.msra.mxu0 %v1541
        %1597 = vmatprep.subr.bf16.mxu0 0
        %1598 = vmatpush1.bf16.msra.mxu0 %v1542
        %1599 = vmatprep.subr.bf16.mxu0 0
        %1600 = vmatpush1.bf16.msra.mxu0 %v1543
        %1601 = vmatprep.subr.bf16.mxu0 0
        %1602 = vmatpush1.bf16.msra.mxu0 %v1544
        %1603 = vmatprep.subr.bf16.mxu0 0
        %1604 = vmatpush1.bf16.msra.mxu0 %v1545
        %1605 = vmatprep.subr.bf16.mxu0 0
        %1606 = vmatpush1.bf16.msra.mxu0 %v1546
        %1607 = vmatprep.subr.bf16.mxu0 0
        %1608 = vmatpush1.bf16.msra.mxu0 %v1547
        %1609 = vmatprep.subr.bf16.mxu0 0
        %1610 = vmatpush1.bf16.msra.mxu0 %v1548
        %1611 = vmatprep.subr.bf16.mxu0 0
        %1612 = vmatpush1.bf16.msra.mxu0 %v1549
        %1613 = vmatprep.mubr.bf16.mxu0 %v1449
        %1614 = vmatmul.mubr.bf16.gmra.mrb[0].mxu0 %v1441
        %v1615 = vpop.f32.mrb[0].mxu0
        %v1616 = vadd.f32 %v1431, %v1615
        %v1617 = vpop.f32.mrb[0].mxu0
        %v1618 = vpop.f32.mrb[0].mxu0
        %v1619 = vpop.f32.mrb[0].mxu0
        %1620 = vdwg.mxu0
        %1621 = vmatprep.subr.bf16.mxu0 0
        %1622 = vmatpush1.bf16.msra.mxu0 %v1550
        %1623 = vmatprep.subr.bf16.mxu0 0
        %1624 = vmatpush1.bf16.msra.mxu0 %v1551
        %1625 = vmatprep.subr.bf16.mxu0 0
        %1626 = vmatpush1.bf16.msra.mxu0 %v1552
        %1627 = vmatprep.subr.bf16.mxu0 0
        %1628 = vmatpush1.bf16.msra.mxu0 %v1553
        %1629 = vmatprep.subr.bf16.mxu0 0
        %1630 = vmatpush1.bf16.msra.mxu0 %v1579
        %1631 = vmatprep.subr.bf16.mxu0 0
        %1632 = vmatpush1.bf16.msra.mxu0 0
        %1633 = vmatprep.subr.bf16.mxu0 0
        %1634 = vmatpush1.bf16.msra.mxu0 0
        %1635 = vmatprep.subr.bf16.mxu0 0
        %1636 = vmatpush1.bf16.msra.mxu0 0
        %1637 = vmatprep.subr.bf16.mxu0 0
        %1638 = vmatpush1.bf16.msra.mxu0 0
        %1639 = vmatprep.subr.bf16.mxu0 0
        %1640 = vmatpush1.bf16.msra.mxu0 0
        %1641 = vmatprep.subr.bf16.mxu0 0
        %1642 = vmatpush1.bf16.msra.mxu0 0
        %1643 = vmatprep.subr.bf16.mxu0 0
        %1644 = vmatpush1.bf16.msra.mxu0 0
        %1645 = vmatprep.subr.bf16.mxu0 0
        %1646 = vmatpush1.bf16.msra.mxu0 0
        %1647 = vmatprep.subr.bf16.mxu0 0
        %1648 = vmatpush1.bf16.msra.mxu0 0
        %1649 = vmatprep.subr.bf16.mxu0 0
        %1650 = vmatpush1.bf16.msra.mxu0 0
        %1651 = vmatprep.subr.bf16.mxu0 0
        %1652 = vmatpush1.bf16.msra.mxu0 0
        %1653 = vmatprep.mubr.bf16.mxu0 0
        %1654 = vmatmul.mubr.bf16.gmra.mrb[0].mxu0 %v1576
        %v1655 = vpop.f32.mrb[0].mxu0
        %v1656 = vadd.f32 %v1616, %v1655
        %v1657 = vpop.f32.mrb[0].mxu0
        %v1658 = vpop.f32.mrb[0].mxu0
        %v1659 = vpop.f32.mrb[0].mxu0
        %1660 = vdwg.mxu0
        %v1661 = vmax.f32 %v1656, 0.0
        %v1662 = vld [vmem:[%s6] sm:$0xff]
        %v1663 = vld [vmem:[%s1132] sm:$0xf]
        %v1664 = vld [vmem:[%s1132 + $0x4] sm:$0xf]
        %v1665 = vld [vmem:[%s1132 + $0x8] sm:$0xf]
        %v1666 = vld [vmem:[%s1132 + $0xc] sm:$0xf]
        %v1667 = vld [vmem:[%s1132 + $0x10] sm:$0xf]
        %v1668 = vld [vmem:[%s1132 + $0x14] sm:$0xf]
        %v1669 = vld [vmem:[%s1132 + $0x18] sm:$0xf]
        %v1670 = vld [vmem:[%s1132 + $0x1c] sm:$0xf]
        %v1671 = vld [vmem:[%s1132 + $0x20] sm:$0xf]
        %v1672 = vld [vmem:[%s1132 + $0x24] sm:$0xf]
        %v1673 = vld [vmem:[%s1132 + $0x28] sm:$0xf]
        %v1674 = vld [vmem:[%s1132 + $0x2c] sm:$0xf]
        %v1675 = vld [vmem:[%s1132 + $0x30] sm:$0xf]
        %v1676 = vld [vmem:[%s1132 + $0x34] sm:$0xf]
        %v1677 = vld [vmem:[%s1132 + $0x38] sm:$0xf]
        %v1678 = vld [vmem:[%s1132 + $0x3c] sm:$0xf]
        %v1679 = vld [vmem:[%s1132 + $0x40] sm:$0xf]
        %v1680 = vld [vmem:[%s1132 + $0x44] sm:$0xf]
        %v1681 = vld [vmem:[%s1132 + $0x48] sm:$0xf]
        %v1682 = vld [vmem:[%s1132 + $0x4c] sm:$0xf]
        %v1683 = vld [vmem:[%s1132 + $0x50] sm:$0xf]
        %v1684 = vld [vmem:[%s1132 + $0x54] sm:$0xf]
        %v1685 = vld [vmem:[%s1132 + $0x58] sm:$0xf]
        %v1686 = vld [vmem:[%s1132 + $0x5c] sm:$0xf]
        %v1687 = vld [vmem:[%s1132 + $0x60] sm:$0xf]
        %v1688 = vld [vmem:[%s1132 + $0x64] sm:$0xf]
        %v1689 = vld [vmem:[%s1132 + $0x68] sm:$0xf]
        %v1690 = vld [vmem:[%s1132 + $0x6c] sm:$0xf]
        %v1691 = vld [vmem:[%s1132 + $0x70] sm:$0xf]
        %v1692 = vld [vmem:[%s1132 + $0x74] sm:$0xf]
        %v1693 = vld [vmem:[%s1132 + $0x78] sm:$0xf]
        %v1694 = vld [vmem:[%s1132 + $0x7c] sm:$0xf]
        %v1695 = vld [vmem:[%s1132 + $0x80] sm:$0xf]
        %v1696 = vld [vmem:[%s1132 + $0x84] sm:$0xf]
        %v1697 = vld [vmem:[%s1132 + $0x88] sm:$0xf]
        %v1698 = vld [vmem:[%s1132 + $0x8c] sm:$0xf]
        %v1699 = vld [vmem:[%s1132 + $0x90] sm:$0xf]
        %v1700 = vld [vmem:[%s1132 + $0x94] sm:$0xf]
        %v1701 = vld [vmem:[%s1132 + $0x98] sm:$0xf]
        %v1702 = vld [vmem:[%s1132 + $0x9c] sm:$0xf]
        %v1703 = vld [vmem:[%s1132 + $0xa0] sm:$0xf]
        %v1704 = vld [vmem:[%s1132 + $0xa4] sm:$0xf]
        %v1705 = vld [vmem:[%s1132 + $0xa8] sm:$0xf]
        %v1706 = vld [vmem:[%s1132 + $0xac] sm:$0xf]
        %v1707 = vld [vmem:[%s1132 + $0xb0] sm:$0xf]
        %v1708 = vld [vmem:[%s1132 + $0xb4] sm:$0xf]
        %v1709 = vld [vmem:[%s1132 + $0xb8] sm:$0xf]
        %v1710 = vld [vmem:[%s1132 + $0xbc] sm:$0xf]
        %v1711 = vld [vmem:[%s1132 + $0xc0] sm:$0xf]
        %v1712 = vld [vmem:[%s1132 + $0xc4] sm:$0xf]
        %v1713 = vld [vmem:[%s1132 + $0xc8] sm:$0xf]
        %v1714 = vld [vmem:[%s1132 + $0xcc] sm:$0xf]
        %v1715 = vld [vmem:[%s1132 + $0xd0] sm:$0xf]
        %v1716 = vld [vmem:[%s1132 + $0xd4] sm:$0xf]
        %v1717 = vld [vmem:[%s1132 + $0xd8] sm:$0xf]
        %v1718 = vld [vmem:[%s1132 + $0xdc] sm:$0xf]
        %v1719 = vld [vmem:[%s1132 + $0xe0] sm:$0xf]
        %v1720 = vld [vmem:[%s1132 + $0xe4] sm:$0xf]
        %v1721 = vld [vmem:[%s1132 + $0xe8] sm:$0xf]
        %v1722 = vld [vmem:[%s1132 + $0xec] sm:$0xf]
        %v1723 = vld [vmem:[%s1132 + $0xf0] sm:$0x3]
        %s1724 = scalar_lea.vmem %s8, 8
        %v1725 = vld [vmem:[%s1724] sm:$0xf]
        %1727 = vset.pattern.permute.xlu0 0
        %1728 = vperm.xlu0 %1727, %v1725
        %v1729 = vpop.permute.xlu0 %1728
        %v1732 = vcombine.high %v1662, %v1662
        %v1734 = vunpack.c.l.s4 1983009808
        %v1735 = vunpack.c.0.s8 %v1734
        %v1736 = vlaneseq
        %v1737 = vshrl.u32 %v1736, 7
        %v1738 = vsub.s32 %v1735, %v1737
        %v1739 = vrot.slane %v1662, %v1738
        %v1741 = vunpack.c.l.s4 1983009808
        %v1742 = vunpack.c.0.s8 %v1741
        %v1743 = vlaneseq
        %v1744 = vshrl.u32 %v1743, 7
        %v1745 = vsub.s32 %v1742, %v1744
        %v1746 = vrot.slane %v1732, %v1745
        %v1747 = vcombine.high %v1739, %v1739
        %v1748 = vcombine.high %v1746, %v1746
        %v1813 = vunpack.c.l.b16 %v1663
        %v1814 = vunpack.c.l.b16 %v1664
        %v1815 = vunpack.c.l.b16 %v1665
        %v1816 = vunpack.c.l.b16 %v1666
        %v1817 = vunpack.c.l.b16 %v1667
        %v1818 = vunpack.c.l.b16 %v1668
        %v1819 = vunpack.c.l.b16 %v1669
        %v1820 = vunpack.c.l.b16 %v1670
        %v1821 = vunpack.c.l.b16 %v1671
        %v1822 = vunpack.c.l.b16 %v1672
        %v1823 = vunpack.c.l.b16 %v1673
        %v1824 = vunpack.c.l.b16 %v1674
        %v1825 = vunpack.c.l.b16 %v1675
        %v1826 = vunpack.c.l.b16 %v1676
        %v1827 = vunpack.c.l.b16 %v1677
        %v1828 = vunpack.c.l.b16 %v1678
        %v1829 = vunpack.c.l.b16 %v1679
        %v1830 = vunpack.c.l.b16 %v1680
        %v1831 = vunpack.c.l.b16 %v1681
        %v1832 = vunpack.c.l.b16 %v1682
        %v1833 = vunpack.c.l.b16 %v1683
        %v1834 = vunpack.c.l.b16 %v1684
        %v1835 = vunpack.c.l.b16 %v1685
        %v1836 = vunpack.c.l.b16 %v1686
        %v1837 = vunpack.c.l.b16 %v1687
        %v1838 = vunpack.c.l.b16 %v1688
        %v1839 = vunpack.c.l.b16 %v1689
        %v1840 = vunpack.c.l.b16 %v1690
        %v1841 = vunpack.c.l.b16 %v1691
        %v1842 = vunpack.c.l.b16 %v1692
        %v1843 = vunpack.c.l.b16 %v1693
        %v1844 = vunpack.c.l.b16 %v1694
        %v1845 = vunpack.c.l.b16 %v1695
        %v1846 = vunpack.c.l.b16 %v1696
        %v1847 = vunpack.c.l.b16 %v1697
        %v1848 = vunpack.c.l.b16 %v1698
        %v1849 = vunpack.c.l.b16 %v1699
        %v1850 = vunpack.c.l.b16 %v1700
        %v1851 = vunpack.c.l.b16 %v1701
        %v1852 = vunpack.c.l.b16 %v1702
        %v1853 = vunpack.c.l.b16 %v1703
        %v1854 = vunpack.c.l.b16 %v1704
        %v1855 = vunpack.c.l.b16 %v1705
        %v1856 = vunpack.c.l.b16 %v1706
        %v1857 = vunpack.c.l.b16 %v1707
        %v1858 = vunpack.c.l.b16 %v1708
        %v1859 = vunpack.c.l.b16 %v1709
        %v1860 = vunpack.c.l.b16 %v1710
        %v1861 = vunpack.c.l.b16 %v1711
        %v1862 = vunpack.c.l.b16 %v1712
        %v1863 = vunpack.c.l.b16 %v1713
        %v1864 = vunpack.c.l.b16 %v1714
        %v1865 = vunpack.c.l.b16 %v1715
        %v1866 = vunpack.c.l.b16 %v1716
        %v1867 = vunpack.c.l.b16 %v1717
        %v1868 = vunpack.c.l.b16 %v1718
        %v1869 = vunpack.c.l.b16 %v1719
        %v1870 = vunpack.c.l.b16 %v1720
        %v1871 = vunpack.c.l.b16 %v1721
        %v1872 = vunpack.c.l.b16 %v1722
        %v1873 = vunpack.c.l.b16 %v1723
        %v1874 = vpack.c.b16 %v1814, %v1813
        %v1875 = vpack.c.b16 %v1816, %v1815
        %v1876 = vpack.c.b16 %v1818, %v1817
        %v1877 = vpack.c.b16 %v1820, %v1819
        %v1878 = vpack.c.b16 %v1822, %v1821
        %v1879 = vpack.c.b16 %v1824, %v1823
        %v1880 = vpack.c.b16 %v1826, %v1825
        %v1881 = vpack.c.b16 %v1828, %v1827
        %v1882 = vpack.c.b16 %v1830, %v1829
        %v1883 = vpack.c.b16 %v1832, %v1831
        %v1884 = vpack.c.b16 %v1834, %v1833
        %v1885 = vpack.c.b16 %v1836, %v1835
        %v1886 = vpack.c.b16 %v1838, %v1837
        %v1887 = vpack.c.b16 %v1840, %v1839
        %v1888 = vpack.c.b16 %v1842, %v1841
        %v1889 = vpack.c.b16 %v1844, %v1843
        %v1890 = vpack.c.b16 %v1846, %v1845
        %v1891 = vpack.c.b16 %v1848, %v1847
        %v1892 = vpack.c.b16 %v1850, %v1849
        %v1893 = vpack.c.b16 %v1852, %v1851
        %v1894 = vpack.c.b16 %v1854, %v1853
        %v1895 = vpack.c.b16 %v1856, %v1855
        %v1896 = vpack.c.b16 %v1858, %v1857
        %v1897 = vpack.c.b16 %v1860, %v1859
        %v1898 = vpack.c.b16 %v1862, %v1861
        %v1899 = vpack.c.b16 %v1864, %v1863
        %v1900 = vpack.c.b16 %v1866, %v1865
        %v1901 = vpack.c.b16 %v1868, %v1867
        %v1902 = vpack.c.b16 %v1870, %v1869
        %v1903 = vpack.c.b16 %v1872, %v1871
        %v1904 = vpack.c.b16 %v1873, %v1873
        %vm1935 = vcmask 818176
        %v1937 = vsel %vm1935, %v1748, 0
        %v1940 = vsel %vm1339, %v1904, 0
        %1942 = vmatprep.subr.bf16.mxu0 0
        %1943 = vmatpush1.bf16.msra.mxu0 %v1874
        %1944 = vmatprep.subr.bf16.mxu0 0
        %1945 = vmatpush1.bf16.msra.mxu0 %v1875
        %1946 = vmatprep.subr.bf16.mxu0 0
        %1947 = vmatpush1.bf16.msra.mxu0 %v1876
        %1948 = vmatprep.subr.bf16.mxu0 0
        %1949 = vmatpush1.bf16.msra.mxu0 %v1877
        %1950 = vmatprep.subr.bf16.mxu0 0
        %1951 = vmatpush1.bf16.msra.mxu0 %v1878
        %1952 = vmatprep.subr.bf16.mxu0 0
        %1953 = vmatpush1.bf16.msra.mxu0 %v1879
        %1954 = vmatprep.subr.bf16.mxu0 0
        %1955 = vmatpush1.bf16.msra.mxu0 %v1880
        %1956 = vmatprep.subr.bf16.mxu0 0
        %1957 = vmatpush1.bf16.msra.mxu0 %v1881
        %1958 = vmatprep.subr.bf16.mxu0 0
        %1959 = vmatpush1.bf16.msra.mxu0 %v1882
        %1960 = vmatprep.subr.bf16.mxu0 0
        %1961 = vmatpush1.bf16.msra.mxu0 %v1883
        %1962 = vmatprep.subr.bf16.mxu0 0
        %1963 = vmatpush1.bf16.msra.mxu0 %v1884
        %1964 = vmatprep.subr.bf16.mxu0 0
        %1965 = vmatpush1.bf16.msra.mxu0 %v1885
        %1966 = vmatprep.subr.bf16.mxu0 0
        %1967 = vmatpush1.bf16.msra.mxu0 %v1886
        %1968 = vmatprep.subr.bf16.mxu0 0
        %1969 = vmatpush1.bf16.msra.mxu0 %v1887
        %1970 = vmatprep.subr.bf16.mxu0 0
        %1971 = vmatpush1.bf16.msra.mxu0 %v1888
        %1972 = vmatprep.subr.bf16.mxu0 0
        %1973 = vmatpush1.bf16.msra.mxu0 %v1889
        %1974 = vmatprep.mubr.bf16.mxu0 %v1747
        %1975 = vmatmul.mubr.bf16.gmra.mrb[0].mxu0 %v1739
        %v1976 = vpop.f32.mrb[0].mxu0
        %v1977 = vadd.f32 %v1729, %v1976
        %v1978 = vpop.f32.mrb[0].mxu0
        %v1979 = vpop.f32.mrb[0].mxu0
        %v1980 = vpop.f32.mrb[0].mxu0
        %1981 = vdwg.mxu0
        %1982 = vmatprep.subr.bf16.mxu0 0
        %1983 = vmatpush1.bf16.msra.mxu0 %v1890
        %1984 = vmatprep.subr.bf16.mxu0 0
        %1985 = vmatpush1.bf16.msra.mxu0 %v1891
        %1986 = vmatprep.subr.bf16.mxu0 0
        %1987 = vmatpush1.bf16.msra.mxu0 %v1892
        %1988 = vmatprep.subr.bf16.mxu0 0
        %1989 = vmatpush1.bf16.msra.mxu0 %v1893
        %1990 = vmatprep.subr.bf16.mxu0 0
        %1991 = vmatpush1.bf16.msra.mxu0 %v1894
        %1992 = vmatprep.subr.bf16.mxu0 0
        %1993 = vmatpush1.bf16.msra.mxu0 %v1895
        %1994 = vmatprep.subr.bf16.mxu0 0
        %1995 = vmatpush1.bf16.msra.mxu0 %v1896
        %1996 = vmatprep.subr.bf16.mxu0 0
        %1997 = vmatpush1.bf16.msra.mxu0 %v1897
        %1998 = vmatprep.subr.bf16.mxu0 0
        %1999 = vmatpush1.bf16.msra.mxu0 %v1898
        %2000 = vmatprep.subr.bf16.mxu0 0
        %2001 = vmatpush1.bf16.msra.mxu0 %v1899
        %2002 = vmatprep.subr.bf16.mxu0 0
        %2003 = vmatpush1.bf16.msra.mxu0 %v1900
        %2004 = vmatprep.subr.bf16.mxu0 0
        %2005 = vmatpush1.bf16.msra.mxu0 %v1901
        %2006 = vmatprep.subr.bf16.mxu0 0
        %2007 = vmatpush1.bf16.msra.mxu0 %v1902
        %2008 = vmatprep.subr.bf16.mxu0 0
        %2009 = vmatpush1.bf16.msra.mxu0 %v1903
        %2010 = vmatprep.subr.bf16.mxu0 0
        %2011 = vmatpush1.bf16.msra.mxu0 %v1940
        %2012 = vmatprep.subr.bf16.mxu0 0
        %2013 = vmatpush1.bf16.msra.mxu0 0
        %2014 = vmatprep.mubr.bf16.mxu0 %v1937
        %2015 = vmatmul.mubr.bf16.gmra.mrb[0].mxu0 %v1746
        %v2016 = vpop.f32.mrb[0].mxu0
        %v2017 = vadd.f32 %v1977, %v2016
        %v2018 = vpop.f32.mrb[0].mxu0
        %v2019 = vpop.f32.mrb[0].mxu0
        %v2020 = vpop.f32.mrb[0].mxu0
        %2021 = vdwg.mxu0
        %v2022 = vmax.f32 %v2017, 0.0
        %v2023 = vld [vmem:[%s7] sm:$0x3]
        %v2024 = vld [vmem:[%s1139] sm:$0xf]
        %v2025 = vld [vmem:[%s1139 + $0x4] sm:$0xf]
        %v2026 = vld [vmem:[%s1139 + $0x8] sm:$0xf]
        %v2027 = vld [vmem:[%s1139 + $0xc] sm:$0xf]
        %v2028 = vld [vmem:[%s1139 + $0x10] sm:$0x3]
        %s2029 = scalar_lea.vmem %s8, 12
        %v2030 = vld [vmem:[%s2029] sm:$0xf]
        %2032 = vset.pattern.permute.xlu0 0
        %2033 = vperm.xlu0 %2032, %v2030
        %v2034 = vpop.permute.xlu0 %2033
        %v2041 = vunpack.c.l.b16 %v2024
        %v2042 = vunpack.c.l.b16 %v2025
        %v2043 = vunpack.c.l.b16 %v2026
        %v2044 = vunpack.c.l.b16 %v2027
        %v2045 = vunpack.c.l.b16 %v2028
        %v2046 = vpack.c.b16 %v2042, %v2041
        %v2047 = vpack.c.b16 %v2044, %v2043
        %v2048 = vpack.c.b16 %v2045, %v2045
        %vm2051 = vcmask 293888
        %v2053 = vsel %vm2051, %v2023, 0
        %v2056 = vsel %vm1339, %v2048, 0
        %2058 = vmatprep.subr.bf16.mxu0 0
        %2059 = vmatpush1.bf16.msra.mxu0 %v2046
        %2060 = vmatprep.subr.bf16.mxu0 0
        %2061 = vmatpush1.bf16.msra.mxu0 %v2047
        %2062 = vmatprep.subr.bf16.mxu0 0
        %2063 = vmatpush1.bf16.msra.mxu0 %v2056
        %2064 = vmatprep.subr.bf16.mxu0 0
        %2065 = vmatpush1.bf16.msra.mxu0 0
        %2066 = vmatprep.subr.bf16.mxu0 0
        %2067 = vmatpush1.bf16.msra.mxu0 0
        %2068 = vmatprep.subr.bf16.mxu0 0
        %2069 = vmatpush1.bf16.msra.mxu0 0
        %2070 = vmatprep.subr.bf16.mxu0 0
        %2071 = vmatpush1.bf16.msra.mxu0 0
        %2072 = vmatprep.subr.bf16.mxu0 0
        %2073 = vmatpush1.bf16.msra.mxu0 0
        %2074 = vmatprep.subr.bf16.mxu0 0
        %2075 = vmatpush1.bf16.msra.mxu0 0
        %2076 = vmatprep.subr.bf16.mxu0 0
        %2077 = vmatpush1.bf16.msra.mxu0 0
        %2078 = vmatprep.subr.bf16.mxu0 0
        %2079 = vmatpush1.bf16.msra.mxu0 0
        %2080 = vmatprep.subr.bf16.mxu0 0
        %2081 = vmatpush1.bf16.msra.mxu0 0
        %2082 = vmatprep.subr.bf16.mxu0 0
        %2083 = vmatpush1.bf16.msra.mxu0 0
        %2084 = vmatprep.subr.bf16.mxu0 0
        %2085 = vmatpush1.bf16.msra.mxu0 0
        %2086 = vmatprep.subr.bf16.mxu0 0
        %2087 = vmatpush1.bf16.msra.mxu0 0
        %2088 = vmatprep.subr.bf16.mxu0 0
        %2089 = vmatpush1.bf16.msra.mxu0 0
        %2090 = vmatprep.mubr.bf16.mxu0 0
        %2091 = vmatmul.mubr.bf16.gmra.mrb[0].mxu0 %v2053
        %v2092 = vpop.f32.mrb[0].mxu0
        %v2093 = vadd.f32 %v2034, %v2092
        %v2094 = vpop.f32.mrb[0].mxu0
        %v2095 = vpop.f32.mrb[0].mxu0
        %v2096 = vpop.f32.mrb[0].mxu0
        %2097 = vdwg.mxu0
        %v2098 = vmax.f32 %v2093, 0.0
        %s2099 = scalar_lea.vmem %s9, 12
        %v2100 = vld [vmem:[%s2099] sm:$0xf]
        %v2101 = vpack.c.bf16 %v2098, %v2098
        %s2102 = scalar_lea.vmem %s10, 24
        %v2103 = vld [vmem:[%s2102] sm:$0xff]
        %2105 = vset.pattern.permute.xlu0 0
        %2106 = vperm.xlu0 %2105, %v2103
        %v2107 = vpop.permute.xlu0 %2106
        %vm2109 = vcmask 31744
        %v2111 = vsel %vm2109, %v2100, 0
        %v2114 = vsel %vm1339, %v2101, 0
        %2116 = vmatprep.subr.bf16.mxu0 0
        %2117 = vmatpush1.bf16.msra.mxu0 %v2114
        %2118 = vmatprep.subr.bf16.mxu0 0
        %2119 = vmatpush1.bf16.msra.mxu0 0
        %2120 = vmatprep.subr.bf16.mxu0 0
        %2121 = vmatpush1.bf16.msra.mxu0 0
        %2122 = vmatprep.subr.bf16.mxu0 0
        %2123 = vmatpush1.bf16.msra.mxu0 0
        %2124 = vmatprep.subr.bf16.mxu0 0
        %2125 = vmatpush1.bf16.msra.mxu0 0
        %2126 = vmatprep.subr.bf16.mxu0 0
        %2127 = vmatpush1.bf16.msra.mxu0 0
        %2128 = vmatprep.subr.bf16.mxu0 0
        %2129 = vmatpush1.bf16.msra.mxu0 0
        %2130 = vmatprep.subr.bf16.mxu0 0
        %2131 = vmatpush1.bf16.msra.mxu0 0
        %2132 = vmatprep.subr.bf16.mxu0 0
        %2133 = vmatpush1.bf16.msra.mxu0 0
        %2134 = vmatprep.subr.bf16.mxu0 0
        %2135 = vmatpush1.bf16.msra.mxu0 0
        %2136 = vmatprep.subr.bf16.mxu0 0
        %2137 = vmatpush1.bf16.msra.mxu0 0
        %2138 = vmatprep.subr.bf16.mxu0 0
        %2139 = vmatpush1.bf16.msra.mxu0 0
        %2140 = vmatprep.subr.bf16.mxu0 0
        %2141 = vmatpush1.bf16.msra.mxu0 0
        %2142 = vmatprep.subr.bf16.mxu0 0
        %2143 = vmatpush1.bf16.msra.mxu0 0
        %2144 = vmatprep.subr.bf16.mxu0 0
        %2145 = vmatpush1.bf16.msra.mxu0 0
        %2146 = vmatprep.subr.bf16.mxu0 0
        %2147 = vmatpush1.bf16.msra.mxu0 0
        %2148 = vmatprep.mubr.bf16.mxu0 0
        %2149 = vmatmul.mubr.bf16.gmra.mrb[0].mxu0 %v2111
        %v2150 = vpop.f32.mrb[0].mxu0
        %v2151 = vadd.f32 %v2107, %v2150
        %v2152 = vpop.f32.mrb[0].mxu0
        %v2153 = vpop.f32.mrb[0].mxu0
        %v2154 = vpop.f32.mrb[0].mxu0
        %2155 = vdwg.mxu0
        %v2156 = vld [vmem:[%s9] sm:$0xf]
        %v2157 = vpack.c.bf16 %v1383, %v1383
        %v2158 = vld [vmem:[%s10] sm:$0xff]
        %2160 = vset.pattern.permute.xlu0 0
        %2161 = vperm.xlu0 %2160, %v2158
        %v2162 = vpop.permute.xlu0 %2161
        %v2165 = vsel %vm2109, %v2156, 0
        %v2168 = vsel %vm1339, %v2157, 0
        %2170 = vmatprep.subr.bf16.mxu0 0
        %2171 = vmatpush1.bf16.msra.mxu0 %v2168
        %2172 = vmatprep.subr.bf16.mxu0 0
        %2173 = vmatpush1.bf16.msra.mxu0 0
        %2174 = vmatprep.subr.bf16.mxu0 0
        %2175 = vmatpush1.bf16.msra.mxu0 0
        %2176 = vmatprep.subr.bf16.mxu0 0
        %2177 = vmatpush1.bf16.msra.mxu0 0
        %2178 = vmatprep.subr.bf16.mxu0 0
        %2179 = vmatpush1.bf16.msra.mxu0 0
        %2180 = vmatprep.subr.bf16.mxu0 0
        %2181 = vmatpush1.bf16.msra.mxu0 0
        %2182 = vmatprep.subr.bf16.mxu0 0
        %2183 = vmatpush1.bf16.msra.mxu0 0
        %2184 = vmatprep.subr.bf16.mxu0 0
        %2185 = vmatpush1.bf16.msra.mxu0 0
        %2186 = vmatprep.subr.bf16.mxu0 0
        %2187 = vmatpush1.bf16.msra.mxu0 0
        %2188 = vmatprep.subr.bf16.mxu0 0
        %2189 = vmatpush1.bf16.msra.mxu0 0
        %2190 = vmatprep.subr.bf16.mxu0 0
        %2191 = vmatpush1.bf16.msra.mxu0 0
        %2192 = vmatprep.subr.bf16.mxu0 0
        %2193 = vmatpush1.bf16.msra.mxu0 0
        %2194 = vmatprep.subr.bf16.mxu0 0
        %2195 = vmatpush1.bf16.msra.mxu0 0
        %2196 = vmatprep.subr.bf16.mxu0 0
        %2197 = vmatpush1.bf16.msra.mxu0 0
        %2198 = vmatprep.subr.bf16.mxu0 0
        %2199 = vmatpush1.bf16.msra.mxu0 0
        %2200 = vmatprep.subr.bf16.mxu0 0
        %2201 = vmatpush1.bf16.msra.mxu0 0
        %2202 = vmatprep.mubr.bf16.mxu0 0
        %2203 = vmatmul.mubr.bf16.gmra.mrb[0].mxu0 %v2165
        %v2204 = vpop.f32.mrb[0].mxu0
        %v2205 = vadd.f32 %v2162, %v2204
        %v2206 = vpop.f32.mrb[0].mxu0
        %v2207 = vpop.f32.mrb[0].mxu0
        %v2208 = vpop.f32.mrb[0].mxu0
        %2209 = vdwg.mxu0
        %v2210 = vadd.f32 %v2205, %v2151
        %v2211 = vmax.f32 %v2210, 0.0
        %s2212 = scalar_lea.vmem %s9, 4
        %v2213 = vld [vmem:[%s2212] sm:$0xf]
        %v2214 = vpack.c.bf16 %v1661, %v1661
        %s2215 = scalar_lea.vmem %s10, 8
        %v2216 = vld [vmem:[%s2215] sm:$0xff]
        %2218 = vset.pattern.permute.xlu0 0
        %2219 = vperm.xlu0 %2218, %v2216
        %v2220 = vpop.permute.xlu0 %2219
        %v2223 = vsel %vm2109, %v2213, 0
        %v2226 = vsel %vm1339, %v2214, 0
        %2228 = vmatprep.subr.bf16.mxu0 0
        %2229 = vmatpush1.bf16.msra.mxu0 %v2226
        %2230 = vmatprep.subr.bf16.mxu0 0
        %2231 = vmatpush1.bf16.msra.mxu0 0
        %2232 = vmatprep.subr.bf16.mxu0 0
        %2233 = vmatpush1.bf16.msra.mxu0 0
        %2234 = vmatprep.subr.bf16.mxu0 0
        %2235 = vmatpush1.bf16.msra.mxu0 0
        %2236 = vmatprep.subr.bf16.mxu0 0
        %2237 = vmatpush1.bf16.msra.mxu0 0
        %2238 = vmatprep.subr.bf16.mxu0 0
        %2239 = vmatpush1.bf16.msra.mxu0 0
        %2240 = vmatprep.subr.bf16.mxu0 0
        %2241 = vmatpush1.bf16.msra.mxu0 0
        %2242 = vmatprep.subr.bf16.mxu0 0
        %2243 = vmatpush1.bf16.msra.mxu0 0
        %2244 = vmatprep.subr.bf16.mxu0 0
        %2245 = vmatpush1.bf16.msra.mxu0 0
        %2246 = vmatprep.subr.bf16.mxu0 0
        %2247 = vmatpush1.bf16.msra.mxu0 0
        %2248 = vmatprep.subr.bf16.mxu0 0
        %2249 = vmatpush1.bf16.msra.mxu0 0
        %2250 = vmatprep.subr.bf16.mxu0 0
        %2251 = vmatpush1.bf16.msra.mxu0 0
        %2252 = vmatprep.subr.bf16.mxu0 0
        %2253 = vmatpush1.bf16.msra.mxu0 0
        %2254 = vmatprep.subr.bf16.mxu0 0
        %2255 = vmatpush1.bf16.msra.mxu0 0
        %2256 = vmatprep.subr.bf16.mxu0 0
        %2257 = vmatpush1.bf16.msra.mxu0 0
        %2258 = vmatprep.subr.bf16.mxu0 0
        %2259 = vmatpush1.bf16.msra.mxu0 0
        %2260 = vmatprep.mubr.bf16.mxu0 0
        %2261 = vmatmul.mubr.bf16.gmra.mrb[0].mxu0 %v2223
        %v2262 = vpop.f32.mrb[0].mxu0
        %v2263 = vadd.f32 %v2220, %v2262
        %v2264 = vpop.f32.mrb[0].mxu0
        %v2265 = vpop.f32.mrb[0].mxu0
        %v2266 = vpop.f32.mrb[0].mxu0
        %2267 = vdwg.mxu0
        %v2268 = vadd.f32 %v2263, %v2151
        %v2269 = vmax.f32 %v2268, 0.0
        %v2270 = vadd.f32 %v2211, %v2269
        %s2271 = scalar_lea.vmem %s9, 8
        %v2272 = vld [vmem:[%s2271] sm:$0xf]
        %v2273 = vpack.c.bf16 %v2022, %v2022
        %s2274 = scalar_lea.vmem %s10, 16
        %v2275 = vld [vmem:[%s2274] sm:$0xff]
        %2277 = vset.pattern.permute.xlu0 0
        %2278 = vperm.xlu0 %2277, %v2275
        %v2279 = vpop.permute.xlu0 %2278
        %v2282 = vsel %vm2109, %v2272, 0
        %v2285 = vsel %vm1339, %v2273, 0
        %2287 = vmatprep.subr.bf16.mxu0 0
        %2288 = vmatpush1.bf16.msra.mxu0 %v2285
        %2289 = vmatprep.subr.bf16.mxu0 0
        %2290 = vmatpush1.bf16.msra.mxu0 0
        %2291 = vmatprep.subr.bf16.mxu0 0
        %2292 = vmatpush1.bf16.msra.mxu0 0
        %2293 = vmatprep.subr.bf16.mxu0 0
        %2294 = vmatpush1.bf16.msra.mxu0 0
        %2295 = vmatprep.subr.bf16.mxu0 0
        %2296 = vmatpush1.bf16.msra.mxu0 0
        %2297 = vmatprep.subr.bf16.mxu0 0
        %2298 = vmatpush1.bf16.msra.mxu0 0
        %2299 = vmatprep.subr.bf16.mxu0 0
        %2300 = vmatpush1.bf16.msra.mxu0 0
        %2301 = vmatprep.subr.bf16.mxu0 0
        %2302 = vmatpush1.bf16.msra.mxu0 0
        %2303 = vmatprep.subr.bf16.mxu0 0
        %2304 = vmatpush1.bf16.msra.mxu0 0
        %2305 = vmatprep.subr.bf16.mxu0 0
        %2306 = vmatpush1.bf16.msra.mxu0 0
        %2307 = vmatprep.subr.bf16.mxu0 0
        %2308 = vmatpush1.bf16.msra.mxu0 0
        %2309 = vmatprep.subr.bf16.mxu0 0
        %2310 = vmatpush1.bf16.msra.mxu0 0
        %2311 = vmatprep.subr.bf16.mxu0 0
        %2312 = vmatpush1.bf16.msra.mxu0 0
        %2313 = vmatprep.subr.bf16.mxu0 0
        %2314 = vmatpush1.bf16.msra.mxu0 0
        %2315 = vmatprep.subr.bf16.mxu0 0
        %2316 = vmatpush1.bf16.msra.mxu0 0
        %2317 = vmatprep.subr.bf16.mxu0 0
        %2318 = vmatpush1.bf16.msra.mxu0 0
        %2319 = vmatprep.mubr.bf16.mxu0 0
        %2320 = vmatmul.mubr.bf16.gmra.mrb[0].mxu0 %v2282
        %v2321 = vpop.f32.mrb[0].mxu0
        %v2322 = vadd.f32 %v2279, %v2321
        %v2323 = vpop.f32.mrb[0].mxu0
        %v2324 = vpop.f32.mrb[0].mxu0
        %v2325 = vpop.f32.mrb[0].mxu0
        %2326 = vdwg.mxu0
        %v2327 = vadd.f32 %v2322, %v2151
        %v2328 = vmax.f32 %v2327, 0.0
        %v2329 = vadd.f32 %v2270, %v2328
        %v2330 = vmax.f32 %v2151, 0.0
        %v2331 = vadd.f32 %v2329, %v2330
        %v2332 = vld [vmem:[%s1208] sm:$0xff]
        %v2333 = vadd.f32 %v2331, %v2332
        %2334 = vst [vmem:[%s1216] sm:$0xff] %v2333
        %p2335 = scmp.lt.s32.totalorder %s27, 1
        %s2336 = scalar_select %p2335, %s27, 1
        %p2337 = scmp.lt.s32.totalorder %s28, 1
        %s2338 = scalar_select %p2337, %s28, 1
        %s2339 = smul.addr %s2336, 2
        %s2340 = sadd.s32 %s2338, %s2339
        %s2341 = smul.addr %s2340, 8
        %s2342 = scalar_lea.vmem %s12, %s2341
        // Predicated region
        $region233: #{unet_up2_forward.3} parent=215 // pred_check
          %p2343 = pneg %p342
        $region234: #{unet_up2_forward.3} parent=215 // pred_check_branch
          %2345 = sbr.rel (%p2343) target = $region236
        $region235: #{unet_up2_forward.3} parent=215 // pred_region
          _
        $region236: #{unet_up2_forward.3} parent=215 // pred_fallthru
          _
      $region216: #{unet_up2_forward.3} parent=5 // pred_fallthru
        _
      %p2346 = scmp.le.s32.totalorder 2, %s18
      // Predicated region
      $region237: #{unet_up2_forward.3} parent=5 // pred_check
        %p2347 = pneg %p2346
      $region238: #{unet_up2_forward.3} parent=5 // pred_check_branch
        %2349 = sbr.rel (%p2347) target = $region240
      $region239: #{unet_up2_forward.3} parent=5 // pred_region
        %s2350 = ssub.s32 %s18, 2
        // Predicated region
        $region241: #{unet_up2_forward.3} parent=239 // pred_check
          %p2351 = pneg %p348
        $region242: #{unet_up2_forward.3} parent=239 // pred_check_branch
          %2353 = sbr.rel (%p2351) target = $region244
        $region243: #{unet_up2_forward.3} parent=239 // pred_region
          %p2354 = scmp.lt.s32.totalorder %s29, 1
          %s2355 = scalar_select %p2354, %s29, 1
          %p2356 = scmp.lt.s32.totalorder %s30, 1
          %s2357 = scalar_select %p2356, %s30, 1
          %s2358 = smul.addr %s2355, 2
          %s2359 = sadd.s32 %s2357, %s2358
          %s2360 = smul.addr %s2359, 8
          %s2361 = scalar_lea.vmem %s12, %s2360
        $region244: #{unet_up2_forward.3} parent=239 // pred_fallthru
          _
      $region240: #{unet_up2_forward.3} parent=5 // pred_fallthru
        _
    $region6: #{unet_up2_forward.3} parent=1 // loop_footer
      %s22 = sadd.s32 1, %s18
    $region7: #{unet_up2_forward.3} parent=1 // loop_footer_branch
      %17 = sbr.rel target = $region3
    $region8: #{unet_up2_forward.3} parent=1 // loop_exit
      _

</llo_original>
